<compile_context>
chip_gen: v7x
topology: tpu7x:2x2x1
jax: 0.10.0
libtpu: 0.0.40
codegen_flags: <defaults>
</compile_context>

<pallas_src>
import functools

import jax
import jax.numpy as jnp
from jax.experimental import pallas as pl
from jax.experimental.pallas import tpu as pltpu


_UNROLL_T_MAX = 16  # fully unroll the wavefront for short sequences


# ----------------------- fused LSTM (wavefront) + MLP kernel -----------------------
def _lstm_mlp_kernel(x2d_ref, *refs, num_layers, T, B, B_pad, H):
    """All LSTM layers (wavefront over layers) + MLP head in one invocation.

    x2d_ref : (T*B_pad, D_in) bf16, time-major, batch padded to a sublane tile.
    refs    : [wih_t(bf16), whh_t(bf16), b(f32)] * L,
              w1,b1,w2,b2,w3,b3,w4,b4  (w* bf16, b* f32; w4/b4 lane-padded),
              out_ref (B_pad, C_pad) f32,
              xg_sc (T*B_pad, 4H) f32, hnf_sc (B_pad, L*H) f32.
    """
    L = num_layers
    lstm_refs = refs[:3 * L]
    w1, b1, w2, b2, w3, b3, w4, b4 = refs[3 * L:3 * L + 8]
    out_ref = refs[3 * L + 8]
    xg_sc, hnf_sc = refs[3 * L + 9:]

    f32, bf16 = jnp.float32, jnp.bfloat16

    # Hoist the (small) recurrent weights into vregs once.
    wih = [lstm_refs[3 * l][...] for l in range(L)]        # (D_in | H, 4H) bf16
    whh = [lstm_refs[3 * l + 1][...] for l in range(L)]    # (H, 4H) bf16
    bias = [lstm_refs[3 * l + 2][...] for l in range(L)]   # (1, 4H) f32

    # Layer-0 input projection for ALL timesteps, bias folded once (hoisted
    # out of the recurrence; one batched MXU matmul over M = T*B_pad rows).
    xg_sc[...] = jnp.dot(x2d_ref[...], wih[0],
                         preferred_element_type=f32) + bias[0]

    def cell(gates, c):
        # One sigmoid + one tanh on the full (B_pad, 4H) vreg, then slices.
        sig = jax.nn.sigmoid(gates)
        tg = jnp.tanh(gates)
        i = sig[:, 0 * H:1 * H]
        f = sig[:, 1 * H:2 * H]
        g = tg[:, 2 * H:3 * H]
        o = sig[:, 3 * H:4 * H]
        c_new = f * c + i * g
        h_new = o * jnp.tanh(c_new)
        return h_new, c_new

    def step(s, hs, cs, active):
        """One wavefront step: layer l processes timestep t = s - l.

        hs/cs are tuples of f32 (B_pad, H) values in vregs.  Layer l>0 reads
        layer l-1's hidden state from the *incoming* hs (previous global step),
        which is exactly its own timestep-t input in the wavefront schedule.
        """
        new_h, new_c = list(hs), list(cs)
        for l in active:
            if l == 0:
                if isinstance(s, int):
                    r0 = s * B_pad
                else:
                    r0 = pl.multiple_of(s * B_pad, B_pad)
                gates = xg_sc[pl.ds(r0, B_pad), :] + jnp.dot(
                    hs[0].astype(bf16), whh[0], preferred_element_type=f32)
            else:
                gates = (jnp.dot(hs[l - 1].astype(bf16), wih[l],
                                 preferred_element_type=f32)
                         + jnp.dot(hs[l].astype(bf16), whh[l],
                                   preferred_element_type=f32)
                         + bias[l])
            new_h[l], new_c[l] = cell(gates, cs[l])
        return tuple(new_h), tuple(new_c)

    zero = jnp.zeros((B_pad, H), f32)
    hs = tuple(zero for _ in range(L))
    cs = tuple(zero for _ in range(L))
    total_steps = T + L - 1

    if T <= _UNROLL_T_MAX:
        # Fully unrolled wavefront: every step is static, no guards needed.
        for s in range(total_steps):
            active = [l for l in range(L) if 0 <= s - l < T]
            hs, cs = step(s, hs, cs, active)
    else:
        # Warm-up: layers join the wavefront one by one (static steps).
        for s in range(min(L - 1, total_steps)):
            active = [l for l in range(L) if 0 <= s - l < T]
            hs, cs = step(s, hs, cs, active)

        # Steady state: all layers active, recurrent state loop-carried in vregs.
        def body(s, carry):
            hs_, cs_ = carry
            return step(s, hs_, cs_, tuple(range(L)))

        hs, cs = jax.lax.fori_loop(L - 1, T, body, (hs, cs), unroll=2)

        # Drain: upper layers finish their last timesteps (static steps).
        for s in range(T, total_steps):
            active = [l for l in range(L) if 0 <= s - l < T]
            hs, cs = step(s, hs, cs, active)

    # ---- hn.view(B, -1): replicate PyTorch's raw (L, B, H) -> (B, L*H) view ----
    # (This mixes layer and batch rows exactly like `hn.view(x.size(0), -1)`.)
    hnf_sc[...] = jnp.zeros_like(hnf_sc)
    LH = L * H
    for l in range(L):
        for b in range(B):
            flat = (l * B + b) * H
            row, col = flat // LH, flat % LH
            hnf_sc[row:row + 1, col:col + H] = hs[l][b:b + 1, :]

    # ---- MLP head: relu -> fc1 -> relu -> fc1_1 -> relu -> fc2 -> relu -> fc2_1 ----
    a = jnp.maximum(hnf_sc[...], 0.0)
    a = jnp.maximum(jnp.dot(a.astype(bf16), w1[...],
                            preferred_element_type=f32) + b1[...], 0.0)
    a = jnp.maximum(jnp.dot(a.astype(bf16), w2[...],
                            preferred_element_type=f32) + b2[...], 0.0)
    a = jnp.maximum(jnp.dot(a.astype(bf16), w3[...],
                            preferred_element_type=f32) + b3[...], 0.0)
    out_ref[...] = jnp.dot(a.astype(bf16), w4[...],
                           preferred_element_type=f32) + b4[...]


def lstm_mlp_fused(x2d, kp, *, num_layers, T, B, B_pad, H, C_pad):
    flat = []
    for lp in kp["lstm"]:
        flat += [lp["wih_t"], lp["whh_t"], lp["b"]]
    flat += [kp["w1t"], kp["b1"], kp["w2t"], kp["b2"],
             kp["w3t"], kp["b3"], kp["w4t"], kp["b4"]]
    kernel = functools.partial(_lstm_mlp_kernel, num_layers=num_layers,
                               T=T, B=B, B_pad=B_pad, H=H)
    return pl.pallas_call(
        kernel,
        out_shape=jax.ShapeDtypeStruct((B_pad, C_pad), jnp.float32),
        scratch_shapes=[
            pltpu.VMEM((T * B_pad, 4 * H), jnp.float32),        # hoisted layer-0 xg
            pltpu.VMEM((B_pad, num_layers * H), jnp.float32),   # hn.view replica
        ],
        compiler_params=pltpu.CompilerParams(vmem_limit_bytes=32 * 1024 * 1024),
    )(x2d, *flat)


# --------------------------------- full model ---------------------------------
def model_forward(params, x):
    """x: (B, T, input_size) f32 -> (B, num_classes) f32 (matches PyTorch LSTM.forward)."""
    B, T, _ = x.shape
    L = len(params["lstm"])
    H = params["lstm"][0]["whh_t"].shape[0]
    C = params["w4t"].shape[1]
    B_pad = ((B + 7) // 8) * 8                      # pad batch to a sublane tile
    C_pad = ((C + 127) // 128) * 128                # lane-dense output store

    bf16 = jnp.bfloat16
    kp = {"lstm": [{"wih_t": lp["wih_t"].astype(bf16),
                    "whh_t": lp["whh_t"].astype(bf16),
                    "b": lp["b"]} for lp in params["lstm"]]}
    kp["w1t"], kp["b1"] = params["w1t"].astype(bf16), params["b1"]
    kp["w2t"], kp["b2"] = params["w2t"].astype(bf16), params["b2"]
    kp["w3t"], kp["b3"] = params["w3t"].astype(bf16), params["b3"]
    kp["w4t"] = jnp.pad(params["w4t"], ((0, 0), (0, C_pad - C))).astype(bf16)
    kp["b4"] = jnp.pad(params["b4"], ((0, 0), (0, C_pad - C)))

    x_tm = jnp.transpose(x, (1, 0, 2))              # (T, B, D) time-major
    x_tm = jnp.pad(x_tm, ((0, 0), (0, B_pad - B), (0, 0)))
    x2d = x_tm.reshape(T * B_pad, x.shape[2]).astype(bf16)

    out = lstm_mlp_fused(x2d, kp, num_layers=L, T=T, B=B, B_pad=B_pad,
                         H=H, C_pad=C_pad)          # (B_pad, C_pad)
    return out[:B, :C]


# ------------------------------ parameter setup --------------------------------
def init_params(key, num_classes, input_size, hidden_size, num_layers):
    def uni(k, shape, scale):
        return jax.random.uniform(k, shape, jnp.float32, -scale, scale)

    params = {"lstm": []}
    klstm = 1.0 / jnp.sqrt(hidden_size)
    for l in range(num_layers):
        d_in = input_size if l == 0 else hidden_size
        key, k1, k2, k3, k4 = jax.random.split(key, 5)
        w_ih = uni(k1, (4 * hidden_size, d_in), klstm)          # PyTorch (4H, D_in)
        w_hh = uni(k2, (4 * hidden_size, hidden_size), klstm)   # PyTorch (4H, H)
        b_ih = uni(k3, (4 * hidden_size,), klstm)
        b_hh = uni(k4, (4 * hidden_size,), klstm)
        params["lstm"].append({
            "wih_t": w_ih.T,                                    # (D_in, 4H)
            "whh_t": w_hh.T,                                    # (H, 4H)
            "b": (b_ih + b_hh).reshape(1, 4 * hidden_size),
        })

    LH = hidden_size * num_layers
    dims = [(LH, 512), (512, LH), (LH, 256), (256, num_classes)]
    for idx, (d_in, d_out) in enumerate(dims, start=1):
        key, kw, kb = jax.random.split(key, 3)
        scale = 1.0 / jnp.sqrt(d_in)
        W = uni(kw, (d_out, d_in), scale)                       # PyTorch (out, in)
        b = uni(kb, (d_out,), scale)
        params[f"w{idx}t"] = W.T                                # (in, out)
        params[f"b{idx}"] = b.reshape(1, d_out)
    return params


# ------------------------------ pure-JAX reference ------------------------------
def ref_forward(params, x, matmul_dtype=jnp.float32):
    md = matmul_dtype

    def dot(a, b):
        return jnp.dot(a.astype(md), b.astype(md),
                       preferred_element_type=jnp.float32)

    B = x.shape[0]
    layer_in = jnp.transpose(x, (1, 0, 2))
    h_list = []
    for lp in params["lstm"]:
        H = lp["whh_t"].shape[0]

        def step(carry, xt, lp=lp, H=H):
            h, c = carry
            gates = dot(xt, lp["wih_t"]) + dot(h, lp["whh_t"]) + lp["b"]
            i = jax.nn.sigmoid(gates[:, :H])
            f = jax.nn.sigmoid(gates[:, H:2 * H])
            g = jnp.tanh(gates[:, 2 * H:3 * H])
            o = jax.nn.sigmoid(gates[:, 3 * H:])
            c = f * c + i * g
            h = o * jnp.tanh(c)
            return (h, c), h

        (h, _), ys = jax.lax.scan(step, (jnp.zeros((B, H)), jnp.zeros((B, H))),
                                  layer_in)
        layer_in = ys
        h_list.append(h)
    hn = jnp.stack(h_list, 0).reshape(B, -1)        # raw view, same as hn.view(B,-1)
    a = jnp.maximum(hn, 0.0)
    a = jnp.maximum(dot(a, params["w1t"]) + params["b1"], 0.0)
    a = jnp.maximum(dot(a, params["w2t"]) + params["b2"], 0.0)
    a = jnp.maximum(dot(a, params["w3t"]) + params["b3"], 0.0)
    return dot(a, params["w4t"]) + params["b4"]


if __name__ == "__main__":
    # Small shapes consistent with the module's forward.
    num_classes, input_size, hidden_size, num_layers, seq_length = 10, 4, 32, 2, 8
    batch = 2

    key = jax.random.PRNGKey(0)
    key, kx, kx2, kp = jax.random.split(key, 4)
    params = init_params(kp, num_classes, input_size, hidden_size, num_layers)
    x = jax.random.normal(kx, (batch, seq_length, input_size), jnp.float32)

    fwd = jax.jit(model_forward)
    out = jax.block_until_ready(fwd(params, x))
    assert out.shape == (batch, num_classes)

    # Tight check vs a reference using the same bf16 matmul operands / f32 acc,
    # loose sanity check vs the pure-f32 reference (bf16 rounding headroom).
    ref_bf16 = ref_forward(params, x, matmul_dtype=jnp.bfloat16)
    ref_f32 = ref_forward(params, x, matmul_dtype=jnp.float32)
    assert jnp.allclose(out, ref_bf16, rtol=2e-3, atol=2e-3), "mismatch vs bf16 reference"
    assert jnp.allclose(out, ref_f32, rtol=5e-2, atol=5e-2), "mismatch vs f32 reference"

    # Longer sequence exercises the fori_loop (steady-state wavefront) path.
    x_long = jax.random.normal(kx2, (batch, 24, input_size), jnp.float32)
    out_long = jax.block_until_ready(fwd(params, x_long))
    ref_long = ref_forward(params, x_long, matmul_dtype=jnp.bfloat16)
    assert jnp.allclose(out_long, ref_long, rtol=2e-3, atol=2e-3), "mismatch (long seq)"

    print("KERNEL_OK")
</pallas_src>

<mosaic_0001>
module attributes {stable_mosaic.version = 11 : i64} {
  func.func @_lstm_mlp_kernel(%arg0: memref<64x4xbf16, #tpu.memory_space<vmem>>, %arg1: memref<4x128xbf16, #tpu.memory_space<vmem>>, %arg2: memref<32x128xbf16, #tpu.memory_space<vmem>>, %arg3: memref<1x128xf32, #tpu.memory_space<vmem>>, %arg4: memref<32x128xbf16, #tpu.memory_space<vmem>>, %arg5: memref<32x128xbf16, #tpu.memory_space<vmem>>, %arg6: memref<1x128xf32, #tpu.memory_space<vmem>>, %arg7: memref<64x512xbf16, #tpu.memory_space<vmem>>, %arg8: memref<1x512xf32, #tpu.memory_space<vmem>>, %arg9: memref<512x64xbf16, #tpu.memory_space<vmem>>, %arg10: memref<1x64xf32, #tpu.memory_space<vmem>>, %arg11: memref<64x256xbf16, #tpu.memory_space<vmem>>, %arg12: memref<1x256xf32, #tpu.memory_space<vmem>>, %arg13: memref<256x128xbf16, #tpu.memory_space<vmem>>, %arg14: memref<1x128xf32, #tpu.memory_space<vmem>>, %arg15: memref<8x128xf32, #tpu.memory_space<vmem>>, %arg16: memref<64x128xf32, #tpu.memory_space<vmem>>, %arg17: memref<8x64xf32, #tpu.memory_space<vmem>>) attributes {dimension_semantics = [], scalar_prefetch = 0 : i64, scratch_operands = 2 : i64, tpu.core_type = #tpu.core_type<tc>} {
    %c0 = arith.constant 0 : index
    %c0_0 = arith.constant 0 : index
    %0 = vector.load %arg1[%c0, %c0_0] : memref<4x128xbf16, #tpu.memory_space<vmem>>, vector<4x128xbf16>
    %c0_1 = arith.constant 0 : index
    %c0_2 = arith.constant 0 : index
    %1 = vector.load %arg4[%c0_1, %c0_2] : memref<32x128xbf16, #tpu.memory_space<vmem>>, vector<32x128xbf16>
    %c0_3 = arith.constant 0 : index
    %c0_4 = arith.constant 0 : index
    %2 = vector.load %arg2[%c0_3, %c0_4] : memref<32x128xbf16, #tpu.memory_space<vmem>>, vector<32x128xbf16>
    %c0_5 = arith.constant 0 : index
    %c0_6 = arith.constant 0 : index
    %3 = vector.load %arg5[%c0_5, %c0_6] : memref<32x128xbf16, #tpu.memory_space<vmem>>, vector<32x128xbf16>
    %c0_7 = arith.constant 0 : index
    %c0_8 = arith.constant 0 : index
    %4 = vector.load %arg3[%c0_7, %c0_8] : memref<1x128xf32, #tpu.memory_space<vmem>>, vector<1x128xf32>
    %c0_9 = arith.constant 0 : index
    %c0_10 = arith.constant 0 : index
    %5 = vector.load %arg6[%c0_9, %c0_10] : memref<1x128xf32, #tpu.memory_space<vmem>>, vector<1x128xf32>
    %c0_11 = arith.constant 0 : index
    %c0_12 = arith.constant 0 : index
    %6 = vector.load %arg0[%c0_11, %c0_12] : memref<64x4xbf16, #tpu.memory_space<vmem>>, vector<64x4xbf16>
    %cst = arith.constant dense<0.000000e+00> : vector<64x128xf32>
    %7 = tpu.matmul %6, %0, %cst {dimension_numbers = #tpu.dot_dimension_numbers<[1], [0], [0], [1], [0, 0, 1, 1], [], []>} : vector<64x4xbf16>, vector<4x128xbf16>, vector<64x128xf32> -> vector<64x128xf32>
    %8 = vector.broadcast %4 : vector<1x128xf32> to vector<64x128xf32>
    %9 = arith.addf %7, %8 : vector<64x128xf32>
    %c0_13 = arith.constant 0 : index
    %c0_14 = arith.constant 0 : index
    %10 = vector.load %arg16[%c0_13, %c0_14] : memref<64x128xf32, #tpu.memory_space<vmem>>, vector<64x128xf32>
    tpu.vector_store %arg16[%c0_13, %c0_14], %9 {strides = array<i32>} : memref<64x128xf32, #tpu.memory_space<vmem>>, vector<64x128xf32>,
    %cst_15 = arith.constant 0.000000e+00 : f32
    %11 = vector.broadcast %cst_15 : f32 to vector<8x32xf32>
    %c0_16 = arith.constant 0 : index
    %c0_17 = arith.constant 0 : index
    %12 = vector.load %arg16[%c0_16, %c0_17] : memref<64x128xf32, #tpu.memory_space<vmem>>, vector<8x128xf32>
    %13 = arith.truncf %11 : vector<8x32xf32> to vector<8x32xbf16>
    %cst_18 = arith.constant dense<0.000000e+00> : vector<8x128xf32>
    %14 = tpu.matmul %13, %2, %cst_18 {dimension_numbers = #tpu.dot_dimension_numbers<[1], [0], [0], [1], [0, 0, 1, 1], [], []>} : vector<8x32xbf16>, vector<32x128xbf16>, vector<8x128xf32> -> vector<8x128xf32>
    %15 = arith.addf %12, %14 : vector<8x128xf32>
    %16 = arith.negf %15 : vector<8x128xf32>
    %17 = math.exp %16 : vector<8x128xf32>
    %cst_19 = arith.constant 1.000000e+00 : f32
    %18 = vector.broadcast %cst_19 : f32 to vector<8x128xf32>
    %19 = arith.addf %18, %17 : vector<8x128xf32>
    %20 = arith.divf %18, %19 : vector<8x128xf32>
    %21 = math.tanh %15 : vector<8x128xf32>
    %22 = vector.extract_strided_slice %20 {offsets = [0, 0], sizes = [8, 32], strides = [1, 1]} : vector<8x128xf32> to vector<8x32xf32>
    %23 = vector.extract_strided_slice %20 {offsets = [0, 32], sizes = [8, 32], strides = [1, 1]} : vector<8x128xf32> to vector<8x32xf32>
    %24 = vector.extract_strided_slice %21 {offsets = [0, 64], sizes = [8, 32], strides = [1, 1]} : vector<8x128xf32> to vector<8x32xf32>
    %25 = vector.extract_strided_slice %20 {offsets = [0, 96], sizes = [8, 32], strides = [1, 1]} : vector<8x128xf32> to vector<8x32xf32>
    %26 = arith.mulf %23, %11 : vector<8x32xf32>
    %27 = arith.mulf %22, %24 : vector<8x32xf32>
    %28 = arith.addf %26, %27 : vector<8x32xf32>
    %29 = math.tanh %28 : vector<8x32xf32>
    %30 = arith.mulf %25, %29 : vector<8x32xf32>
    %c8 = arith.constant 8 : index
    %c0_20 = arith.constant 0 : index
    %31 = vector.load %arg16[%c8, %c0_20] : memref<64x128xf32, #tpu.memory_space<vmem>>, vector<8x128xf32>
    %32 = arith.truncf %30 : vector<8x32xf32> to vector<8x32xbf16>
    %cst_21 = arith.constant dense<0.000000e+00> : vector<8x128xf32>
    %33 = tpu.matmul %32, %2, %cst_21 {dimension_numbers = #tpu.dot_dimension_numbers<[1], [0], [0], [1], [0, 0, 1, 1], [], []>} : vector<8x32xbf16>, vector<32x128xbf16>, vector<8x128xf32> -> vector<8x128xf32>
    %34 = arith.addf %31, %33 : vector<8x128xf32>
    %35 = arith.negf %34 : vector<8x128xf32>
    %36 = math.exp %35 : vector<8x128xf32>
    %cst_22 = arith.constant 1.000000e+00 : f32
    %37 = vector.broadcast %cst_22 : f32 to vector<8x128xf32>
    %38 = arith.addf %37, %36 : vector<8x128xf32>
    %39 = arith.divf %37, %38 : vector<8x128xf32>
    %40 = math.tanh %34 : vector<8x128xf32>
    %41 = vector.extract_strided_slice %39 {offsets = [0, 0], sizes = [8, 32], strides = [1, 1]} : vector<8x128xf32> to vector<8x32xf32>
    %42 = vector.extract_strided_slice %39 {offsets = [0, 32], sizes = [8, 32], strides = [1, 1]} : vector<8x128xf32> to vector<8x32xf32>
    %43 = vector.extract_strided_slice %40 {offsets = [0, 64], sizes = [8, 32], strides = [1, 1]} : vector<8x128xf32> to vector<8x32xf32>
    %44 = vector.extract_strided_slice %39 {offsets = [0, 96], sizes = [8, 32], strides = [1, 1]} : vector<8x128xf32> to vector<8x32xf32>
    %45 = arith.mulf %42, %28 : vector<8x32xf32>
    %46 = arith.mulf %41, %43 : vector<8x32xf32>
    %47 = arith.addf %45, %46 : vector<8x32xf32>
    %48 = math.tanh %47 : vector<8x32xf32>
    %49 = arith.mulf %44, %48 : vector<8x32xf32>
    %50 = arith.truncf %30 : vector<8x32xf32> to vector<8x32xbf16>
    %cst_23 = arith.constant dense<0.000000e+00> : vector<8x128xf32>
    %51 = tpu.matmul %50, %1, %cst_23 {dimension_numbers = #tpu.dot_dimension_numbers<[1], [0], [0], [1], [0, 0, 1, 1], [], []>} : vector<8x32xbf16>, vector<32x128xbf16>, vector<8x128xf32> -> vector<8x128xf32>
    %52 = arith.truncf %11 : vector<8x32xf32> to vector<8x32xbf16>
    %cst_24 = arith.constant dense<0.000000e+00> : vector<8x128xf32>
    %53 = tpu.matmul %52, %3, %cst_24 {dimension_numbers = #tpu.dot_dimension_numbers<[1], [0], [0], [1], [0, 0, 1, 1], [], []>} : vector<8x32xbf16>, vector<32x128xbf16>, vector<8x128xf32> -> vector<8x128xf32>
    %54 = arith.addf %51, %53 : vector<8x128xf32>
    %55 = vector.broadcast %5 : vector<1x128xf32> to vector<8x128xf32>
    %56 = arith.addf %54, %55 : vector<8x128xf32>
    %57 = arith.negf %56 : vector<8x128xf32>
    %58 = math.exp %57 : vector<8x128xf32>
    %cst_25 = arith.constant 1.000000e+00 : f32
    %59 = vector.broadcast %cst_25 : f32 to vector<8x128xf32>
    %60 = arith.addf %59, %58 : vector<8x128xf32>
    %61 = arith.divf %59, %60 : vector<8x128xf32>
    %62 = math.tanh %56 : vector<8x128xf32>
    %63 = vector.extract_strided_slice %61 {offsets = [0, 0], sizes = [8, 32], strides = [1, 1]} : vector<8x128xf32> to vector<8x32xf32>
    %64 = vector.extract_strided_slice %61 {offsets = [0, 32], sizes = [8, 32], strides = [1, 1]} : vector<8x128xf32> to vector<8x32xf32>
    %65 = vector.extract_strided_slice %62 {offsets = [0, 64], sizes = [8, 32], strides = [1, 1]} : vector<8x128xf32> to vector<8x32xf32>
    %66 = vector.extract_strided_slice %61 {offsets = [0, 96], sizes = [8, 32], strides = [1, 1]} : vector<8x128xf32> to vector<8x32xf32>
    %67 = arith.mulf %64, %11 : vector<8x32xf32>
    %68 = arith.mulf %63, %65 : vector<8x32xf32>
    %69 = arith.addf %67, %68 : vector<8x32xf32>
    %70 = math.tanh %69 : vector<8x32xf32>
    %71 = arith.mulf %66, %70 : vector<8x32xf32>
    %c16 = arith.constant 16 : index
    %c0_26 = arith.constant 0 : index
    %72 = vector.load %arg16[%c16, %c0_26] : memref<64x128xf32, #tpu.memory_space<vmem>>, vector<8x128xf32>
    %73 = arith.truncf %49 : vector<8x32xf32> to vector<8x32xbf16>
    %cst_27 = arith.constant dense<0.000000e+00> : vector<8x128xf32>
    %74 = tpu.matmul %73, %2, %cst_27 {dimension_numbers = #tpu.dot_dimension_numbers<[1], [0], [0], [1], [0, 0, 1, 1], [], []>} : vector<8x32xbf16>, vector<32x128xbf16>, vector<8x128xf32> -> vector<8x128xf32>
    %75 = arith.addf %72, %74 : vector<8x128xf32>
    %76 = arith.negf %75 : vector<8x128xf32>
    %77 = math.exp %76 : vector<8x128xf32>
    %cst_28 = arith.constant 1.000000e+00 : f32
    %78 = vector.broadcast %cst_28 : f32 to vector<8x128xf32>
    %79 = arith.addf %78, %77 : vector<8x128xf32>
    %80 = arith.divf %78, %79 : vector<8x128xf32>
    %81 = math.tanh %75 : vector<8x128xf32>
    %82 = vector.extract_strided_slice %80 {offsets = [0, 0], sizes = [8, 32], strides = [1, 1]} : vector<8x128xf32> to vector<8x32xf32>
    %83 = vector.extract_strided_slice %80 {offsets = [0, 32], sizes = [8, 32], strides = [1, 1]} : vector<8x128xf32> to vector<8x32xf32>
    %84 = vector.extract_strided_slice %81 {offsets = [0, 64], sizes = [8, 32], strides = [1, 1]} : vector<8x128xf32> to vector<8x32xf32>
    %85 = vector.extract_strided_slice %80 {offsets = [0, 96], sizes = [8, 32], strides = [1, 1]} : vector<8x128xf32> to vector<8x32xf32>
    %86 = arith.mulf %83, %47 : vector<8x32xf32>
    %87 = arith.mulf %82, %84 : vector<8x32xf32>
    %88 = arith.addf %86, %87 : vector<8x32xf32>
    %89 = math.tanh %88 : vector<8x32xf32>
    %90 = arith.mulf %85, %89 : vector<8x32xf32>
    %91 = arith.truncf %49 : vector<8x32xf32> to vector<8x32xbf16>
    %cst_29 = arith.constant dense<0.000000e+00> : vector<8x128xf32>
    %92 = tpu.matmul %91, %1, %cst_29 {dimension_numbers = #tpu.dot_dimension_numbers<[1], [0], [0], [1], [0, 0, 1, 1], [], []>} : vector<8x32xbf16>, vector<32x128xbf16>, vector<8x128xf32> -> vector<8x128xf32>
    %93 = arith.truncf %71 : vector<8x32xf32> to vector<8x32xbf16>
    %cst_30 = arith.constant dense<0.000000e+00> : vector<8x128xf32>
    %94 = tpu.matmul %93, %3, %cst_30 {dimension_numbers = #tpu.dot_dimension_numbers<[1], [0], [0], [1], [0, 0, 1, 1], [], []>} : vector<8x32xbf16>, vector<32x128xbf16>, vector<8x128xf32> -> vector<8x128xf32>
    %95 = arith.addf %92, %94 : vector<8x128xf32>
    %96 = vector.broadcast %5 : vector<1x128xf32> to vector<8x128xf32>
    %97 = arith.addf %95, %96 : vector<8x128xf32>
    %98 = arith.negf %97 : vector<8x128xf32>
    %99 = math.exp %98 : vector<8x128xf32>
    %cst_31 = arith.constant 1.000000e+00 : f32
    %100 = vector.broadcast %cst_31 : f32 to vector<8x128xf32>
    %101 = arith.addf %100, %99 : vector<8x128xf32>
    %102 = arith.divf %100, %101 : vector<8x128xf32>
    %103 = math.tanh %97 : vector<8x128xf32>
    %104 = vector.extract_strided_slice %102 {offsets = [0, 0], sizes = [8, 32], strides = [1, 1]} : vector<8x128xf32> to vector<8x32xf32>
    %105 = vector.extract_strided_slice %102 {offsets = [0, 32], sizes = [8, 32], strides = [1, 1]} : vector<8x128xf32> to vector<8x32xf32>
    %106 = vector.extract_strided_slice %103 {offsets = [0, 64], sizes = [8, 32], strides = [1, 1]} : vector<8x128xf32> to vector<8x32xf32>
    %107 = vector.extract_strided_slice %102 {offsets = [0, 96], sizes = [8, 32], strides = [1, 1]} : vector<8x128xf32> to vector<8x32xf32>
    %108 = arith.mulf %105, %69 : vector<8x32xf32>
    %109 = arith.mulf %104, %106 : vector<8x32xf32>
    %110 = arith.addf %108, %109 : vector<8x32xf32>
    %111 = math.tanh %110 : vector<8x32xf32>
    %112 = arith.mulf %107, %111 : vector<8x32xf32>
    %c24 = arith.constant 24 : index
    %c0_32 = arith.constant 0 : index
    %113 = vector.load %arg16[%c24, %c0_32] : memref<64x128xf32, #tpu.memory_space<vmem>>, vector<8x128xf32>
    %114 = arith.truncf %90 : vector<8x32xf32> to vector<8x32xbf16>
    %cst_33 = arith.constant dense<0.000000e+00> : vector<8x128xf32>
    %115 = tpu.matmul %114, %2, %cst_33 {dimension_numbers = #tpu.dot_dimension_numbers<[1], [0], [0], [1], [0, 0, 1, 1], [], []>} : vector<8x32xbf16>, vector<32x128xbf16>, vector<8x128xf32> -> vector<8x128xf32>
    %116 = arith.addf %113, %115 : vector<8x128xf32>
    %117 = arith.negf %116 : vector<8x128xf32>
    %118 = math.exp %117 : vector<8x128xf32>
    %cst_34 = arith.constant 1.000000e+00 : f32
    %119 = vector.broadcast %cst_34 : f32 to vector<8x128xf32>
    %120 = arith.addf %119, %118 : vector<8x128xf32>
    %121 = arith.divf %119, %120 : vector<8x128xf32>
    %122 = math.tanh %116 : vector<8x128xf32>
    %123 = vector.extract_strided_slice %121 {offsets = [0, 0], sizes = [8, 32], strides = [1, 1]} : vector<8x128xf32> to vector<8x32xf32>
    %124 = vector.extract_strided_slice %121 {offsets = [0, 32], sizes = [8, 32], strides = [1, 1]} : vector<8x128xf32> to vector<8x32xf32>
    %125 = vector.extract_strided_slice %122 {offsets = [0, 64], sizes = [8, 32], strides = [1, 1]} : vector<8x128xf32> to vector<8x32xf32>
    %126 = vector.extract_strided_slice %121 {offsets = [0, 96], sizes = [8, 32], strides = [1, 1]} : vector<8x128xf32> to vector<8x32xf32>
    %127 = arith.mulf %124, %88 : vector<8x32xf32>
    %128 = arith.mulf %123, %125 : vector<8x32xf32>
    %129 = arith.addf %127, %128 : vector<8x32xf32>
    %130 = math.tanh %129 : vector<8x32xf32>
    %131 = arith.mulf %126, %130 : vector<8x32xf32>
    %132 = arith.truncf %90 : vector<8x32xf32> to vector<8x32xbf16>
    %cst_35 = arith.constant dense<0.000000e+00> : vector<8x128xf32>
    %133 = tpu.matmul %132, %1, %cst_35 {dimension_numbers = #tpu.dot_dimension_numbers<[1], [0], [0], [1], [0, 0, 1, 1], [], []>} : vector<8x32xbf16>, vector<32x128xbf16>, vector<8x128xf32> -> vector<8x128xf32>
    %134 = arith.truncf %112 : vector<8x32xf32> to vector<8x32xbf16>
    %cst_36 = arith.constant dense<0.000000e+00> : vector<8x128xf32>
    %135 = tpu.matmul %134, %3, %cst_36 {dimension_numbers = #tpu.dot_dimension_numbers<[1], [0], [0], [1], [0, 0, 1, 1], [], []>} : vector<8x32xbf16>, vector<32x128xbf16>, vector<8x128xf32> -> vector<8x128xf32>
    %136 = arith.addf %133, %135 : vector<8x128xf32>
    %137 = vector.broadcast %5 : vector<1x128xf32> to vector<8x128xf32>
    %138 = arith.addf %136, %137 : vector<8x128xf32>
    %139 = arith.negf %138 : vector<8x128xf32>
    %140 = math.exp %139 : vector<8x128xf32>
    %cst_37 = arith.constant 1.000000e+00 : f32
    %141 = vector.broadcast %cst_37 : f32 to vector<8x128xf32>
    %142 = arith.addf %141, %140 : vector<8x128xf32>
    %143 = arith.divf %141, %142 : vector<8x128xf32>
    %144 = math.tanh %138 : vector<8x128xf32>
    %145 = vector.extract_strided_slice %143 {offsets = [0, 0], sizes = [8, 32], strides = [1, 1]} : vector<8x128xf32> to vector<8x32xf32>
    %146 = vector.extract_strided_slice %143 {offsets = [0, 32], sizes = [8, 32], strides = [1, 1]} : vector<8x128xf32> to vector<8x32xf32>
    %147 = vector.extract_strided_slice %144 {offsets = [0, 64], sizes = [8, 32], strides = [1, 1]} : vector<8x128xf32> to vector<8x32xf32>
    %148 = vector.extract_strided_slice %143 {offsets = [0, 96], sizes = [8, 32], strides = [1, 1]} : vector<8x128xf32> to vector<8x32xf32>
    %149 = arith.mulf %146, %110 : vector<8x32xf32>
    %150 = arith.mulf %145, %147 : vector<8x32xf32>
    %151 = arith.addf %149, %150 : vector<8x32xf32>
    %152 = math.tanh %151 : vector<8x32xf32>
    %153 = arith.mulf %148, %152 : vector<8x32xf32>
    %c32 = arith.constant 32 : index
    %c0_38 = arith.constant 0 : index
    %154 = vector.load %arg16[%c32, %c0_38] : memref<64x128xf32, #tpu.memory_space<vmem>>, vector<8x128xf32>
    %155 = arith.truncf %131 : vector<8x32xf32> to vector<8x32xbf16>
    %cst_39 = arith.constant dense<0.000000e+00> : vector<8x128xf32>
    %156 = tpu.matmul %155, %2, %cst_39 {dimension_numbers = #tpu.dot_dimension_numbers<[1], [0], [0], [1], [0, 0, 1, 1], [], []>} : vector<8x32xbf16>, vector<32x128xbf16>, vector<8x128xf32> -> vector<8x128xf32>
    %157 = arith.addf %154, %156 : vector<8x128xf32>
    %158 = arith.negf %157 : vector<8x128xf32>
    %159 = math.exp %158 : vector<8x128xf32>
    %cst_40 = arith.constant 1.000000e+00 : f32
    %160 = vector.broadcast %cst_40 : f32 to vector<8x128xf32>
    %161 = arith.addf %160, %159 : vector<8x128xf32>
    %162 = arith.divf %160, %161 : vector<8x128xf32>
    %163 = math.tanh %157 : vector<8x128xf32>
    %164 = vector.extract_strided_slice %162 {offsets = [0, 0], sizes = [8, 32], strides = [1, 1]} : vector<8x128xf32> to vector<8x32xf32>
    %165 = vector.extract_strided_slice %162 {offsets = [0, 32], sizes = [8, 32], strides = [1, 1]} : vector<8x128xf32> to vector<8x32xf32>
    %166 = vector.extract_strided_slice %163 {offsets = [0, 64], sizes = [8, 32], strides = [1, 1]} : vector<8x128xf32> to vector<8x32xf32>
    %167 = vector.extract_strided_slice %162 {offsets = [0, 96], sizes = [8, 32], strides = [1, 1]} : vector<8x128xf32> to vector<8x32xf32>
    %168 = arith.mulf %165, %129 : vector<8x32xf32>
    %169 = arith.mulf %164, %166 : vector<8x32xf32>
    %170 = arith.addf %168, %169 : vector<8x32xf32>
    %171 = math.tanh %170 : vector<8x32xf32>
    %172 = arith.mulf %167, %171 : vector<8x32xf32>
    %173 = arith.truncf %131 : vector<8x32xf32> to vector<8x32xbf16>
    %cst_41 = arith.constant dense<0.000000e+00> : vector<8x128xf32>
    %174 = tpu.matmul %173, %1, %cst_41 {dimension_numbers = #tpu.dot_dimension_numbers<[1], [0], [0], [1], [0, 0, 1, 1], [], []>} : vector<8x32xbf16>, vector<32x128xbf16>, vector<8x128xf32> -> vector<8x128xf32>
    %175 = arith.truncf %153 : vector<8x32xf32> to vector<8x32xbf16>
    %cst_42 = arith.constant dense<0.000000e+00> : vector<8x128xf32>
    %176 = tpu.matmul %175, %3, %cst_42 {dimension_numbers = #tpu.dot_dimension_numbers<[1], [0], [0], [1], [0, 0, 1, 1], [], []>} : vector<8x32xbf16>, vector<32x128xbf16>, vector<8x128xf32> -> vector<8x128xf32>
    %177 = arith.addf %174, %176 : vector<8x128xf32>
    %178 = vector.broadcast %5 : vector<1x128xf32> to vector<8x128xf32>
    %179 = arith.addf %177, %178 : vector<8x128xf32>
    %180 = arith.negf %179 : vector<8x128xf32>
    %181 = math.exp %180 : vector<8x128xf32>
    %cst_43 = arith.constant 1.000000e+00 : f32
    %182 = vector.broadcast %cst_43 : f32 to vector<8x128xf32>
    %183 = arith.addf %182, %181 : vector<8x128xf32>
    %184 = arith.divf %182, %183 : vector<8x128xf32>
    %185 = math.tanh %179 : vector<8x128xf32>
    %186 = vector.extract_strided_slice %184 {offsets = [0, 0], sizes = [8, 32], strides = [1, 1]} : vector<8x128xf32> to vector<8x32xf32>
    %187 = vector.extract_strided_slice %184 {offsets = [0, 32], sizes = [8, 32], strides = [1, 1]} : vector<8x128xf32> to vector<8x32xf32>
    %188 = vector.extract_strided_slice %185 {offsets = [0, 64], sizes = [8, 32], strides = [1, 1]} : vector<8x128xf32> to vector<8x32xf32>
    %189 = vector.extract_strided_slice %184 {offsets = [0, 96], sizes = [8, 32], strides = [1, 1]} : vector<8x128xf32> to vector<8x32xf32>
    %190 = arith.mulf %187, %151 : vector<8x32xf32>
    %191 = arith.mulf %186, %188 : vector<8x32xf32>
    %192 = arith.addf %190, %191 : vector<8x32xf32>
    %193 = math.tanh %192 : vector<8x32xf32>
    %194 = arith.mulf %189, %193 : vector<8x32xf32>
    %c40 = arith.constant 40 : index
    %c0_44 = arith.constant 0 : index
    %195 = vector.load %arg16[%c40, %c0_44] : memref<64x128xf32, #tpu.memory_space<vmem>>, vector<8x128xf32>
    %196 = arith.truncf %172 : vector<8x32xf32> to vector<8x32xbf16>
    %cst_45 = arith.constant dense<0.000000e+00> : vector<8x128xf32>
    %197 = tpu.matmul %196, %2, %cst_45 {dimension_numbers = #tpu.dot_dimension_numbers<[1], [0], [0], [1], [0, 0, 1, 1], [], []>} : vector<8x32xbf16>, vector<32x128xbf16>, vector<8x128xf32> -> vector<8x128xf32>
    %198 = arith.addf %195, %197 : vector<8x128xf32>
    %199 = arith.negf %198 : vector<8x128xf32>
    %200 = math.exp %199 : vector<8x128xf32>
    %cst_46 = arith.constant 1.000000e+00 : f32
    %201 = vector.broadcast %cst_46 : f32 to vector<8x128xf32>
    %202 = arith.addf %201, %200 : vector<8x128xf32>
    %203 = arith.divf %201, %202 : vector<8x128xf32>
    %204 = math.tanh %198 : vector<8x128xf32>
    %205 = vector.extract_strided_slice %203 {offsets = [0, 0], sizes = [8, 32], strides = [1, 1]} : vector<8x128xf32> to vector<8x32xf32>
    %206 = vector.extract_strided_slice %203 {offsets = [0, 32], sizes = [8, 32], strides = [1, 1]} : vector<8x128xf32> to vector<8x32xf32>
    %207 = vector.extract_strided_slice %204 {offsets = [0, 64], sizes = [8, 32], strides = [1, 1]} : vector<8x128xf32> to vector<8x32xf32>
    %208 = vector.extract_strided_slice %203 {offsets = [0, 96], sizes = [8, 32], strides = [1, 1]} : vector<8x128xf32> to vector<8x32xf32>
    %209 = arith.mulf %206, %170 : vector<8x32xf32>
    %210 = arith.mulf %205, %207 : vector<8x32xf32>
    %211 = arith.addf %209, %210 : vector<8x32xf32>
    %212 = math.tanh %211 : vector<8x32xf32>
    %213 = arith.mulf %208, %212 : vector<8x32xf32>
    %214 = arith.truncf %172 : vector<8x32xf32> to vector<8x32xbf16>
    %cst_47 = arith.constant dense<0.000000e+00> : vector<8x128xf32>
    %215 = tpu.matmul %214, %1, %cst_47 {dimension_numbers = #tpu.dot_dimension_numbers<[1], [0], [0], [1], [0, 0, 1, 1], [], []>} : vector<8x32xbf16>, vector<32x128xbf16>, vector<8x128xf32> -> vector<8x128xf32>
    %216 = arith.truncf %194 : vector<8x32xf32> to vector<8x32xbf16>
    %cst_48 = arith.constant dense<0.000000e+00> : vector<8x128xf32>
    %217 = tpu.matmul %216, %3, %cst_48 {dimension_numbers = #tpu.dot_dimension_numbers<[1], [0], [0], [1], [0, 0, 1, 1], [], []>} : vector<8x32xbf16>, vector<32x128xbf16>, vector<8x128xf32> -> vector<8x128xf32>
    %218 = arith.addf %215, %217 : vector<8x128xf32>
    %219 = vector.broadcast %5 : vector<1x128xf32> to vector<8x128xf32>
    %220 = arith.addf %218, %219 : vector<8x128xf32>
    %221 = arith.negf %220 : vector<8x128xf32>
    %222 = math.exp %221 : vector<8x128xf32>
    %cst_49 = arith.constant 1.000000e+00 : f32
    %223 = vector.broadcast %cst_49 : f32 to vector<8x128xf32>
    %224 = arith.addf %223, %222 : vector<8x128xf32>
    %225 = arith.divf %223, %224 : vector<8x128xf32>
    %226 = math.tanh %220 : vector<8x128xf32>
    %227 = vector.extract_strided_slice %225 {offsets = [0, 0], sizes = [8, 32], strides = [1, 1]} : vector<8x128xf32> to vector<8x32xf32>
    %228 = vector.extract_strided_slice %225 {offsets = [0, 32], sizes = [8, 32], strides = [1, 1]} : vector<8x128xf32> to vector<8x32xf32>
    %229 = vector.extract_strided_slice %226 {offsets = [0, 64], sizes = [8, 32], strides = [1, 1]} : vector<8x128xf32> to vector<8x32xf32>
    %230 = vector.extract_strided_slice %225 {offsets = [0, 96], sizes = [8, 32], strides = [1, 1]} : vector<8x128xf32> to vector<8x32xf32>
    %231 = arith.mulf %228, %192 : vector<8x32xf32>
    %232 = arith.mulf %227, %229 : vector<8x32xf32>
    %233 = arith.addf %231, %232 : vector<8x32xf32>
    %234 = math.tanh %233 : vector<8x32xf32>
    %235 = arith.mulf %230, %234 : vector<8x32xf32>
    %c48 = arith.constant 48 : index
    %c0_50 = arith.constant 0 : index
    %236 = vector.load %arg16[%c48, %c0_50] : memref<64x128xf32, #tpu.memory_space<vmem>>, vector<8x128xf32>
    %237 = arith.truncf %213 : vector<8x32xf32> to vector<8x32xbf16>
    %cst_51 = arith.constant dense<0.000000e+00> : vector<8x128xf32>
    %238 = tpu.matmul %237, %2, %cst_51 {dimension_numbers = #tpu.dot_dimension_numbers<[1], [0], [0], [1], [0, 0, 1, 1], [], []>} : vector<8x32xbf16>, vector<32x128xbf16>, vector<8x128xf32> -> vector<8x128xf32>
    %239 = arith.addf %236, %238 : vector<8x128xf32>
    %240 = arith.negf %239 : vector<8x128xf32>
    %241 = math.exp %240 : vector<8x128xf32>
    %cst_52 = arith.constant 1.000000e+00 : f32
    %242 = vector.broadcast %cst_52 : f32 to vector<8x128xf32>
    %243 = arith.addf %242, %241 : vector<8x128xf32>
    %244 = arith.divf %242, %243 : vector<8x128xf32>
    %245 = math.tanh %239 : vector<8x128xf32>
    %246 = vector.extract_strided_slice %244 {offsets = [0, 0], sizes = [8, 32], strides = [1, 1]} : vector<8x128xf32> to vector<8x32xf32>
    %247 = vector.extract_strided_slice %244 {offsets = [0, 32], sizes = [8, 32], strides = [1, 1]} : vector<8x128xf32> to vector<8x32xf32>
    %248 = vector.extract_strided_slice %245 {offsets = [0, 64], sizes = [8, 32], strides = [1, 1]} : vector<8x128xf32> to vector<8x32xf32>
    %249 = vector.extract_strided_slice %244 {offsets = [0, 96], sizes = [8, 32], strides = [1, 1]} : vector<8x128xf32> to vector<8x32xf32>
    %250 = arith.mulf %247, %211 : vector<8x32xf32>
    %251 = arith.mulf %246, %248 : vector<8x32xf32>
    %252 = arith.addf %250, %251 : vector<8x32xf32>
    %253 = math.tanh %252 : vector<8x32xf32>
    %254 = arith.mulf %249, %253 : vector<8x32xf32>
    %255 = arith.truncf %213 : vector<8x32xf32> to vector<8x32xbf16>
    %cst_53 = arith.constant dense<0.000000e+00> : vector<8x128xf32>
    %256 = tpu.matmul %255, %1, %cst_53 {dimension_numbers = #tpu.dot_dimension_numbers<[1], [0], [0], [1], [0, 0, 1, 1], [], []>} : vector<8x32xbf16>, vector<32x128xbf16>, vector<8x128xf32> -> vector<8x128xf32>
    %257 = arith.truncf %235 : vector<8x32xf32> to vector<8x32xbf16>
    %cst_54 = arith.constant dense<0.000000e+00> : vector<8x128xf32>
    %258 = tpu.matmul %257, %3, %cst_54 {dimension_numbers = #tpu.dot_dimension_numbers<[1], [0], [0], [1], [0, 0, 1, 1], [], []>} : vector<8x32xbf16>, vector<32x128xbf16>, vector<8x128xf32> -> vector<8x128xf32>
    %259 = arith.addf %256, %258 : vector<8x128xf32>
    %260 = vector.broadcast %5 : vector<1x128xf32> to vector<8x128xf32>
    %261 = arith.addf %259, %260 : vector<8x128xf32>
    %262 = arith.negf %261 : vector<8x128xf32>
    %263 = math.exp %262 : vector<8x128xf32>
    %cst_55 = arith.constant 1.000000e+00 : f32
    %264 = vector.broadcast %cst_55 : f32 to vector<8x128xf32>
    %265 = arith.addf %264, %263 : vector<8x128xf32>
    %266 = arith.divf %264, %265 : vector<8x128xf32>
    %267 = math.tanh %261 : vector<8x128xf32>
    %268 = vector.extract_strided_slice %266 {offsets = [0, 0], sizes = [8, 32], strides = [1, 1]} : vector<8x128xf32> to vector<8x32xf32>
    %269 = vector.extract_strided_slice %266 {offsets = [0, 32], sizes = [8, 32], strides = [1, 1]} : vector<8x128xf32> to vector<8x32xf32>
    %270 = vector.extract_strided_slice %267 {offsets = [0, 64], sizes = [8, 32], strides = [1, 1]} : vector<8x128xf32> to vector<8x32xf32>
    %271 = vector.extract_strided_slice %266 {offsets = [0, 96], sizes = [8, 32], strides = [1, 1]} : vector<8x128xf32> to vector<8x32xf32>
    %272 = arith.mulf %269, %233 : vector<8x32xf32>
    %273 = arith.mulf %268, %270 : vector<8x32xf32>
    %274 = arith.addf %272, %273 : vector<8x32xf32>
    %275 = math.tanh %274 : vector<8x32xf32>
    %276 = arith.mulf %271, %275 : vector<8x32xf32>
    %c56 = arith.constant 56 : index
    %c0_56 = arith.constant 0 : index
    %277 = vector.load %arg16[%c56, %c0_56] : memref<64x128xf32, #tpu.memory_space<vmem>>, vector<8x128xf32>
    %278 = arith.truncf %254 : vector<8x32xf32> to vector<8x32xbf16>
    %cst_57 = arith.constant dense<0.000000e+00> : vector<8x128xf32>
    %279 = tpu.matmul %278, %2, %cst_57 {dimension_numbers = #tpu.dot_dimension_numbers<[1], [0], [0], [1], [0, 0, 1, 1], [], []>} : vector<8x32xbf16>, vector<32x128xbf16>, vector<8x128xf32> -> vector<8x128xf32>
    %280 = arith.addf %277, %279 : vector<8x128xf32>
    %281 = arith.negf %280 : vector<8x128xf32>
    %282 = math.exp %281 : vector<8x128xf32>
    %cst_58 = arith.constant 1.000000e+00 : f32
    %283 = vector.broadcast %cst_58 : f32 to vector<8x128xf32>
    %284 = arith.addf %283, %282 : vector<8x128xf32>
    %285 = arith.divf %283, %284 : vector<8x128xf32>
    %286 = math.tanh %280 : vector<8x128xf32>
    %287 = vector.extract_strided_slice %285 {offsets = [0, 0], sizes = [8, 32], strides = [1, 1]} : vector<8x128xf32> to vector<8x32xf32>
    %288 = vector.extract_strided_slice %285 {offsets = [0, 32], sizes = [8, 32], strides = [1, 1]} : vector<8x128xf32> to vector<8x32xf32>
    %289 = vector.extract_strided_slice %286 {offsets = [0, 64], sizes = [8, 32], strides = [1, 1]} : vector<8x128xf32> to vector<8x32xf32>
    %290 = vector.extract_strided_slice %285 {offsets = [0, 96], sizes = [8, 32], strides = [1, 1]} : vector<8x128xf32> to vector<8x32xf32>
    %291 = arith.mulf %288, %252 : vector<8x32xf32>
    %292 = arith.mulf %287, %289 : vector<8x32xf32>
    %293 = arith.addf %291, %292 : vector<8x32xf32>
    %294 = math.tanh %293 : vector<8x32xf32>
    %295 = arith.mulf %290, %294 : vector<8x32xf32>
    %296 = arith.truncf %254 : vector<8x32xf32> to vector<8x32xbf16>
    %cst_59 = arith.constant dense<0.000000e+00> : vector<8x128xf32>
    %297 = tpu.matmul %296, %1, %cst_59 {dimension_numbers = #tpu.dot_dimension_numbers<[1], [0], [0], [1], [0, 0, 1, 1], [], []>} : vector<8x32xbf16>, vector<32x128xbf16>, vector<8x128xf32> -> vector<8x128xf32>
    %298 = arith.truncf %276 : vector<8x32xf32> to vector<8x32xbf16>
    %cst_60 = arith.constant dense<0.000000e+00> : vector<8x128xf32>
    %299 = tpu.matmul %298, %3, %cst_60 {dimension_numbers = #tpu.dot_dimension_numbers<[1], [0], [0], [1], [0, 0, 1, 1], [], []>} : vector<8x32xbf16>, vector<32x128xbf16>, vector<8x128xf32> -> vector<8x128xf32>
    %300 = arith.addf %297, %299 : vector<8x128xf32>
    %301 = vector.broadcast %5 : vector<1x128xf32> to vector<8x128xf32>
    %302 = arith.addf %300, %301 : vector<8x128xf32>
    %303 = arith.negf %302 : vector<8x128xf32>
    %304 = math.exp %303 : vector<8x128xf32>
    %cst_61 = arith.constant 1.000000e+00 : f32
    %305 = vector.broadcast %cst_61 : f32 to vector<8x128xf32>
    %306 = arith.addf %305, %304 : vector<8x128xf32>
    %307 = arith.divf %305, %306 : vector<8x128xf32>
    %308 = math.tanh %302 : vector<8x128xf32>
    %309 = vector.extract_strided_slice %307 {offsets = [0, 0], sizes = [8, 32], strides = [1, 1]} : vector<8x128xf32> to vector<8x32xf32>
    %310 = vector.extract_strided_slice %307 {offsets = [0, 32], sizes = [8, 32], strides = [1, 1]} : vector<8x128xf32> to vector<8x32xf32>
    %311 = vector.extract_strided_slice %308 {offsets = [0, 64], sizes = [8, 32], strides = [1, 1]} : vector<8x128xf32> to vector<8x32xf32>
    %312 = vector.extract_strided_slice %307 {offsets = [0, 96], sizes = [8, 32], strides = [1, 1]} : vector<8x128xf32> to vector<8x32xf32>
    %313 = arith.mulf %310, %274 : vector<8x32xf32>
    %314 = arith.mulf %309, %311 : vector<8x32xf32>
    %315 = arith.addf %313, %314 : vector<8x32xf32>
    %316 = math.tanh %315 : vector<8x32xf32>
    %317 = arith.mulf %312, %316 : vector<8x32xf32>
    %318 = arith.truncf %295 : vector<8x32xf32> to vector<8x32xbf16>
    %cst_62 = arith.constant dense<0.000000e+00> : vector<8x128xf32>
    %319 = tpu.matmul %318, %1, %cst_62 {dimension_numbers = #tpu.dot_dimension_numbers<[1], [0], [0], [1], [0, 0, 1, 1], [], []>} : vector<8x32xbf16>, vector<32x128xbf16>, vector<8x128xf32> -> vector<8x128xf32>
    %320 = arith.truncf %317 : vector<8x32xf32> to vector<8x32xbf16>
    %cst_63 = arith.constant dense<0.000000e+00> : vector<8x128xf32>
    %321 = tpu.matmul %320, %3, %cst_63 {dimension_numbers = #tpu.dot_dimension_numbers<[1], [0], [0], [1], [0, 0, 1, 1], [], []>} : vector<8x32xbf16>, vector<32x128xbf16>, vector<8x128xf32> -> vector<8x128xf32>
    %322 = arith.addf %319, %321 : vector<8x128xf32>
    %323 = vector.broadcast %5 : vector<1x128xf32> to vector<8x128xf32>
    %324 = arith.addf %322, %323 : vector<8x128xf32>
    %325 = arith.negf %324 : vector<8x128xf32>
    %326 = math.exp %325 : vector<8x128xf32>
    %cst_64 = arith.constant 1.000000e+00 : f32
    %327 = vector.broadcast %cst_64 : f32 to vector<8x128xf32>
    %328 = arith.addf %327, %326 : vector<8x128xf32>
    %329 = arith.divf %327, %328 : vector<8x128xf32>
    %330 = math.tanh %324 : vector<8x128xf32>
    %331 = vector.extract_strided_slice %329 {offsets = [0, 0], sizes = [8, 32], strides = [1, 1]} : vector<8x128xf32> to vector<8x32xf32>
    %332 = vector.extract_strided_slice %329 {offsets = [0, 32], sizes = [8, 32], strides = [1, 1]} : vector<8x128xf32> to vector<8x32xf32>
    %333 = vector.extract_strided_slice %330 {offsets = [0, 64], sizes = [8, 32], strides = [1, 1]} : vector<8x128xf32> to vector<8x32xf32>
    %334 = vector.extract_strided_slice %329 {offsets = [0, 96], sizes = [8, 32], strides = [1, 1]} : vector<8x128xf32> to vector<8x32xf32>
    %335 = arith.mulf %332, %315 : vector<8x32xf32>
    %336 = arith.mulf %331, %333 : vector<8x32xf32>
    %337 = arith.addf %335, %336 : vector<8x32xf32>
    %338 = math.tanh %337 : vector<8x32xf32>
    %339 = arith.mulf %334, %338 : vector<8x32xf32>
    %cst_65 = arith.constant 0.000000e+00 : f32
    %340 = vector.broadcast %cst_65 : f32 to vector<8x64xf32>
    %c0_66 = arith.constant 0 : index
    %c0_67 = arith.constant 0 : index
    %341 = vector.load %arg17[%c0_66, %c0_67] : memref<8x64xf32, #tpu.memory_space<vmem>>, vector<8x64xf32>
    tpu.vector_store %arg17[%c0_66, %c0_67], %340 {strides = array<i32>} : memref<8x64xf32, #tpu.memory_space<vmem>>, vector<8x64xf32>,
    %342 = vector.extract_strided_slice %295 {offsets = [0, 0], sizes = [1, 32], strides = [1, 1]} : vector<8x32xf32> to vector<1x32xf32>
    %c0_68 = arith.constant 0 : index
    %c0_69 = arith.constant 0 : index
    %343 = vector.load %arg17[%c0_68, %c0_69] : memref<8x64xf32, #tpu.memory_space<vmem>>, vector<1x32xf32>
    tpu.vector_store %arg17[%c0_68, %c0_69], %342 {strides = array<i32>} : memref<8x64xf32, #tpu.memory_space<vmem>>, vector<1x32xf32>,
    %344 = vector.extract_strided_slice %295 {offsets = [1, 0], sizes = [1, 32], strides = [1, 1]} : vector<8x32xf32> to vector<1x32xf32>
    %c0_70 = arith.constant 0 : index
    %c32_71 = arith.constant 32 : index
    %345 = vector.load %arg17[%c0_70, %c32_71] : memref<8x64xf32, #tpu.memory_space<vmem>>, vector<1x32xf32>
    tpu.vector_store %arg17[%c0_70, %c32_71], %344 {strides = array<i32>} : memref<8x64xf32, #tpu.memory_space<vmem>>, vector<1x32xf32>,
    %346 = vector.extract_strided_slice %339 {offsets = [0, 0], sizes = [1, 32], strides = [1, 1]} : vector<8x32xf32> to vector<1x32xf32>
    %c1 = arith.constant 1 : index
    %c0_72 = arith.constant 0 : index
    %347 = vector.load %arg17[%c1, %c0_72] : memref<8x64xf32, #tpu.memory_space<vmem>>, vector<1x32xf32>
    tpu.vector_store %arg17[%c1, %c0_72], %346 {strides = array<i32>} : memref<8x64xf32, #tpu.memory_space<vmem>>, vector<1x32xf32>,
    %348 = vector.extract_strided_slice %339 {offsets = [1, 0], sizes = [1, 32], strides = [1, 1]} : vector<8x32xf32> to vector<1x32xf32>
    %c1_73 = arith.constant 1 : index
    %c32_74 = arith.constant 32 : index
    %349 = vector.load %arg17[%c1_73, %c32_74] : memref<8x64xf32, #tpu.memory_space<vmem>>, vector<1x32xf32>
    tpu.vector_store %arg17[%c1_73, %c32_74], %348 {strides = array<i32>} : memref<8x64xf32, #tpu.memory_space<vmem>>, vector<1x32xf32>,
    %c0_75 = arith.constant 0 : index
    %c0_76 = arith.constant 0 : index
    %350 = vector.load %arg17[%c0_75, %c0_76] : memref<8x64xf32, #tpu.memory_space<vmem>>, vector<8x64xf32>
    %cst_77 = arith.constant 0.000000e+00 : f32
    %351 = vector.broadcast %cst_77 : f32 to vector<8x64xf32>
    %352 = arith.maximumf %350, %351 : vector<8x64xf32>
    %353 = arith.truncf %352 : vector<8x64xf32> to vector<8x64xbf16>
    %c0_78 = arith.constant 0 : index
    %c0_79 = arith.constant 0 : index
    %354 = vector.load %arg7[%c0_78, %c0_79] : memref<64x512xbf16, #tpu.memory_space<vmem>>, vector<64x512xbf16>
    %cst_80 = arith.constant dense<0.000000e+00> : vector<8x512xf32>
    %355 = tpu.matmul %353, %354, %cst_80 {dimension_numbers = #tpu.dot_dimension_numbers<[1], [0], [0], [1], [0, 0, 1, 1], [], []>} : vector<8x64xbf16>, vector<64x512xbf16>, vector<8x512xf32> -> vector<8x512xf32>
    %c0_81 = arith.constant 0 : index
    %c0_82 = arith.constant 0 : index
    %356 = vector.load %arg8[%c0_81, %c0_82] : memref<1x512xf32, #tpu.memory_space<vmem>>, vector<1x512xf32>
    %357 = vector.broadcast %356 : vector<1x512xf32> to vector<8x512xf32>
    %358 = arith.addf %355, %357 : vector<8x512xf32>
    %cst_83 = arith.constant 0.000000e+00 : f32
    %359 = vector.broadcast %cst_83 : f32 to vector<8x512xf32>
    %360 = arith.maximumf %358, %359 : vector<8x512xf32>
    %361 = arith.truncf %360 : vector<8x512xf32> to vector<8x512xbf16>
    %c0_84 = arith.constant 0 : index
    %c0_85 = arith.constant 0 : index
    %362 = vector.load %arg9[%c0_84, %c0_85] : memref<512x64xbf16, #tpu.memory_space<vmem>>, vector<512x64xbf16>
    %cst_86 = arith.constant dense<0.000000e+00> : vector<8x64xf32>
    %363 = tpu.matmul %361, %362, %cst_86 {dimension_numbers = #tpu.dot_dimension_numbers<[1], [0], [0], [1], [0, 0, 1, 1], [], []>} : vector<8x512xbf16>, vector<512x64xbf16>, vector<8x64xf32> -> vector<8x64xf32>
    %c0_87 = arith.constant 0 : index
    %c0_88 = arith.constant 0 : index
    %364 = vector.load %arg10[%c0_87, %c0_88] : memref<1x64xf32, #tpu.memory_space<vmem>>, vector<1x64xf32>
    %365 = vector.broadcast %364 : vector<1x64xf32> to vector<8x64xf32>
    %366 = arith.addf %363, %365 : vector<8x64xf32>
    %cst_89 = arith.constant 0.000000e+00 : f32
    %367 = vector.broadcast %cst_89 : f32 to vector<8x64xf32>
    %368 = arith.maximumf %366, %367 : vector<8x64xf32>
    %369 = arith.truncf %368 : vector<8x64xf32> to vector<8x64xbf16>
    %c0_90 = arith.constant 0 : index
    %c0_91 = arith.constant 0 : index
    %370 = vector.load %arg11[%c0_90, %c0_91] : memref<64x256xbf16, #tpu.memory_space<vmem>>, vector<64x256xbf16>
    %cst_92 = arith.constant dense<0.000000e+00> : vector<8x256xf32>
    %371 = tpu.matmul %369, %370, %cst_92 {dimension_numbers = #tpu.dot_dimension_numbers<[1], [0], [0], [1], [0, 0, 1, 1], [], []>} : vector<8x64xbf16>, vector<64x256xbf16>, vector<8x256xf32> -> vector<8x256xf32>
    %c0_93 = arith.constant 0 : index
    %c0_94 = arith.constant 0 : index
    %372 = vector.load %arg12[%c0_93, %c0_94] : memref<1x256xf32, #tpu.memory_space<vmem>>, vector<1x256xf32>
    %373 = vector.broadcast %372 : vector<1x256xf32> to vector<8x256xf32>
    %374 = arith.addf %371, %373 : vector<8x256xf32>
    %cst_95 = arith.constant 0.000000e+00 : f32
    %375 = vector.broadcast %cst_95 : f32 to vector<8x256xf32>
    %376 = arith.maximumf %374, %375 : vector<8x256xf32>
    %377 = arith.truncf %376 : vector<8x256xf32> to vector<8x256xbf16>
    %c0_96 = arith.constant 0 : index
    %c0_97 = arith.constant 0 : index
    %378 = vector.load %arg13[%c0_96, %c0_97] : memref<256x128xbf16, #tpu.memory_space<vmem>>, vector<256x128xbf16>
    %cst_98 = arith.constant dense<0.000000e+00> : vector<8x128xf32>
    %379 = tpu.matmul %377, %378, %cst_98 {dimension_numbers = #tpu.dot_dimension_numbers<[1], [0], [0], [1], [0, 0, 1, 1], [], []>} : vector<8x256xbf16>, vector<256x128xbf16>, vector<8x128xf32> -> vector<8x128xf32>
    %c0_99 = arith.constant 0 : index
    %c0_100 = arith.constant 0 : index
    %380 = vector.load %arg14[%c0_99, %c0_100] : memref<1x128xf32, #tpu.memory_space<vmem>>, vector<1x128xf32>
    %381 = vector.broadcast %380 : vector<1x128xf32> to vector<8x128xf32>
    %382 = arith.addf %379, %381 : vector<8x128xf32>
    %c0_101 = arith.constant 0 : index
    %c0_102 = arith.constant 0 : index
    %383 = vector.load %arg15[%c0_101, %c0_102] : memref<8x128xf32, #tpu.memory_space<vmem>>, vector<8x128xf32>
    tpu.vector_store %arg15[%c0_101, %c0_102], %382 {strides = array<i32>} : memref<8x128xf32, #tpu.memory_space<vmem>>, vector<8x128xf32>,
    return
  }
}

</mosaic_0001>

<llo_original>
// kernel: model_forward.1
$region0: #{model_forward.1}
  #allocation0 [shape = 'u32[]', space=smem, size = 0x4, offset = 0x4, fixed_abs, tag = 'smem constant byte address 0x4 - core index']
  #allocation1 [shape = 'u32[144,128]{1,0:T(1,128)}', space=vmem, size = 0x12000, scoped, tag = 'internal scratch']
  #allocation2 [shape = 'f32[64,128]{1,0:T(8,128)}', space=vmem, size = 0x8000, scoped, tag = 'scratch operand']
  #allocation3 [shape = 'f32[8,64]{1,0:T(8,128)}', space=vmem, size = 0x1000, scoped, tag = 'scratch operand']
  %s0 = inlined_call_operand.vmem [shape: bf16[64,4], index: 0, kind: input, shape index: {}]
  %s1 = inlined_call_operand.vmem [shape: bf16[4,128], index: 1, kind: input, shape index: {}]
  %s2 = inlined_call_operand.vmem [shape: bf16[32,128], index: 2, kind: input, shape index: {}]
  %s3 = inlined_call_operand.vmem [shape: f32[1,128], index: 3, kind: input, shape index: {}]
  %s4 = inlined_call_operand.vmem [shape: bf16[32,128], index: 4, kind: input, shape index: {}]
  %s5 = inlined_call_operand.vmem [shape: bf16[32,128], index: 5, kind: input, shape index: {}]
  %s6 = inlined_call_operand.vmem [shape: f32[1,128], index: 6, kind: input, shape index: {}]
  %s7 = inlined_call_operand.vmem [shape: bf16[64,512], index: 7, kind: input, shape index: {}]
  %s8 = inlined_call_operand.vmem [shape: f32[1,512], index: 8, kind: input, shape index: {}]
  %s9 = inlined_call_operand.vmem [shape: bf16[512,64], index: 9, kind: input, shape index: {}]
  %s10 = inlined_call_operand.vmem [shape: f32[1,64], index: 10, kind: input, shape index: {}]
  %s11 = inlined_call_operand.vmem [shape: bf16[64,256], index: 11, kind: input, shape index: {}]
  %s12 = inlined_call_operand.vmem [shape: f32[1,256], index: 12, kind: input, shape index: {}]
  %s13 = inlined_call_operand.vmem [shape: bf16[256,128], index: 13, kind: input, shape index: {}]
  %s14 = inlined_call_operand.vmem [shape: f32[1,128], index: 14, kind: input, shape index: {}]
  %s15 = inlined_call_operand.vmem [shape: f32[8,128], index: 15, kind: output, shape index: {}]
  %s16 = sld [smem:[#allocation0]]
  $region70: #{model_forward.1} parent=0
    _
  %s18 = ssub.s32 1, %s16
  %s19 = scalar_select 0, %s18, %s16
  // Predicated region
  $region2: #{model_forward.1} parent=0 // pred_check
    _
  $region3: #{model_forward.1} parent=0 // pred_check_branch
    %21 = sbr.rel (0) target = $region5
  $region4: #{model_forward.1} parent=0 // pred_region
    _
  $region5: #{model_forward.1} parent=0 // pred_fallthru
    _
  // Predicated region
  $region6: #{model_forward.1} parent=0 // pred_check
    _
  $region7: #{model_forward.1} parent=0 // pred_check_branch
    %23 = sbr.rel (0) target = $region9
  $region8: #{model_forward.1} parent=0 // pred_region
    _
  $region9: #{model_forward.1} parent=0 // pred_fallthru
    _
  // Predicated region
  $region10: #{model_forward.1} parent=0 // pred_check
    _
  $region11: #{model_forward.1} parent=0 // pred_check_branch
    %25 = sbr.rel (0) target = $region13
  $region12: #{model_forward.1} parent=0 // pred_region
    _
  $region13: #{model_forward.1} parent=0 // pred_fallthru
    _
  // Predicated region
  $region14: #{model_forward.1} parent=0 // pred_check
    _
  $region15: #{model_forward.1} parent=0 // pred_check_branch
    %27 = sbr.rel (0) target = $region17
  $region16: #{model_forward.1} parent=0 // pred_region
    _
  $region17: #{model_forward.1} parent=0 // pred_fallthru
    _
  // Predicated region
  $region18: #{model_forward.1} parent=0 // pred_check
    _
  $region19: #{model_forward.1} parent=0 // pred_check_branch
    %29 = sbr.rel (0) target = $region21
  $region20: #{model_forward.1} parent=0 // pred_region
    _
  $region21: #{model_forward.1} parent=0 // pred_fallthru
    _
  // Predicated region
  $region22: #{model_forward.1} parent=0 // pred_check
    _
  $region23: #{model_forward.1} parent=0 // pred_check_branch
    %31 = sbr.rel (0) target = $region25
  $region24: #{model_forward.1} parent=0 // pred_region
    _
  $region25: #{model_forward.1} parent=0 // pred_fallthru
    _
  // Predicated region
  $region26: #{model_forward.1} parent=0 // pred_check
    _
  $region27: #{model_forward.1} parent=0 // pred_check_branch
    %33 = sbr.rel (0) target = $region29
  $region28: #{model_forward.1} parent=0 // pred_region
    _
  $region29: #{model_forward.1} parent=0 // pred_fallthru
    _
  // Predicated region
  $region30: #{model_forward.1} parent=0 // pred_check
    _
  $region31: #{model_forward.1} parent=0 // pred_check_branch
    %35 = sbr.rel (0) target = $region33
  $region32: #{model_forward.1} parent=0 // pred_region
    _
  $region33: #{model_forward.1} parent=0 // pred_fallthru
    _
  // Predicated region
  $region34: #{model_forward.1} parent=0 // pred_check
    _
  $region35: #{model_forward.1} parent=0 // pred_check_branch
    %37 = sbr.rel (0) target = $region37
  $region36: #{model_forward.1} parent=0 // pred_region
    _
  $region37: #{model_forward.1} parent=0 // pred_fallthru
    _
  // Predicated region
  $region38: #{model_forward.1} parent=0 // pred_check
    _
  $region39: #{model_forward.1} parent=0 // pred_check_branch
    %39 = sbr.rel (0) target = $region41
  $region40: #{model_forward.1} parent=0 // pred_region
    _
  $region41: #{model_forward.1} parent=0 // pred_fallthru
    _
  // Predicated region
  $region42: #{model_forward.1} parent=0 // pred_check
    _
  $region43: #{model_forward.1} parent=0 // pred_check_branch
    %41 = sbr.rel (0) target = $region45
  $region44: #{model_forward.1} parent=0 // pred_region
    _
  $region45: #{model_forward.1} parent=0 // pred_fallthru
    _
  // Predicated region
  $region46: #{model_forward.1} parent=0 // pred_check
    _
  $region47: #{model_forward.1} parent=0 // pred_check_branch
    %43 = sbr.rel (0) target = $region49
  $region48: #{model_forward.1} parent=0 // pred_region
    _
  $region49: #{model_forward.1} parent=0 // pred_fallthru
    _
  // Predicated region
  $region50: #{model_forward.1} parent=0 // pred_check
    _
  $region51: #{model_forward.1} parent=0 // pred_check_branch
    %45 = sbr.rel (0) target = $region53
  $region52: #{model_forward.1} parent=0 // pred_region
    _
  $region53: #{model_forward.1} parent=0 // pred_fallthru
    _
  // Predicated region
  $region54: #{model_forward.1} parent=0 // pred_check
    _
  $region55: #{model_forward.1} parent=0 // pred_check_branch
    %47 = sbr.rel (0) target = $region57
  $region56: #{model_forward.1} parent=0 // pred_region
    _
  $region57: #{model_forward.1} parent=0 // pred_fallthru
    _
  // Predicated region
  $region58: #{model_forward.1} parent=0 // pred_check
    _
  $region59: #{model_forward.1} parent=0 // pred_check_branch
    %49 = sbr.rel (0) target = $region61
  $region60: #{model_forward.1} parent=0 // pred_region
    _
  $region61: #{model_forward.1} parent=0 // pred_fallthru
    _
  %v51 = vld [vmem:[%s1] sm:$0x3]
  %v52 = vld [vmem:[%s4] sm:$0xf]
  %v53 = vld [vmem:[%s4 + $0x4] sm:$0xf]
  %v54 = vld [vmem:[%s4 + $0x8] sm:$0xf]
  %v55 = vld [vmem:[%s4 + $0xc] sm:$0xf]
  %v56 = vld [vmem:[%s2] sm:$0xf]
  %v57 = vld [vmem:[%s2 + $0x4] sm:$0xf]
  %v58 = vld [vmem:[%s2 + $0x8] sm:$0xf]
  %v59 = vld [vmem:[%s2 + $0xc] sm:$0xf]
  %v60 = vld [vmem:[%s5] sm:$0xf]
  %v61 = vld [vmem:[%s5 + $0x4] sm:$0xf]
  %v62 = vld [vmem:[%s5 + $0x8] sm:$0xf]
  %v63 = vld [vmem:[%s5 + $0xc] sm:$0xf]
  %v64 = vld [vmem:[%s3] sm:$0x1]
  %v65 = vld [vmem:[%s6] sm:$0x1]
  %v66 = vld [vmem:[%s0] sm:$0xf]
  %v67 = vld [vmem:[%s0 + $0x4] sm:$0xf]
  %v68 = vld [vmem:[%s0 + $0x8] sm:$0xf]
  %v69 = vld [vmem:[%s0 + $0xc] sm:$0xf]
  %v70 = vld [vmem:[%s0 + $0x10] sm:$0xf]
  %v71 = vld [vmem:[%s0 + $0x14] sm:$0xf]
  %v72 = vld [vmem:[%s0 + $0x18] sm:$0xf]
  %v73 = vld [vmem:[%s0 + $0x1c] sm:$0xf]
  %v75 = vlaneseq
  %v76 = vshrl.u32 %v75, 7
  %v77 = vsub.s32 0, %v76
  %v78 = vrot.slane %v64, %v77
  %v88 = vunpack.c.l.b16 %v66
  %v89 = vunpack.c.l.b16 %v67
  %v90 = vunpack.c.l.b16 %v68
  %v91 = vunpack.c.l.b16 %v69
  %v92 = vunpack.c.l.b16 %v70
  %v93 = vunpack.c.l.b16 %v71
  %v94 = vunpack.c.l.b16 %v72
  %v95 = vunpack.c.l.b16 %v73
  %v96 = vpack.c.b16 %v89, %v88
  %v97 = vpack.c.b16 %v91, %v90
  %v98 = vpack.c.b16 %v93, %v92
  %v99 = vpack.c.b16 %v95, %v94
  %vm100 = vcmask 31744
  %v102 = vsel %vm100, %v96, 0
  %v105 = vsel %vm100, %v97, 0
  %v108 = vsel %vm100, %v98, 0
  %v111 = vsel %vm100, %v99, 0
  %vm113 = vcmask 1041408
  %v115 = vsel %vm113, %v51, 0
  %117 = vmatprep.subr.bf16.mxu0 0
  %118 = vmatpush1.bf16.msra.mxu0 %v115
  %119 = vmatprep.subr.bf16.mxu0 0
  %120 = vmatpush1.bf16.msra.mxu0 0
  %121 = vmatprep.subr.bf16.mxu0 0
  %122 = vmatpush1.bf16.msra.mxu0 0
  %123 = vmatprep.subr.bf16.mxu0 0
  %124 = vmatpush1.bf16.msra.mxu0 0
  %125 = vmatprep.subr.bf16.mxu0 0
  %126 = vmatpush1.bf16.msra.mxu0 0
  %127 = vmatprep.subr.bf16.mxu0 0
  %128 = vmatpush1.bf16.msra.mxu0 0
  %129 = vmatprep.subr.bf16.mxu0 0
  %130 = vmatpush1.bf16.msra.mxu0 0
  %131 = vmatprep.subr.bf16.mxu0 0
  %132 = vmatpush1.bf16.msra.mxu0 0
  %133 = vmatprep.subr.bf16.mxu0 0
  %134 = vmatpush1.bf16.msra.mxu0 0
  %135 = vmatprep.subr.bf16.mxu0 0
  %136 = vmatpush1.bf16.msra.mxu0 0
  %137 = vmatprep.subr.bf16.mxu0 0
  %138 = vmatpush1.bf16.msra.mxu0 0
  %139 = vmatprep.subr.bf16.mxu0 0
  %140 = vmatpush1.bf16.msra.mxu0 0
  %141 = vmatprep.subr.bf16.mxu0 0
  %142 = vmatpush1.bf16.msra.mxu0 0
  %143 = vmatprep.subr.bf16.mxu0 0
  %144 = vmatpush1.bf16.msra.mxu0 0
  %145 = vmatprep.subr.bf16.mxu0 0
  %146 = vmatpush1.bf16.msra.mxu0 0
  %147 = vmatprep.subr.bf16.mxu0 0
  %148 = vmatpush1.bf16.msra.mxu0 0
  %149 = vmatprep.mubr.bf16.mxu0 0
  %150 = vmatmul.mubr.bf16.gmra.mrb[0].mxu0 %v102
  %v151 = vpop.f32.mrb[0].mxu0
  %v152 = vadd.f32 %v78, %v151
  %v153 = vpop.f32.mrb[0].mxu0
  %v154 = vpop.f32.mrb[0].mxu0
  %v155 = vadd.f32 %v78, %v154
  %v156 = vpop.f32.mrb[0].mxu0
  %157 = vmatprep.mubr.bf16.mxu0 0
  %158 = vmatmul.mubr.bf16.gmra.mrb[0].mxu0 %v105
  %v159 = vpop.f32.mrb[0].mxu0
  %v160 = vadd.f32 %v78, %v159
  %v161 = vpop.f32.mrb[0].mxu0
  %v162 = vpop.f32.mrb[0].mxu0
  %v163 = vadd.f32 %v78, %v162
  %v164 = vpop.f32.mrb[0].mxu0
  %165 = vmatprep.mubr.bf16.mxu0 0
  %166 = vmatmul.mubr.bf16.gmra.mrb[0].mxu0 %v108
  %v167 = vpop.f32.mrb[0].mxu0
  %v168 = vadd.f32 %v78, %v167
  %v169 = vpop.f32.mrb[0].mxu0
  %v170 = vpop.f32.mrb[0].mxu0
  %v171 = vadd.f32 %v78, %v170
  %v172 = vpop.f32.mrb[0].mxu0
  %173 = vmatprep.mubr.bf16.mxu0 0
  %174 = vmatmul.mubr.bf16.gmra.mrb[0].mxu0 %v111
  %v175 = vpop.f32.mrb[0].mxu0
  %v176 = vadd.f32 %v78, %v175
  %v177 = vpop.f32.mrb[0].mxu0
  %v178 = vpop.f32.mrb[0].mxu0
  %v179 = vadd.f32 %v78, %v178
  %v180 = vpop.f32.mrb[0].mxu0
  %181 = vdwg.mxu0
  %182 = vst [vmem:[#allocation2] sm:$0xff] %v152
  %183 = vst [vmem:[#allocation2 + $0x8] sm:$0xff] %v155
  %184 = vst [vmem:[#allocation2 + $0x10] sm:$0xff] %v160
  %185 = vst [vmem:[#allocation2 + $0x18] sm:$0xff] %v163
  %186 = vst [vmem:[#allocation2 + $0x20] sm:$0xff] %v168
  %187 = vst [vmem:[#allocation2 + $0x28] sm:$0xff] %v171
  %188 = vst [vmem:[#allocation2 + $0x30] sm:$0xff] %v176
  %189 = vst [vmem:[#allocation2 + $0x38] sm:$0xff] %v179
  %v190 = vld [vmem:[#allocation2] sm:$0xff]
  %v195 = vunpack.c.l.b16 %v56
  %v196 = vunpack.c.l.b16 %v57
  %v197 = vunpack.c.l.b16 %v58
  %v198 = vunpack.c.l.b16 %v59
  %v199 = vpack.c.b16 %v196, %v195
  %v200 = vpack.c.b16 %v198, %v197
  %vm203 = vcmask 261120
  %v205 = vsel %vm203, 0, 0
  %207 = vmatprep.subr.bf16.mxu0 0
  %208 = vmatpush1.bf16.msra.mxu0 %v199
  %209 = vmatprep.subr.bf16.mxu0 0
  %210 = vmatpush1.bf16.msra.mxu0 %v200
  %211 = vmatprep.subr.bf16.mxu0 0
  %212 = vmatpush1.bf16.msra.mxu0 0
  %213 = vmatprep.subr.bf16.mxu0 0
  %214 = vmatpush1.bf16.msra.mxu0 0
  %215 = vmatprep.subr.bf16.mxu0 0
  %216 = vmatpush1.bf16.msra.mxu0 0
  %217 = vmatprep.subr.bf16.mxu0 0
  %218 = vmatpush1.bf16.msra.mxu0 0
  %219 = vmatprep.subr.bf16.mxu0 0
  %220 = vmatpush1.bf16.msra.mxu0 0
  %221 = vmatprep.subr.bf16.mxu0 0
  %222 = vmatpush1.bf16.msra.mxu0 0
  %223 = vmatprep.subr.bf16.mxu0 0
  %224 = vmatpush1.bf16.msra.mxu0 0
  %225 = vmatprep.subr.bf16.mxu0 0
  %226 = vmatpush1.bf16.msra.mxu0 0
  %227 = vmatprep.subr.bf16.mxu0 0
  %228 = vmatpush1.bf16.msra.mxu0 0
  %229 = vmatprep.subr.bf16.mxu0 0
  %230 = vmatpush1.bf16.msra.mxu0 0
  %231 = vmatprep.subr.bf16.mxu0 0
  %232 = vmatpush1.bf16.msra.mxu0 0
  %233 = vmatprep.subr.bf16.mxu0 0
  %234 = vmatpush1.bf16.msra.mxu0 0
  %235 = vmatprep.subr.bf16.mxu0 0
  %236 = vmatpush1.bf16.msra.mxu0 0
  %237 = vmatprep.subr.bf16.mxu0 0
  %238 = vmatpush1.bf16.msra.mxu0 0
  %239 = vmatprep.mubr.bf16.mxu0 0
  %240 = vmatmul.mubr.bf16.gmra.mrb[0].mxu0 %v205
  %v241 = vpop.f32.mrb[0].mxu0
  %v242 = vadd.f32 0.0, %v241
  %v243 = vpop.f32.mrb[0].mxu0
  %v244 = vpop.f32.mrb[0].mxu0
  %v245 = vpop.f32.mrb[0].mxu0
  %246 = vdwg.mxu0
  %v247 = vadd.f32 %v190, %v242
  %v248 = vxor.u32 %v247, 2147483648
  %v249 = vmul.f32 %v248, 1.442695
  %v250 = vpow.pop %v249
  %v251 = vadd.f32 %v250, 1.0
  %v252 = vrcp.pop %v251
  %v253 = vmul.f32 1.0, %v252
  %v254 = vtanh.pop %v247
  %v255 = vmul.f32 %v253, 0.0
  %257 = vrot.lane.b32.xlu0 %v254, 64
  %v258 = vpop.permute.xlu0 %257
  %v260 = vmul.f32 %v253, %v258
  %262 = vrot.lane.b32.xlu0 %v260, 32
  %v263 = vpop.permute.xlu0 %262
  %v265 = vadd.f32 %v255, %v263
  %v266 = vtanh.pop %v265
  %268 = vrot.lane.b32.xlu0 %v266, 64
  %v269 = vpop.permute.xlu0 %268
  %v271 = vmul.f32 %v253, %v269
  %v272 = vld [vmem:[#allocation2 + $0x8] sm:$0xff]
  %v273 = vpack.c.bf16 %v271, %v271
  %275 = vrot.lane.b32.xlu0 %v273, 32
  %v276 = vpop.permute.xlu0 %275
  %v278 = vsel %vm203, %v276, 0
  %280 = vmatprep.subr.bf16.mxu0 0
  %281 = vmatpush1.bf16.msra.mxu0 %v199
  %282 = vmatprep.subr.bf16.mxu0 0
  %283 = vmatpush1.bf16.msra.mxu0 %v200
  %284 = vmatprep.subr.bf16.mxu0 0
  %285 = vmatpush1.bf16.msra.mxu0 0
  %286 = vmatprep.subr.bf16.mxu0 0
  %287 = vmatpush1.bf16.msra.mxu0 0
  %288 = vmatprep.subr.bf16.mxu0 0
  %289 = vmatpush1.bf16.msra.mxu0 0
  %290 = vmatprep.subr.bf16.mxu0 0
  %291 = vmatpush1.bf16.msra.mxu0 0
  %292 = vmatprep.subr.bf16.mxu0 0
  %293 = vmatpush1.bf16.msra.mxu0 0
  %294 = vmatprep.subr.bf16.mxu0 0
  %295 = vmatpush1.bf16.msra.mxu0 0
  %296 = vmatprep.subr.bf16.mxu0 0
  %297 = vmatpush1.bf16.msra.mxu0 0
  %298 = vmatprep.subr.bf16.mxu0 0
  %299 = vmatpush1.bf16.msra.mxu0 0
  %300 = vmatprep.subr.bf16.mxu0 0
  %301 = vmatpush1.bf16.msra.mxu0 0
  %302 = vmatprep.subr.bf16.mxu0 0
  %303 = vmatpush1.bf16.msra.mxu0 0
  %304 = vmatprep.subr.bf16.mxu0 0
  %305 = vmatpush1.bf16.msra.mxu0 0
  %306 = vmatprep.subr.bf16.mxu0 0
  %307 = vmatpush1.bf16.msra.mxu0 0
  %308 = vmatprep.subr.bf16.mxu0 0
  %309 = vmatpush1.bf16.msra.mxu0 0
  %310 = vmatprep.subr.bf16.mxu0 0
  %311 = vmatpush1.bf16.msra.mxu0 0
  %312 = vmatprep.mubr.bf16.mxu0 0
  %313 = vmatmul.mubr.bf16.gmra.mrb[0].mxu0 %v278
  %v314 = vpop.f32.mrb[0].mxu0
  %v315 = vadd.f32 0.0, %v314
  %v316 = vpop.f32.mrb[0].mxu0
  %v317 = vpop.f32.mrb[0].mxu0
  %v318 = vpop.f32.mrb[0].mxu0
  %319 = vdwg.mxu0
  %v320 = vadd.f32 %v272, %v315
  %v321 = vxor.u32 %v320, 2147483648
  %v322 = vmul.f32 %v321, 1.442695
  %v323 = vpow.pop %v322
  %v324 = vadd.f32 %v323, 1.0
  %v325 = vrcp.pop %v324
  %v326 = vmul.f32 1.0, %v325
  %v327 = vtanh.pop %v320
  %v328 = vmul.f32 %v326, %v265
  %330 = vrot.lane.b32.xlu0 %v327, 64
  %v331 = vpop.permute.xlu0 %330
  %v333 = vmul.f32 %v326, %v331
  %335 = vrot.lane.b32.xlu0 %v333, 32
  %v336 = vpop.permute.xlu0 %335
  %v338 = vadd.f32 %v328, %v336
  %v339 = vtanh.pop %v338
  %341 = vrot.lane.b32.xlu0 %v339, 64
  %v342 = vpop.permute.xlu0 %341
  %v344 = vmul.f32 %v326, %v342
  %v349 = vunpack.c.l.b16 %v60
  %v350 = vunpack.c.l.b16 %v61
  %v351 = vunpack.c.l.b16 %v62
  %v352 = vunpack.c.l.b16 %v63
  %v353 = vpack.c.b16 %v350, %v349
  %v354 = vpack.c.b16 %v352, %v351
  %357 = vmatprep.subr.bf16.mxu0 0
  %358 = vmatpush1.bf16.msra.mxu0 %v353
  %359 = vmatprep.subr.bf16.mxu0 0
  %360 = vmatpush1.bf16.msra.mxu0 %v354
  %361 = vmatprep.subr.bf16.mxu0 0
  %362 = vmatpush1.bf16.msra.mxu0 0
  %363 = vmatprep.subr.bf16.mxu0 0
  %364 = vmatpush1.bf16.msra.mxu0 0
  %365 = vmatprep.subr.bf16.mxu0 0
  %366 = vmatpush1.bf16.msra.mxu0 0
  %367 = vmatprep.subr.bf16.mxu0 0
  %368 = vmatpush1.bf16.msra.mxu0 0
  %369 = vmatprep.subr.bf16.mxu0 0
  %370 = vmatpush1.bf16.msra.mxu0 0
  %371 = vmatprep.subr.bf16.mxu0 0
  %372 = vmatpush1.bf16.msra.mxu0 0
  %373 = vmatprep.subr.bf16.mxu0 0
  %374 = vmatpush1.bf16.msra.mxu0 0
  %375 = vmatprep.subr.bf16.mxu0 0
  %376 = vmatpush1.bf16.msra.mxu0 0
  %377 = vmatprep.subr.bf16.mxu0 0
  %378 = vmatpush1.bf16.msra.mxu0 0
  %379 = vmatprep.subr.bf16.mxu0 0
  %380 = vmatpush1.bf16.msra.mxu0 0
  %381 = vmatprep.subr.bf16.mxu0 0
  %382 = vmatpush1.bf16.msra.mxu0 0
  %383 = vmatprep.subr.bf16.mxu0 0
  %384 = vmatpush1.bf16.msra.mxu0 0
  %385 = vmatprep.subr.bf16.mxu0 0
  %386 = vmatpush1.bf16.msra.mxu0 0
  %387 = vmatprep.subr.bf16.mxu0 0
  %388 = vmatpush1.bf16.msra.mxu0 0
  %389 = vmatprep.mubr.bf16.mxu0 0
  %390 = vmatmul.mubr.bf16.gmra.mrb[0].mxu0 %v205
  %v391 = vpop.f32.mrb[0].mxu0
  %v392 = vadd.f32 0.0, %v391
  %v393 = vpop.f32.mrb[0].mxu0
  %v394 = vpop.f32.mrb[0].mxu0
  %v395 = vpop.f32.mrb[0].mxu0
  %396 = vdwg.mxu0
  %v401 = vunpack.c.l.b16 %v52
  %v402 = vunpack.c.l.b16 %v53
  %v403 = vunpack.c.l.b16 %v54
  %v404 = vunpack.c.l.b16 %v55
  %v405 = vpack.c.b16 %v402, %v401
  %v406 = vpack.c.b16 %v404, %v403
  %409 = vmatprep.subr.bf16.mxu0 0
  %410 = vmatpush1.bf16.msra.mxu0 %v405
  %411 = vmatprep.subr.bf16.mxu0 0
  %412 = vmatpush1.bf16.msra.mxu0 %v406
  %413 = vmatprep.subr.bf16.mxu0 0
  %414 = vmatpush1.bf16.msra.mxu0 0
  %415 = vmatprep.subr.bf16.mxu0 0
  %416 = vmatpush1.bf16.msra.mxu0 0
  %417 = vmatprep.subr.bf16.mxu0 0
  %418 = vmatpush1.bf16.msra.mxu0 0
  %419 = vmatprep.subr.bf16.mxu0 0
  %420 = vmatpush1.bf16.msra.mxu0 0
  %421 = vmatprep.subr.bf16.mxu0 0
  %422 = vmatpush1.bf16.msra.mxu0 0
  %423 = vmatprep.subr.bf16.mxu0 0
  %424 = vmatpush1.bf16.msra.mxu0 0
  %425 = vmatprep.subr.bf16.mxu0 0
  %426 = vmatpush1.bf16.msra.mxu0 0
  %427 = vmatprep.subr.bf16.mxu0 0
  %428 = vmatpush1.bf16.msra.mxu0 0
  %429 = vmatprep.subr.bf16.mxu0 0
  %430 = vmatpush1.bf16.msra.mxu0 0
  %431 = vmatprep.subr.bf16.mxu0 0
  %432 = vmatpush1.bf16.msra.mxu0 0
  %433 = vmatprep.subr.bf16.mxu0 0
  %434 = vmatpush1.bf16.msra.mxu0 0
  %435 = vmatprep.subr.bf16.mxu0 0
  %436 = vmatpush1.bf16.msra.mxu0 0
  %437 = vmatprep.subr.bf16.mxu0 0
  %438 = vmatpush1.bf16.msra.mxu0 0
  %439 = vmatprep.subr.bf16.mxu0 0
  %440 = vmatpush1.bf16.msra.mxu0 0
  %441 = vmatprep.mubr.bf16.mxu0 0
  %442 = vmatmul.mubr.bf16.gmra.mrb[0].mxu0 %v278
  %v443 = vpop.f32.mrb[0].mxu0
  %v444 = vadd.f32 %v392, %v443
  %v445 = vpop.f32.mrb[0].mxu0
  %v446 = vpop.f32.mrb[0].mxu0
  %v447 = vpop.f32.mrb[0].mxu0
  %448 = vdwg.mxu0
  %v450 = vlaneseq
  %v451 = vshrl.u32 %v450, 7
  %v452 = vsub.s32 0, %v451
  %v453 = vrot.slane %v65, %v452
  %v455 = vadd.f32 %v444, %v453
  %v456 = vxor.u32 %v455, 2147483648
  %v457 = vmul.f32 %v456, 1.442695
  %v458 = vpow.pop %v457
  %v459 = vadd.f32 %v458, 1.0
  %v460 = vrcp.pop %v459
  %v461 = vmul.f32 1.0, %v460
  %v462 = vtanh.pop %v455
  %v463 = vmul.f32 %v461, 0.0
  %465 = vrot.lane.b32.xlu0 %v462, 64
  %v466 = vpop.permute.xlu0 %465
  %v468 = vmul.f32 %v461, %v466
  %470 = vrot.lane.b32.xlu0 %v468, 32
  %v471 = vpop.permute.xlu0 %470
  %v473 = vadd.f32 %v463, %v471
  %v474 = vtanh.pop %v473
  %476 = vrot.lane.b32.xlu0 %v474, 64
  %v477 = vpop.permute.xlu0 %476
  %v479 = vmul.f32 %v461, %v477
  %v480 = vld [vmem:[#allocation2 + $0x10] sm:$0xff]
  %v481 = vpack.c.bf16 %v344, %v344
  %483 = vrot.lane.b32.xlu0 %v481, 32
  %v484 = vpop.permute.xlu0 %483
  %v486 = vsel %vm203, %v484, 0
  %488 = vmatprep.subr.bf16.mxu0 0
  %489 = vmatpush1.bf16.msra.mxu0 %v199
  %490 = vmatprep.subr.bf16.mxu0 0
  %491 = vmatpush1.bf16.msra.mxu0 %v200
  %492 = vmatprep.subr.bf16.mxu0 0
  %493 = vmatpush1.bf16.msra.mxu0 0
  %494 = vmatprep.subr.bf16.mxu0 0
  %495 = vmatpush1.bf16.msra.mxu0 0
  %496 = vmatprep.subr.bf16.mxu0 0
  %497 = vmatpush1.bf16.msra.mxu0 0
  %498 = vmatprep.subr.bf16.mxu0 0
  %499 = vmatpush1.bf16.msra.mxu0 0
  %500 = vmatprep.subr.bf16.mxu0 0
  %501 = vmatpush1.bf16.msra.mxu0 0
  %502 = vmatprep.subr.bf16.mxu0 0
  %503 = vmatpush1.bf16.msra.mxu0 0
  %504 = vmatprep.subr.bf16.mxu0 0
  %505 = vmatpush1.bf16.msra.mxu0 0
  %506 = vmatprep.subr.bf16.mxu0 0
  %507 = vmatpush1.bf16.msra.mxu0 0
  %508 = vmatprep.subr.bf16.mxu0 0
  %509 = vmatpush1.bf16.msra.mxu0 0
  %510 = vmatprep.subr.bf16.mxu0 0
  %511 = vmatpush1.bf16.msra.mxu0 0
  %512 = vmatprep.subr.bf16.mxu0 0
  %513 = vmatpush1.bf16.msra.mxu0 0
  %514 = vmatprep.subr.bf16.mxu0 0
  %515 = vmatpush1.bf16.msra.mxu0 0
  %516 = vmatprep.subr.bf16.mxu0 0
  %517 = vmatpush1.bf16.msra.mxu0 0
  %518 = vmatprep.subr.bf16.mxu0 0
  %519 = vmatpush1.bf16.msra.mxu0 0
  %520 = vmatprep.mubr.bf16.mxu0 0
  %521 = vmatmul.mubr.bf16.gmra.mrb[0].mxu0 %v486
  %v522 = vpop.f32.mrb[0].mxu0
  %v523 = vadd.f32 0.0, %v522
  %v524 = vpop.f32.mrb[0].mxu0
  %v525 = vpop.f32.mrb[0].mxu0
  %v526 = vpop.f32.mrb[0].mxu0
  %527 = vdwg.mxu0
  %v528 = vadd.f32 %v480, %v523
  %v529 = vxor.u32 %v528, 2147483648
  %v530 = vmul.f32 %v529, 1.442695
  %v531 = vpow.pop %v530
  %v532 = vadd.f32 %v531, 1.0
  %v533 = vrcp.pop %v532
  %v534 = vmul.f32 1.0, %v533
  %v535 = vtanh.pop %v528
  %v536 = vmul.f32 %v534, %v338
  %538 = vrot.lane.b32.xlu0 %v535, 64
  %v539 = vpop.permute.xlu0 %538
  %v541 = vmul.f32 %v534, %v539
  %543 = vrot.lane.b32.xlu0 %v541, 32
  %v544 = vpop.permute.xlu0 %543
  %v546 = vadd.f32 %v536, %v544
  %v547 = vtanh.pop %v546
  %549 = vrot.lane.b32.xlu0 %v547, 64
  %v550 = vpop.permute.xlu0 %549
  %v552 = vmul.f32 %v534, %v550
  %v553 = vpack.c.bf16 %v479, %v479
  %555 = vrot.lane.b32.xlu0 %v553, 32
  %v556 = vpop.permute.xlu0 %555
  %v558 = vsel %vm203, %v556, 0
  %560 = vmatprep.subr.bf16.mxu0 0
  %561 = vmatpush1.bf16.msra.mxu0 %v353
  %562 = vmatprep.subr.bf16.mxu0 0
  %563 = vmatpush1.bf16.msra.mxu0 %v354
  %564 = vmatprep.subr.bf16.mxu0 0
  %565 = vmatpush1.bf16.msra.mxu0 0
  %566 = vmatprep.subr.bf16.mxu0 0
  %567 = vmatpush1.bf16.msra.mxu0 0
  %568 = vmatprep.subr.bf16.mxu0 0
  %569 = vmatpush1.bf16.msra.mxu0 0
  %570 = vmatprep.subr.bf16.mxu0 0
  %571 = vmatpush1.bf16.msra.mxu0 0
  %572 = vmatprep.subr.bf16.mxu0 0
  %573 = vmatpush1.bf16.msra.mxu0 0
  %574 = vmatprep.subr.bf16.mxu0 0
  %575 = vmatpush1.bf16.msra.mxu0 0
  %576 = vmatprep.subr.bf16.mxu0 0
  %577 = vmatpush1.bf16.msra.mxu0 0
  %578 = vmatprep.subr.bf16.mxu0 0
  %579 = vmatpush1.bf16.msra.mxu0 0
  %580 = vmatprep.subr.bf16.mxu0 0
  %581 = vmatpush1.bf16.msra.mxu0 0
  %582 = vmatprep.subr.bf16.mxu0 0
  %583 = vmatpush1.bf16.msra.mxu0 0
  %584 = vmatprep.subr.bf16.mxu0 0
  %585 = vmatpush1.bf16.msra.mxu0 0
  %586 = vmatprep.subr.bf16.mxu0 0
  %587 = vmatpush1.bf16.msra.mxu0 0
  %588 = vmatprep.subr.bf16.mxu0 0
  %589 = vmatpush1.bf16.msra.mxu0 0
  %590 = vmatprep.subr.bf16.mxu0 0
  %591 = vmatpush1.bf16.msra.mxu0 0
  %592 = vmatprep.mubr.bf16.mxu0 0
  %593 = vmatmul.mubr.bf16.gmra.mrb[0].mxu0 %v558
  %v594 = vpop.f32.mrb[0].mxu0
  %v595 = vadd.f32 0.0, %v594
  %v596 = vpop.f32.mrb[0].mxu0
  %v597 = vpop.f32.mrb[0].mxu0
  %v598 = vpop.f32.mrb[0].mxu0
  %599 = vdwg.mxu0
  %600 = vmatprep.subr.bf16.mxu0 0
  %601 = vmatpush1.bf16.msra.mxu0 %v405
  %602 = vmatprep.subr.bf16.mxu0 0
  %603 = vmatpush1.bf16.msra.mxu0 %v406
  %604 = vmatprep.subr.bf16.mxu0 0
  %605 = vmatpush1.bf16.msra.mxu0 0
  %606 = vmatprep.subr.bf16.mxu0 0
  %607 = vmatpush1.bf16.msra.mxu0 0
  %608 = vmatprep.subr.bf16.mxu0 0
  %609 = vmatpush1.bf16.msra.mxu0 0
  %610 = vmatprep.subr.bf16.mxu0 0
  %611 = vmatpush1.bf16.msra.mxu0 0
  %612 = vmatprep.subr.bf16.mxu0 0
  %613 = vmatpush1.bf16.msra.mxu0 0
  %614 = vmatprep.subr.bf16.mxu0 0
  %615 = vmatpush1.bf16.msra.mxu0 0
  %616 = vmatprep.subr.bf16.mxu0 0
  %617 = vmatpush1.bf16.msra.mxu0 0
  %618 = vmatprep.subr.bf16.mxu0 0
  %619 = vmatpush1.bf16.msra.mxu0 0
  %620 = vmatprep.subr.bf16.mxu0 0
  %621 = vmatpush1.bf16.msra.mxu0 0
  %622 = vmatprep.subr.bf16.mxu0 0
  %623 = vmatpush1.bf16.msra.mxu0 0
  %624 = vmatprep.subr.bf16.mxu0 0
  %625 = vmatpush1.bf16.msra.mxu0 0
  %626 = vmatprep.subr.bf16.mxu0 0
  %627 = vmatpush1.bf16.msra.mxu0 0
  %628 = vmatprep.subr.bf16.mxu0 0
  %629 = vmatpush1.bf16.msra.mxu0 0
  %630 = vmatprep.subr.bf16.mxu0 0
  %631 = vmatpush1.bf16.msra.mxu0 0
  %632 = vmatprep.mubr.bf16.mxu0 0
  %633 = vmatmul.mubr.bf16.gmra.mrb[0].mxu0 %v486
  %v634 = vpop.f32.mrb[0].mxu0
  %v635 = vadd.f32 %v595, %v634
  %v636 = vpop.f32.mrb[0].mxu0
  %v637 = vpop.f32.mrb[0].mxu0
  %v638 = vpop.f32.mrb[0].mxu0
  %639 = vdwg.mxu0
  %v640 = vadd.f32 %v635, %v453
  %v641 = vxor.u32 %v640, 2147483648
  %v642 = vmul.f32 %v641, 1.442695
  %v643 = vpow.pop %v642
  %v644 = vadd.f32 %v643, 1.0
  %v645 = vrcp.pop %v644
  %v646 = vmul.f32 1.0, %v645
  %v647 = vtanh.pop %v640
  %v648 = vmul.f32 %v646, %v473
  %650 = vrot.lane.b32.xlu0 %v647, 64
  %v651 = vpop.permute.xlu0 %650
  %v653 = vmul.f32 %v646, %v651
  %655 = vrot.lane.b32.xlu0 %v653, 32
  %v656 = vpop.permute.xlu0 %655
  %v658 = vadd.f32 %v648, %v656
  %v659 = vtanh.pop %v658
  %661 = vrot.lane.b32.xlu0 %v659, 64
  %v662 = vpop.permute.xlu0 %661
  %v664 = vmul.f32 %v646, %v662
  %v665 = vld [vmem:[#allocation2 + $0x18] sm:$0xff]
  %v666 = vpack.c.bf16 %v552, %v552
  %668 = vrot.lane.b32.xlu0 %v666, 32
  %v669 = vpop.permute.xlu0 %668
  %v671 = vsel %vm203, %v669, 0
  %673 = vmatprep.subr.bf16.mxu0 0
  %674 = vmatpush1.bf16.msra.mxu0 %v199
  %675 = vmatprep.subr.bf16.mxu0 0
  %676 = vmatpush1.bf16.msra.mxu0 %v200
  %677 = vmatprep.subr.bf16.mxu0 0
  %678 = vmatpush1.bf16.msra.mxu0 0
  %679 = vmatprep.subr.bf16.mxu0 0
  %680 = vmatpush1.bf16.msra.mxu0 0
  %681 = vmatprep.subr.bf16.mxu0 0
  %682 = vmatpush1.bf16.msra.mxu0 0
  %683 = vmatprep.subr.bf16.mxu0 0
  %684 = vmatpush1.bf16.msra.mxu0 0
  %685 = vmatprep.subr.bf16.mxu0 0
  %686 = vmatpush1.bf16.msra.mxu0 0
  %687 = vmatprep.subr.bf16.mxu0 0
  %688 = vmatpush1.bf16.msra.mxu0 0
  %689 = vmatprep.subr.bf16.mxu0 0
  %690 = vmatpush1.bf16.msra.mxu0 0
  %691 = vmatprep.subr.bf16.mxu0 0
  %692 = vmatpush1.bf16.msra.mxu0 0
  %693 = vmatprep.subr.bf16.mxu0 0
  %694 = vmatpush1.bf16.msra.mxu0 0
  %695 = vmatprep.subr.bf16.mxu0 0
  %696 = vmatpush1.bf16.msra.mxu0 0
  %697 = vmatprep.subr.bf16.mxu0 0
  %698 = vmatpush1.bf16.msra.mxu0 0
  %699 = vmatprep.subr.bf16.mxu0 0
  %700 = vmatpush1.bf16.msra.mxu0 0
  %701 = vmatprep.subr.bf16.mxu0 0
  %702 = vmatpush1.bf16.msra.mxu0 0
  %703 = vmatprep.subr.bf16.mxu0 0
  %704 = vmatpush1.bf16.msra.mxu0 0
  %705 = vmatprep.mubr.bf16.mxu0 0
  %706 = vmatmul.mubr.bf16.gmra.mrb[0].mxu0 %v671
  %v707 = vpop.f32.mrb[0].mxu0
  %v708 = vadd.f32 0.0, %v707
  %v709 = vpop.f32.mrb[0].mxu0
  %v710 = vpop.f32.mrb[0].mxu0
  %v711 = vpop.f32.mrb[0].mxu0
  %712 = vdwg.mxu0
  %v713 = vadd.f32 %v665, %v708
  %v714 = vxor.u32 %v713, 2147483648
  %v715 = vmul.f32 %v714, 1.442695
  %v716 = vpow.pop %v715
  %v717 = vadd.f32 %v716, 1.0
  %v718 = vrcp.pop %v717
  %v719 = vmul.f32 1.0, %v718
  %v720 = vtanh.pop %v713
  %v721 = vmul.f32 %v719, %v546
  %723 = vrot.lane.b32.xlu0 %v720, 64
  %v724 = vpop.permute.xlu0 %723
  %v726 = vmul.f32 %v719, %v724
  %728 = vrot.lane.b32.xlu0 %v726, 32
  %v729 = vpop.permute.xlu0 %728
  %v731 = vadd.f32 %v721, %v729
  %v732 = vtanh.pop %v731
  %734 = vrot.lane.b32.xlu0 %v732, 64
  %v735 = vpop.permute.xlu0 %734
  %v737 = vmul.f32 %v719, %v735
  %v738 = vpack.c.bf16 %v664, %v664
  %740 = vrot.lane.b32.xlu0 %v738, 32
  %v741 = vpop.permute.xlu0 %740
  %v743 = vsel %vm203, %v741, 0
  %745 = vmatprep.subr.bf16.mxu0 0
  %746 = vmatpush1.bf16.msra.mxu0 %v353
  %747 = vmatprep.subr.bf16.mxu0 0
  %748 = vmatpush1.bf16.msra.mxu0 %v354
  %749 = vmatprep.subr.bf16.mxu0 0
  %750 = vmatpush1.bf16.msra.mxu0 0
  %751 = vmatprep.subr.bf16.mxu0 0
  %752 = vmatpush1.bf16.msra.mxu0 0
  %753 = vmatprep.subr.bf16.mxu0 0
  %754 = vmatpush1.bf16.msra.mxu0 0
  %755 = vmatprep.subr.bf16.mxu0 0
  %756 = vmatpush1.bf16.msra.mxu0 0
  %757 = vmatprep.subr.bf16.mxu0 0
  %758 = vmatpush1.bf16.msra.mxu0 0
  %759 = vmatprep.subr.bf16.mxu0 0
  %760 = vmatpush1.bf16.msra.mxu0 0
  %761 = vmatprep.subr.bf16.mxu0 0
  %762 = vmatpush1.bf16.msra.mxu0 0
  %763 = vmatprep.subr.bf16.mxu0 0
  %764 = vmatpush1.bf16.msra.mxu0 0
  %765 = vmatprep.subr.bf16.mxu0 0
  %766 = vmatpush1.bf16.msra.mxu0 0
  %767 = vmatprep.subr.bf16.mxu0 0
  %768 = vmatpush1.bf16.msra.mxu0 0
  %769 = vmatprep.subr.bf16.mxu0 0
  %770 = vmatpush1.bf16.msra.mxu0 0
  %771 = vmatprep.subr.bf16.mxu0 0
  %772 = vmatpush1.bf16.msra.mxu0 0
  %773 = vmatprep.subr.bf16.mxu0 0
  %774 = vmatpush1.bf16.msra.mxu0 0
  %775 = vmatprep.subr.bf16.mxu0 0
  %776 = vmatpush1.bf16.msra.mxu0 0
  %777 = vmatprep.mubr.bf16.mxu0 0
  %778 = vmatmul.mubr.bf16.gmra.mrb[0].mxu0 %v743
  %v779 = vpop.f32.mrb[0].mxu0
  %v780 = vadd.f32 0.0, %v779
  %v781 = vpop.f32.mrb[0].mxu0
  %v782 = vpop.f32.mrb[0].mxu0
  %v783 = vpop.f32.mrb[0].mxu0
  %784 = vdwg.mxu0
  %785 = vmatprep.subr.bf16.mxu0 0
  %786 = vmatpush1.bf16.msra.mxu0 %v405
  %787 = vmatprep.subr.bf16.mxu0 0
  %788 = vmatpush1.bf16.msra.mxu0 %v406
  %789 = vmatprep.subr.bf16.mxu0 0
  %790 = vmatpush1.bf16.msra.mxu0 0
  %791 = vmatprep.subr.bf16.mxu0 0
  %792 = vmatpush1.bf16.msra.mxu0 0
  %793 = vmatprep.subr.bf16.mxu0 0
  %794 = vmatpush1.bf16.msra.mxu0 0
  %795 = vmatprep.subr.bf16.mxu0 0
  %796 = vmatpush1.bf16.msra.mxu0 0
  %797 = vmatprep.subr.bf16.mxu0 0
  %798 = vmatpush1.bf16.msra.mxu0 0
  %799 = vmatprep.subr.bf16.mxu0 0
  %800 = vmatpush1.bf16.msra.mxu0 0
  %801 = vmatprep.subr.bf16.mxu0 0
  %802 = vmatpush1.bf16.msra.mxu0 0
  %803 = vmatprep.subr.bf16.mxu0 0
  %804 = vmatpush1.bf16.msra.mxu0 0
  %805 = vmatprep.subr.bf16.mxu0 0
  %806 = vmatpush1.bf16.msra.mxu0 0
  %807 = vmatprep.subr.bf16.mxu0 0
  %808 = vmatpush1.bf16.msra.mxu0 0
  %809 = vmatprep.subr.bf16.mxu0 0
  %810 = vmatpush1.bf16.msra.mxu0 0
  %811 = vmatprep.subr.bf16.mxu0 0
  %812 = vmatpush1.bf16.msra.mxu0 0
  %813 = vmatprep.subr.bf16.mxu0 0
  %814 = vmatpush1.bf16.msra.mxu0 0
  %815 = vmatprep.subr.bf16.mxu0 0
  %816 = vmatpush1.bf16.msra.mxu0 0
  %817 = vmatprep.mubr.bf16.mxu0 0
  %818 = vmatmul.mubr.bf16.gmra.mrb[0].mxu0 %v671
  %v819 = vpop.f32.mrb[0].mxu0
  %v820 = vadd.f32 %v780, %v819
  %v821 = vpop.f32.mrb[0].mxu0
  %v822 = vpop.f32.mrb[0].mxu0
  %v823 = vpop.f32.mrb[0].mxu0
  %824 = vdwg.mxu0
  %v825 = vadd.f32 %v820, %v453
  %v826 = vxor.u32 %v825, 2147483648
  %v827 = vmul.f32 %v826, 1.442695
  %v828 = vpow.pop %v827
  %v829 = vadd.f32 %v828, 1.0
  %v830 = vrcp.pop %v829
  %v831 = vmul.f32 1.0, %v830
  %v832 = vtanh.pop %v825
  %v833 = vmul.f32 %v831, %v658
  %835 = vrot.lane.b32.xlu0 %v832, 64
  %v836 = vpop.permute.xlu0 %835
  %v838 = vmul.f32 %v831, %v836
  %840 = vrot.lane.b32.xlu0 %v838, 32
  %v841 = vpop.permute.xlu0 %840
  %v843 = vadd.f32 %v833, %v841
  %v844 = vtanh.pop %v843
  %846 = vrot.lane.b32.xlu0 %v844, 64
  %v847 = vpop.permute.xlu0 %846
  %v849 = vmul.f32 %v831, %v847
  %v850 = vld [vmem:[#allocation2 + $0x20] sm:$0xff]
  %v851 = vpack.c.bf16 %v737, %v737
  %853 = vrot.lane.b32.xlu0 %v851, 32
  %v854 = vpop.permute.xlu0 %853
  %v856 = vsel %vm203, %v854, 0
  %858 = vmatprep.subr.bf16.mxu0 0
  %859 = vmatpush1.bf16.msra.mxu0 %v199
  %860 = vmatprep.subr.bf16.mxu0 0
  %861 = vmatpush1.bf16.msra.mxu0 %v200
  %862 = vmatprep.subr.bf16.mxu0 0
  %863 = vmatpush1.bf16.msra.mxu0 0
  %864 = vmatprep.subr.bf16.mxu0 0
  %865 = vmatpush1.bf16.msra.mxu0 0
  %866 = vmatprep.subr.bf16.mxu0 0
  %867 = vmatpush1.bf16.msra.mxu0 0
  %868 = vmatprep.subr.bf16.mxu0 0
  %869 = vmatpush1.bf16.msra.mxu0 0
  %870 = vmatprep.subr.bf16.mxu0 0
  %871 = vmatpush1.bf16.msra.mxu0 0
  %872 = vmatprep.subr.bf16.mxu0 0
  %873 = vmatpush1.bf16.msra.mxu0 0
  %874 = vmatprep.subr.bf16.mxu0 0
  %875 = vmatpush1.bf16.msra.mxu0 0
  %876 = vmatprep.subr.bf16.mxu0 0
  %877 = vmatpush1.bf16.msra.mxu0 0
  %878 = vmatprep.subr.bf16.mxu0 0
  %879 = vmatpush1.bf16.msra.mxu0 0
  %880 = vmatprep.subr.bf16.mxu0 0
  %881 = vmatpush1.bf16.msra.mxu0 0
  %882 = vmatprep.subr.bf16.mxu0 0
  %883 = vmatpush1.bf16.msra.mxu0 0
  %884 = vmatprep.subr.bf16.mxu0 0
  %885 = vmatpush1.bf16.msra.mxu0 0
  %886 = vmatprep.subr.bf16.mxu0 0
  %887 = vmatpush1.bf16.msra.mxu0 0
  %888 = vmatprep.subr.bf16.mxu0 0
  %889 = vmatpush1.bf16.msra.mxu0 0
  %890 = vmatprep.mubr.bf16.mxu0 0
  %891 = vmatmul.mubr.bf16.gmra.mrb[0].mxu0 %v856
  %v892 = vpop.f32.mrb[0].mxu0
  %v893 = vadd.f32 0.0, %v892
  %v894 = vpop.f32.mrb[0].mxu0
  %v895 = vpop.f32.mrb[0].mxu0
  %v896 = vpop.f32.mrb[0].mxu0
  %897 = vdwg.mxu0
  %v898 = vadd.f32 %v850, %v893
  %v899 = vxor.u32 %v898, 2147483648
  %v900 = vmul.f32 %v899, 1.442695
  %v901 = vpow.pop %v900
  %v902 = vadd.f32 %v901, 1.0
  %v903 = vrcp.pop %v902
  %v904 = vmul.f32 1.0, %v903
  %v905 = vtanh.pop %v898
  %v906 = vmul.f32 %v904, %v731
  %908 = vrot.lane.b32.xlu0 %v905, 64
  %v909 = vpop.permute.xlu0 %908
  %v911 = vmul.f32 %v904, %v909
  %913 = vrot.lane.b32.xlu0 %v911, 32
  %v914 = vpop.permute.xlu0 %913
  %v916 = vadd.f32 %v906, %v914
  %v917 = vtanh.pop %v916
  %919 = vrot.lane.b32.xlu0 %v917, 64
  %v920 = vpop.permute.xlu0 %919
  %v922 = vmul.f32 %v904, %v920
  %v923 = vpack.c.bf16 %v849, %v849
  %925 = vrot.lane.b32.xlu0 %v923, 32
  %v926 = vpop.permute.xlu0 %925
  %v928 = vsel %vm203, %v926, 0
  %930 = vmatprep.subr.bf16.mxu0 0
  %931 = vmatpush1.bf16.msra.mxu0 %v353
  %932 = vmatprep.subr.bf16.mxu0 0
  %933 = vmatpush1.bf16.msra.mxu0 %v354
  %934 = vmatprep.subr.bf16.mxu0 0
  %935 = vmatpush1.bf16.msra.mxu0 0
  %936 = vmatprep.subr.bf16.mxu0 0
  %937 = vmatpush1.bf16.msra.mxu0 0
  %938 = vmatprep.subr.bf16.mxu0 0
  %939 = vmatpush1.bf16.msra.mxu0 0
  %940 = vmatprep.subr.bf16.mxu0 0
  %941 = vmatpush1.bf16.msra.mxu0 0
  %942 = vmatprep.subr.bf16.mxu0 0
  %943 = vmatpush1.bf16.msra.mxu0 0
  %944 = vmatprep.subr.bf16.mxu0 0
  %945 = vmatpush1.bf16.msra.mxu0 0
  %946 = vmatprep.subr.bf16.mxu0 0
  %947 = vmatpush1.bf16.msra.mxu0 0
  %948 = vmatprep.subr.bf16.mxu0 0
  %949 = vmatpush1.bf16.msra.mxu0 0
  %950 = vmatprep.subr.bf16.mxu0 0
  %951 = vmatpush1.bf16.msra.mxu0 0
  %952 = vmatprep.subr.bf16.mxu0 0
  %953 = vmatpush1.bf16.msra.mxu0 0
  %954 = vmatprep.subr.bf16.mxu0 0
  %955 = vmatpush1.bf16.msra.mxu0 0
  %956 = vmatprep.subr.bf16.mxu0 0
  %957 = vmatpush1.bf16.msra.mxu0 0
  %958 = vmatprep.subr.bf16.mxu0 0
  %959 = vmatpush1.bf16.msra.mxu0 0
  %960 = vmatprep.subr.bf16.mxu0 0
  %961 = vmatpush1.bf16.msra.mxu0 0
  %962 = vmatprep.mubr.bf16.mxu0 0
  %963 = vmatmul.mubr.bf16.gmra.mrb[0].mxu0 %v928
  %v964 = vpop.f32.mrb[0].mxu0
  %v965 = vadd.f32 0.0, %v964
  %v966 = vpop.f32.mrb[0].mxu0
  %v967 = vpop.f32.mrb[0].mxu0
  %v968 = vpop.f32.mrb[0].mxu0
  %969 = vdwg.mxu0
  %970 = vmatprep.subr.bf16.mxu0 0
  %971 = vmatpush1.bf16.msra.mxu0 %v405
  %972 = vmatprep.subr.bf16.mxu0 0
  %973 = vmatpush1.bf16.msra.mxu0 %v406
  %974 = vmatprep.subr.bf16.mxu0 0
  %975 = vmatpush1.bf16.msra.mxu0 0
  %976 = vmatprep.subr.bf16.mxu0 0
  %977 = vmatpush1.bf16.msra.mxu0 0
  %978 = vmatprep.subr.bf16.mxu0 0
  %979 = vmatpush1.bf16.msra.mxu0 0
  %980 = vmatprep.subr.bf16.mxu0 0
  %981 = vmatpush1.bf16.msra.mxu0 0
  %982 = vmatprep.subr.bf16.mxu0 0
  %983 = vmatpush1.bf16.msra.mxu0 0
  %984 = vmatprep.subr.bf16.mxu0 0
  %985 = vmatpush1.bf16.msra.mxu0 0
  %986 = vmatprep.subr.bf16.mxu0 0
  %987 = vmatpush1.bf16.msra.mxu0 0
  %988 = vmatprep.subr.bf16.mxu0 0
  %989 = vmatpush1.bf16.msra.mxu0 0
  %990 = vmatprep.subr.bf16.mxu0 0
  %991 = vmatpush1.bf16.msra.mxu0 0
  %992 = vmatprep.subr.bf16.mxu0 0
  %993 = vmatpush1.bf16.msra.mxu0 0
  %994 = vmatprep.subr.bf16.mxu0 0
  %995 = vmatpush1.bf16.msra.mxu0 0
  %996 = vmatprep.subr.bf16.mxu0 0
  %997 = vmatpush1.bf16.msra.mxu0 0
  %998 = vmatprep.subr.bf16.mxu0 0
  %999 = vmatpush1.bf16.msra.mxu0 0
  %1000 = vmatprep.subr.bf16.mxu0 0
  %1001 = vmatpush1.bf16.msra.mxu0 0
  %1002 = vmatprep.mubr.bf16.mxu0 0
  %1003 = vmatmul.mubr.bf16.gmra.mrb[0].mxu0 %v856
  %v1004 = vpop.f32.mrb[0].mxu0
  %v1005 = vadd.f32 %v965, %v1004
  %v1006 = vpop.f32.mrb[0].mxu0
  %v1007 = vpop.f32.mrb[0].mxu0
  %v1008 = vpop.f32.mrb[0].mxu0
  %1009 = vdwg.mxu0
  %v1010 = vadd.f32 %v1005, %v453
  %v1011 = vxor.u32 %v1010, 2147483648
  %v1012 = vmul.f32 %v1011, 1.442695
  %v1013 = vpow.pop %v1012
  %v1014 = vadd.f32 %v1013, 1.0
  %v1015 = vrcp.pop %v1014
  %v1016 = vmul.f32 1.0, %v1015
  %v1017 = vtanh.pop %v1010
  %v1018 = vmul.f32 %v1016, %v843
  %1020 = vrot.lane.b32.xlu0 %v1017, 64
  %v1021 = vpop.permute.xlu0 %1020
  %v1023 = vmul.f32 %v1016, %v1021
  %1025 = vrot.lane.b32.xlu0 %v1023, 32
  %v1026 = vpop.permute.xlu0 %1025
  %v1028 = vadd.f32 %v1018, %v1026
  %v1029 = vtanh.pop %v1028
  %1031 = vrot.lane.b32.xlu0 %v1029, 64
  %v1032 = vpop.permute.xlu0 %1031
  %v1034 = vmul.f32 %v1016, %v1032
  %v1035 = vld [vmem:[#allocation2 + $0x28] sm:$0xff]
  %v1036 = vpack.c.bf16 %v922, %v922
  %1038 = vrot.lane.b32.xlu0 %v1036, 32
  %v1039 = vpop.permute.xlu0 %1038
  %v1041 = vsel %vm203, %v1039, 0
  %1043 = vmatprep.subr.bf16.mxu0 0
  %1044 = vmatpush1.bf16.msra.mxu0 %v199
  %1045 = vmatprep.subr.bf16.mxu0 0
  %1046 = vmatpush1.bf16.msra.mxu0 %v200
  %1047 = vmatprep.subr.bf16.mxu0 0
  %1048 = vmatpush1.bf16.msra.mxu0 0
  %1049 = vmatprep.subr.bf16.mxu0 0
  %1050 = vmatpush1.bf16.msra.mxu0 0
  %1051 = vmatprep.subr.bf16.mxu0 0
  %1052 = vmatpush1.bf16.msra.mxu0 0
  %1053 = vmatprep.subr.bf16.mxu0 0
  %1054 = vmatpush1.bf16.msra.mxu0 0
  %1055 = vmatprep.subr.bf16.mxu0 0
  %1056 = vmatpush1.bf16.msra.mxu0 0
  %1057 = vmatprep.subr.bf16.mxu0 0
  %1058 = vmatpush1.bf16.msra.mxu0 0
  %1059 = vmatprep.subr.bf16.mxu0 0
  %1060 = vmatpush1.bf16.msra.mxu0 0
  %1061 = vmatprep.subr.bf16.mxu0 0
  %1062 = vmatpush1.bf16.msra.mxu0 0
  %1063 = vmatprep.subr.bf16.mxu0 0
  %1064 = vmatpush1.bf16.msra.mxu0 0
  %1065 = vmatprep.subr.bf16.mxu0 0
  %1066 = vmatpush1.bf16.msra.mxu0 0
  %1067 = vmatprep.subr.bf16.mxu0 0
  %1068 = vmatpush1.bf16.msra.mxu0 0
  %1069 = vmatprep.subr.bf16.mxu0 0
  %1070 = vmatpush1.bf16.msra.mxu0 0
  %1071 = vmatprep.subr.bf16.mxu0 0
  %1072 = vmatpush1.bf16.msra.mxu0 0
  %1073 = vmatprep.subr.bf16.mxu0 0
  %1074 = vmatpush1.bf16.msra.mxu0 0
  %1075 = vmatprep.mubr.bf16.mxu0 0
  %1076 = vmatmul.mubr.bf16.gmra.mrb[0].mxu0 %v1041
  %v1077 = vpop.f32.mrb[0].mxu0
  %v1078 = vadd.f32 0.0, %v1077
  %v1079 = vpop.f32.mrb[0].mxu0
  %v1080 = vpop.f32.mrb[0].mxu0
  %v1081 = vpop.f32.mrb[0].mxu0
  %1082 = vdwg.mxu0
  %v1083 = vadd.f32 %v1035, %v1078
  %v1084 = vxor.u32 %v1083, 2147483648
  %v1085 = vmul.f32 %v1084, 1.442695
  %v1086 = vpow.pop %v1085
  %v1087 = vadd.f32 %v1086, 1.0
  %v1088 = vrcp.pop %v1087
  %v1089 = vmul.f32 1.0, %v1088
  %v1090 = vtanh.pop %v1083
  %v1091 = vmul.f32 %v1089, %v916
  %1093 = vrot.lane.b32.xlu0 %v1090, 64
  %v1094 = vpop.permute.xlu0 %1093
  %v1096 = vmul.f32 %v1089, %v1094
  %1098 = vrot.lane.b32.xlu0 %v1096, 32
  %v1099 = vpop.permute.xlu0 %1098
  %v1101 = vadd.f32 %v1091, %v1099
  %v1102 = vtanh.pop %v1101
  %1104 = vrot.lane.b32.xlu0 %v1102, 64
  %v1105 = vpop.permute.xlu0 %1104
  %v1107 = vmul.f32 %v1089, %v1105
  %v1108 = vpack.c.bf16 %v1034, %v1034
  %1110 = vrot.lane.b32.xlu0 %v1108, 32
  %v1111 = vpop.permute.xlu0 %1110
  %v1113 = vsel %vm203, %v1111, 0
  %1115 = vmatprep.subr.bf16.mxu0 0
  %1116 = vmatpush1.bf16.msra.mxu0 %v353
  %1117 = vmatprep.subr.bf16.mxu0 0
  %1118 = vmatpush1.bf16.msra.mxu0 %v354
  %1119 = vmatprep.subr.bf16.mxu0 0
  %1120 = vmatpush1.bf16.msra.mxu0 0
  %1121 = vmatprep.subr.bf16.mxu0 0
  %1122 = vmatpush1.bf16.msra.mxu0 0
  %1123 = vmatprep.subr.bf16.mxu0 0
  %1124 = vmatpush1.bf16.msra.mxu0 0
  %1125 = vmatprep.subr.bf16.mxu0 0
  %1126 = vmatpush1.bf16.msra.mxu0 0
  %1127 = vmatprep.subr.bf16.mxu0 0
  %1128 = vmatpush1.bf16.msra.mxu0 0
  %1129 = vmatprep.subr.bf16.mxu0 0
  %1130 = vmatpush1.bf16.msra.mxu0 0
  %1131 = vmatprep.subr.bf16.mxu0 0
  %1132 = vmatpush1.bf16.msra.mxu0 0
  %1133 = vmatprep.subr.bf16.mxu0 0
  %1134 = vmatpush1.bf16.msra.mxu0 0
  %1135 = vmatprep.subr.bf16.mxu0 0
  %1136 = vmatpush1.bf16.msra.mxu0 0
  %1137 = vmatprep.subr.bf16.mxu0 0
  %1138 = vmatpush1.bf16.msra.mxu0 0
  %1139 = vmatprep.subr.bf16.mxu0 0
  %1140 = vmatpush1.bf16.msra.mxu0 0
  %1141 = vmatprep.subr.bf16.mxu0 0
  %1142 = vmatpush1.bf16.msra.mxu0 0
  %1143 = vmatprep.subr.bf16.mxu0 0
  %1144 = vmatpush1.bf16.msra.mxu0 0
  %1145 = vmatprep.subr.bf16.mxu0 0
  %1146 = vmatpush1.bf16.msra.mxu0 0
  %1147 = vmatprep.mubr.bf16.mxu0 0
  %1148 = vmatmul.mubr.bf16.gmra.mrb[0].mxu0 %v1113
  %v1149 = vpop.f32.mrb[0].mxu0
  %v1150 = vadd.f32 0.0, %v1149
  %v1151 = vpop.f32.mrb[0].mxu0
  %v1152 = vpop.f32.mrb[0].mxu0
  %v1153 = vpop.f32.mrb[0].mxu0
  %1154 = vdwg.mxu0
  %1155 = vmatprep.subr.bf16.mxu0 0
  %1156 = vmatpush1.bf16.msra.mxu0 %v405
  %1157 = vmatprep.subr.bf16.mxu0 0
  %1158 = vmatpush1.bf16.msra.mxu0 %v406
  %1159 = vmatprep.subr.bf16.mxu0 0
  %1160 = vmatpush1.bf16.msra.mxu0 0
  %1161 = vmatprep.subr.bf16.mxu0 0
  %1162 = vmatpush1.bf16.msra.mxu0 0
  %1163 = vmatprep.subr.bf16.mxu0 0
  %1164 = vmatpush1.bf16.msra.mxu0 0
  %1165 = vmatprep.subr.bf16.mxu0 0
  %1166 = vmatpush1.bf16.msra.mxu0 0
  %1167 = vmatprep.subr.bf16.mxu0 0
  %1168 = vmatpush1.bf16.msra.mxu0 0
  %1169 = vmatprep.subr.bf16.mxu0 0
  %1170 = vmatpush1.bf16.msra.mxu0 0
  %1171 = vmatprep.subr.bf16.mxu0 0
  %1172 = vmatpush1.bf16.msra.mxu0 0
  %1173 = vmatprep.subr.bf16.mxu0 0
  %1174 = vmatpush1.bf16.msra.mxu0 0
  %1175 = vmatprep.subr.bf16.mxu0 0
  %1176 = vmatpush1.bf16.msra.mxu0 0
  %1177 = vmatprep.subr.bf16.mxu0 0
  %1178 = vmatpush1.bf16.msra.mxu0 0
  %1179 = vmatprep.subr.bf16.mxu0 0
  %1180 = vmatpush1.bf16.msra.mxu0 0
  %1181 = vmatprep.subr.bf16.mxu0 0
  %1182 = vmatpush1.bf16.msra.mxu0 0
  %1183 = vmatprep.subr.bf16.mxu0 0
  %1184 = vmatpush1.bf16.msra.mxu0 0
  %1185 = vmatprep.subr.bf16.mxu0 0
  %1186 = vmatpush1.bf16.msra.mxu0 0
  %1187 = vmatprep.mubr.bf16.mxu0 0
  %1188 = vmatmul.mubr.bf16.gmra.mrb[0].mxu0 %v1041
  %v1189 = vpop.f32.mrb[0].mxu0
  %v1190 = vadd.f32 %v1150, %v1189
  %v1191 = vpop.f32.mrb[0].mxu0
  %v1192 = vpop.f32.mrb[0].mxu0
  %v1193 = vpop.f32.mrb[0].mxu0
  %1194 = vdwg.mxu0
  %v1195 = vadd.f32 %v1190, %v453
  %v1196 = vxor.u32 %v1195, 2147483648
  %v1197 = vmul.f32 %v1196, 1.442695
  %v1198 = vpow.pop %v1197
  %v1199 = vadd.f32 %v1198, 1.0
  %v1200 = vrcp.pop %v1199
  %v1201 = vmul.f32 1.0, %v1200
  %v1202 = vtanh.pop %v1195
  %v1203 = vmul.f32 %v1201, %v1028
  %1205 = vrot.lane.b32.xlu0 %v1202, 64
  %v1206 = vpop.permute.xlu0 %1205
  %v1208 = vmul.f32 %v1201, %v1206
  %1210 = vrot.lane.b32.xlu0 %v1208, 32
  %v1211 = vpop.permute.xlu0 %1210
  %v1213 = vadd.f32 %v1203, %v1211
  %v1214 = vtanh.pop %v1213
  %1216 = vrot.lane.b32.xlu0 %v1214, 64
  %v1217 = vpop.permute.xlu0 %1216
  %v1219 = vmul.f32 %v1201, %v1217
  %v1220 = vld [vmem:[#allocation2 + $0x30] sm:$0xff]
  %v1221 = vpack.c.bf16 %v1107, %v1107
  %1223 = vrot.lane.b32.xlu0 %v1221, 32
  %v1224 = vpop.permute.xlu0 %1223
  %v1226 = vsel %vm203, %v1224, 0
  %1228 = vmatprep.subr.bf16.mxu0 0
  %1229 = vmatpush1.bf16.msra.mxu0 %v199
  %1230 = vmatprep.subr.bf16.mxu0 0
  %1231 = vmatpush1.bf16.msra.mxu0 %v200
  %1232 = vmatprep.subr.bf16.mxu0 0
  %1233 = vmatpush1.bf16.msra.mxu0 0
  %1234 = vmatprep.subr.bf16.mxu0 0
  %1235 = vmatpush1.bf16.msra.mxu0 0
  %1236 = vmatprep.subr.bf16.mxu0 0
  %1237 = vmatpush1.bf16.msra.mxu0 0
  %1238 = vmatprep.subr.bf16.mxu0 0
  %1239 = vmatpush1.bf16.msra.mxu0 0
  %1240 = vmatprep.subr.bf16.mxu0 0
  %1241 = vmatpush1.bf16.msra.mxu0 0
  %1242 = vmatprep.subr.bf16.mxu0 0
  %1243 = vmatpush1.bf16.msra.mxu0 0
  %1244 = vmatprep.subr.bf16.mxu0 0
  %1245 = vmatpush1.bf16.msra.mxu0 0
  %1246 = vmatprep.subr.bf16.mxu0 0
  %1247 = vmatpush1.bf16.msra.mxu0 0
  %1248 = vmatprep.subr.bf16.mxu0 0
  %1249 = vmatpush1.bf16.msra.mxu0 0
  %1250 = vmatprep.subr.bf16.mxu0 0
  %1251 = vmatpush1.bf16.msra.mxu0 0
  %1252 = vmatprep.subr.bf16.mxu0 0
  %1253 = vmatpush1.bf16.msra.mxu0 0
  %1254 = vmatprep.subr.bf16.mxu0 0
  %1255 = vmatpush1.bf16.msra.mxu0 0
  %1256 = vmatprep.subr.bf16.mxu0 0
  %1257 = vmatpush1.bf16.msra.mxu0 0
  %1258 = vmatprep.subr.bf16.mxu0 0
  %1259 = vmatpush1.bf16.msra.mxu0 0
  %1260 = vmatprep.mubr.bf16.mxu0 0
  %1261 = vmatmul.mubr.bf16.gmra.mrb[0].mxu0 %v1226
  %v1262 = vpop.f32.mrb[0].mxu0
  %v1263 = vadd.f32 0.0, %v1262
  %v1264 = vpop.f32.mrb[0].mxu0
  %v1265 = vpop.f32.mrb[0].mxu0
  %v1266 = vpop.f32.mrb[0].mxu0
  %1267 = vdwg.mxu0
  %v1268 = vadd.f32 %v1220, %v1263
  %v1269 = vxor.u32 %v1268, 2147483648
  %v1270 = vmul.f32 %v1269, 1.442695
  %v1271 = vpow.pop %v1270
  %v1272 = vadd.f32 %v1271, 1.0
  %v1273 = vrcp.pop %v1272
  %v1274 = vmul.f32 1.0, %v1273
  %v1275 = vtanh.pop %v1268
  %v1276 = vmul.f32 %v1274, %v1101
  %1278 = vrot.lane.b32.xlu0 %v1275, 64
  %v1279 = vpop.permute.xlu0 %1278
  %v1281 = vmul.f32 %v1274, %v1279
  %1283 = vrot.lane.b32.xlu0 %v1281, 32
  %v1284 = vpop.permute.xlu0 %1283
  %v1286 = vadd.f32 %v1276, %v1284
  %v1287 = vtanh.pop %v1286
  %1289 = vrot.lane.b32.xlu0 %v1287, 64
  %v1290 = vpop.permute.xlu0 %1289
  %v1292 = vmul.f32 %v1274, %v1290
  %v1293 = vpack.c.bf16 %v1219, %v1219
  %1295 = vrot.lane.b32.xlu0 %v1293, 32
  %v1296 = vpop.permute.xlu0 %1295
  %v1298 = vsel %vm203, %v1296, 0
  %1300 = vmatprep.subr.bf16.mxu0 0
  %1301 = vmatpush1.bf16.msra.mxu0 %v353
  %1302 = vmatprep.subr.bf16.mxu0 0
  %1303 = vmatpush1.bf16.msra.mxu0 %v354
  %1304 = vmatprep.subr.bf16.mxu0 0
  %1305 = vmatpush1.bf16.msra.mxu0 0
  %1306 = vmatprep.subr.bf16.mxu0 0
  %1307 = vmatpush1.bf16.msra.mxu0 0
  %1308 = vmatprep.subr.bf16.mxu0 0
  %1309 = vmatpush1.bf16.msra.mxu0 0
  %1310 = vmatprep.subr.bf16.mxu0 0
  %1311 = vmatpush1.bf16.msra.mxu0 0
  %1312 = vmatprep.subr.bf16.mxu0 0
  %1313 = vmatpush1.bf16.msra.mxu0 0
  %1314 = vmatprep.subr.bf16.mxu0 0
  %1315 = vmatpush1.bf16.msra.mxu0 0
  %1316 = vmatprep.subr.bf16.mxu0 0
  %1317 = vmatpush1.bf16.msra.mxu0 0
  %1318 = vmatprep.subr.bf16.mxu0 0
  %1319 = vmatpush1.bf16.msra.mxu0 0
  %1320 = vmatprep.subr.bf16.mxu0 0
  %1321 = vmatpush1.bf16.msra.mxu0 0
  %1322 = vmatprep.subr.bf16.mxu0 0
  %1323 = vmatpush1.bf16.msra.mxu0 0
  %1324 = vmatprep.subr.bf16.mxu0 0
  %1325 = vmatpush1.bf16.msra.mxu0 0
  %1326 = vmatprep.subr.bf16.mxu0 0
  %1327 = vmatpush1.bf16.msra.mxu0 0
  %1328 = vmatprep.subr.bf16.mxu0 0
  %1329 = vmatpush1.bf16.msra.mxu0 0
  %1330 = vmatprep.subr.bf16.mxu0 0
  %1331 = vmatpush1.bf16.msra.mxu0 0
  %1332 = vmatprep.mubr.bf16.mxu0 0
  %1333 = vmatmul.mubr.bf16.gmra.mrb[0].mxu0 %v1298
  %v1334 = vpop.f32.mrb[0].mxu0
  %v1335 = vadd.f32 0.0, %v1334
  %v1336 = vpop.f32.mrb[0].mxu0
  %v1337 = vpop.f32.mrb[0].mxu0
  %v1338 = vpop.f32.mrb[0].mxu0
  %1339 = vdwg.mxu0
  %1340 = vmatprep.subr.bf16.mxu0 0
  %1341 = vmatpush1.bf16.msra.mxu0 %v405
  %1342 = vmatprep.subr.bf16.mxu0 0
  %1343 = vmatpush1.bf16.msra.mxu0 %v406
  %1344 = vmatprep.subr.bf16.mxu0 0
  %1345 = vmatpush1.bf16.msra.mxu0 0
  %1346 = vmatprep.subr.bf16.mxu0 0
  %1347 = vmatpush1.bf16.msra.mxu0 0
  %1348 = vmatprep.subr.bf16.mxu0 0
  %1349 = vmatpush1.bf16.msra.mxu0 0
  %1350 = vmatprep.subr.bf16.mxu0 0
  %1351 = vmatpush1.bf16.msra.mxu0 0
  %1352 = vmatprep.subr.bf16.mxu0 0
  %1353 = vmatpush1.bf16.msra.mxu0 0
  %1354 = vmatprep.subr.bf16.mxu0 0
  %1355 = vmatpush1.bf16.msra.mxu0 0
  %1356 = vmatprep.subr.bf16.mxu0 0
  %1357 = vmatpush1.bf16.msra.mxu0 0
  %1358 = vmatprep.subr.bf16.mxu0 0
  %1359 = vmatpush1.bf16.msra.mxu0 0
  %1360 = vmatprep.subr.bf16.mxu0 0
  %1361 = vmatpush1.bf16.msra.mxu0 0
  %1362 = vmatprep.subr.bf16.mxu0 0
  %1363 = vmatpush1.bf16.msra.mxu0 0
  %1364 = vmatprep.subr.bf16.mxu0 0
  %1365 = vmatpush1.bf16.msra.mxu0 0
  %1366 = vmatprep.subr.bf16.mxu0 0
  %1367 = vmatpush1.bf16.msra.mxu0 0
  %1368 = vmatprep.subr.bf16.mxu0 0
  %1369 = vmatpush1.bf16.msra.mxu0 0
  %1370 = vmatprep.subr.bf16.mxu0 0
  %1371 = vmatpush1.bf16.msra.mxu0 0
  %1372 = vmatprep.mubr.bf16.mxu0 0
  %1373 = vmatmul.mubr.bf16.gmra.mrb[0].mxu0 %v1226
  %v1374 = vpop.f32.mrb[0].mxu0
  %v1375 = vadd.f32 %v1335, %v1374
  %v1376 = vpop.f32.mrb[0].mxu0
  %v1377 = vpop.f32.mrb[0].mxu0
  %v1378 = vpop.f32.mrb[0].mxu0
  %1379 = vdwg.mxu0
  %v1380 = vadd.f32 %v1375, %v453
  %v1381 = vxor.u32 %v1380, 2147483648
  %v1382 = vmul.f32 %v1381, 1.442695
  %v1383 = vpow.pop %v1382
  %v1384 = vadd.f32 %v1383, 1.0
  %v1385 = vrcp.pop %v1384
  %v1386 = vmul.f32 1.0, %v1385
  %v1387 = vtanh.pop %v1380
  %v1388 = vmul.f32 %v1386, %v1213
  %1390 = vrot.lane.b32.xlu0 %v1387, 64
  %v1391 = vpop.permute.xlu0 %1390
  %v1393 = vmul.f32 %v1386, %v1391
  %1395 = vrot.lane.b32.xlu0 %v1393, 32
  %v1396 = vpop.permute.xlu0 %1395
  %v1398 = vadd.f32 %v1388, %v1396
  %v1399 = vtanh.pop %v1398
  %1401 = vrot.lane.b32.xlu0 %v1399, 64
  %v1402 = vpop.permute.xlu0 %1401
  %v1404 = vmul.f32 %v1386, %v1402
  %v1405 = vld [vmem:[#allocation2 + $0x38] sm:$0xff]
  %v1406 = vpack.c.bf16 %v1292, %v1292
  %1408 = vrot.lane.b32.xlu0 %v1406, 32
  %v1409 = vpop.permute.xlu0 %1408
  %v1411 = vsel %vm203, %v1409, 0
  %1413 = vmatprep.subr.bf16.mxu0 0
  %1414 = vmatpush1.bf16.msra.mxu0 %v199
  %1415 = vmatprep.subr.bf16.mxu0 0
  %1416 = vmatpush1.bf16.msra.mxu0 %v200
  %1417 = vmatprep.subr.bf16.mxu0 0
  %1418 = vmatpush1.bf16.msra.mxu0 0
  %1419 = vmatprep.subr.bf16.mxu0 0
  %1420 = vmatpush1.bf16.msra.mxu0 0
  %1421 = vmatprep.subr.bf16.mxu0 0
  %1422 = vmatpush1.bf16.msra.mxu0 0
  %1423 = vmatprep.subr.bf16.mxu0 0
  %1424 = vmatpush1.bf16.msra.mxu0 0
  %1425 = vmatprep.subr.bf16.mxu0 0
  %1426 = vmatpush1.bf16.msra.mxu0 0
  %1427 = vmatprep.subr.bf16.mxu0 0
  %1428 = vmatpush1.bf16.msra.mxu0 0
  %1429 = vmatprep.subr.bf16.mxu0 0
  %1430 = vmatpush1.bf16.msra.mxu0 0
  %1431 = vmatprep.subr.bf16.mxu0 0
  %1432 = vmatpush1.bf16.msra.mxu0 0
  %1433 = vmatprep.subr.bf16.mxu0 0
  %1434 = vmatpush1.bf16.msra.mxu0 0
  %1435 = vmatprep.subr.bf16.mxu0 0
  %1436 = vmatpush1.bf16.msra.mxu0 0
  %1437 = vmatprep.subr.bf16.mxu0 0
  %1438 = vmatpush1.bf16.msra.mxu0 0
  %1439 = vmatprep.subr.bf16.mxu0 0
  %1440 = vmatpush1.bf16.msra.mxu0 0
  %1441 = vmatprep.subr.bf16.mxu0 0
  %1442 = vmatpush1.bf16.msra.mxu0 0
  %1443 = vmatprep.subr.bf16.mxu0 0
  %1444 = vmatpush1.bf16.msra.mxu0 0
  %1445 = vmatprep.mubr.bf16.mxu0 0
  %1446 = vmatmul.mubr.bf16.gmra.mrb[0].mxu0 %v1411
  %v1447 = vpop.f32.mrb[0].mxu0
  %v1448 = vadd.f32 0.0, %v1447
  %v1449 = vpop.f32.mrb[0].mxu0
  %v1450 = vpop.f32.mrb[0].mxu0
  %v1451 = vpop.f32.mrb[0].mxu0
  %1452 = vdwg.mxu0
  %v1453 = vadd.f32 %v1405, %v1448
  %v1454 = vxor.u32 %v1453, 2147483648
  %v1455 = vmul.f32 %v1454, 1.442695
  %v1456 = vpow.pop %v1455
  %v1457 = vadd.f32 %v1456, 1.0
  %v1458 = vrcp.pop %v1457
  %v1459 = vmul.f32 1.0, %v1458
  %v1460 = vtanh.pop %v1453
  %v1461 = vmul.f32 %v1459, %v1286
  %1463 = vrot.lane.b32.xlu0 %v1460, 64
  %v1464 = vpop.permute.xlu0 %1463
  %v1466 = vmul.f32 %v1459, %v1464
  %1468 = vrot.lane.b32.xlu0 %v1466, 32
  %v1469 = vpop.permute.xlu0 %1468
  %v1471 = vadd.f32 %v1461, %v1469
  %v1472 = vtanh.pop %v1471
  %1474 = vrot.lane.b32.xlu0 %v1472, 64
  %v1475 = vpop.permute.xlu0 %1474
  %v1477 = vmul.f32 %v1459, %v1475
  %v1478 = vpack.c.bf16 %v1404, %v1404
  %1480 = vrot.lane.b32.xlu0 %v1478, 32
  %v1481 = vpop.permute.xlu0 %1480
  %v1483 = vsel %vm203, %v1481, 0
  %1485 = vmatprep.subr.bf16.mxu0 0
  %1486 = vmatpush1.bf16.msra.mxu0 %v353
  %1487 = vmatprep.subr.bf16.mxu0 0
  %1488 = vmatpush1.bf16.msra.mxu0 %v354
  %1489 = vmatprep.subr.bf16.mxu0 0
  %1490 = vmatpush1.bf16.msra.mxu0 0
  %1491 = vmatprep.subr.bf16.mxu0 0
  %1492 = vmatpush1.bf16.msra.mxu0 0
  %1493 = vmatprep.subr.bf16.mxu0 0
  %1494 = vmatpush1.bf16.msra.mxu0 0
  %1495 = vmatprep.subr.bf16.mxu0 0
  %1496 = vmatpush1.bf16.msra.mxu0 0
  %1497 = vmatprep.subr.bf16.mxu0 0
  %1498 = vmatpush1.bf16.msra.mxu0 0
  %1499 = vmatprep.subr.bf16.mxu0 0
  %1500 = vmatpush1.bf16.msra.mxu0 0
  %1501 = vmatprep.subr.bf16.mxu0 0
  %1502 = vmatpush1.bf16.msra.mxu0 0
  %1503 = vmatprep.subr.bf16.mxu0 0
  %1504 = vmatpush1.bf16.msra.mxu0 0
  %1505 = vmatprep.subr.bf16.mxu0 0
  %1506 = vmatpush1.bf16.msra.mxu0 0
  %1507 = vmatprep.subr.bf16.mxu0 0
  %1508 = vmatpush1.bf16.msra.mxu0 0
  %1509 = vmatprep.subr.bf16.mxu0 0
  %1510 = vmatpush1.bf16.msra.mxu0 0
  %1511 = vmatprep.subr.bf16.mxu0 0
  %1512 = vmatpush1.bf16.msra.mxu0 0
  %1513 = vmatprep.subr.bf16.mxu0 0
  %1514 = vmatpush1.bf16.msra.mxu0 0
  %1515 = vmatprep.subr.bf16.mxu0 0
  %1516 = vmatpush1.bf16.msra.mxu0 0
  %1517 = vmatprep.mubr.bf16.mxu0 0
  %1518 = vmatmul.mubr.bf16.gmra.mrb[0].mxu0 %v1483
  %v1519 = vpop.f32.mrb[0].mxu0
  %v1520 = vadd.f32 0.0, %v1519
  %v1521 = vpop.f32.mrb[0].mxu0
  %v1522 = vpop.f32.mrb[0].mxu0
  %v1523 = vpop.f32.mrb[0].mxu0
  %1524 = vdwg.mxu0
  %1525 = vmatprep.subr.bf16.mxu0 0
  %1526 = vmatpush1.bf16.msra.mxu0 %v405
  %1527 = vmatprep.subr.bf16.mxu0 0
  %1528 = vmatpush1.bf16.msra.mxu0 %v406
  %1529 = vmatprep.subr.bf16.mxu0 0
  %1530 = vmatpush1.bf16.msra.mxu0 0
  %1531 = vmatprep.subr.bf16.mxu0 0
  %1532 = vmatpush1.bf16.msra.mxu0 0
  %1533 = vmatprep.subr.bf16.mxu0 0
  %1534 = vmatpush1.bf16.msra.mxu0 0
  %1535 = vmatprep.subr.bf16.mxu0 0
  %1536 = vmatpush1.bf16.msra.mxu0 0
  %1537 = vmatprep.subr.bf16.mxu0 0
  %1538 = vmatpush1.bf16.msra.mxu0 0
  %1539 = vmatprep.subr.bf16.mxu0 0
  %1540 = vmatpush1.bf16.msra.mxu0 0
  %1541 = vmatprep.subr.bf16.mxu0 0
  %1542 = vmatpush1.bf16.msra.mxu0 0
  %1543 = vmatprep.subr.bf16.mxu0 0
  %1544 = vmatpush1.bf16.msra.mxu0 0
  %1545 = vmatprep.subr.bf16.mxu0 0
  %1546 = vmatpush1.bf16.msra.mxu0 0
  %1547 = vmatprep.subr.bf16.mxu0 0
  %1548 = vmatpush1.bf16.msra.mxu0 0
  %1549 = vmatprep.subr.bf16.mxu0 0
  %1550 = vmatpush1.bf16.msra.mxu0 0
  %1551 = vmatprep.subr.bf16.mxu0 0
  %1552 = vmatpush1.bf16.msra.mxu0 0
  %1553 = vmatprep.subr.bf16.mxu0 0
  %1554 = vmatpush1.bf16.msra.mxu0 0
  %1555 = vmatprep.subr.bf16.mxu0 0
  %1556 = vmatpush1.bf16.msra.mxu0 0
  %1557 = vmatprep.mubr.bf16.mxu0 0
  %1558 = vmatmul.mubr.bf16.gmra.mrb[0].mxu0 %v1411
  %v1559 = vpop.f32.mrb[0].mxu0
  %v1560 = vadd.f32 %v1520, %v1559
  %v1561 = vpop.f32.mrb[0].mxu0
  %v1562 = vpop.f32.mrb[0].mxu0
  %v1563 = vpop.f32.mrb[0].mxu0
  %1564 = vdwg.mxu0
  %v1565 = vadd.f32 %v1560, %v453
  %v1566 = vxor.u32 %v1565, 2147483648
  %v1567 = vmul.f32 %v1566, 1.442695
  %v1568 = vpow.pop %v1567
  %v1569 = vadd.f32 %v1568, 1.0
  %v1570 = vrcp.pop %v1569
  %v1571 = vmul.f32 1.0, %v1570
  %v1572 = vtanh.pop %v1565
  %v1573 = vmul.f32 %v1571, %v1398
  %1575 = vrot.lane.b32.xlu0 %v1572, 64
  %v1576 = vpop.permute.xlu0 %1575
  %v1578 = vmul.f32 %v1571, %v1576
  %1580 = vrot.lane.b32.xlu0 %v1578, 32
  %v1581 = vpop.permute.xlu0 %1580
  %v1583 = vadd.f32 %v1573, %v1581
  %v1584 = vtanh.pop %v1583
  %1586 = vrot.lane.b32.xlu0 %v1584, 64
  %v1587 = vpop.permute.xlu0 %1586
  %v1589 = vmul.f32 %v1571, %v1587
  %v1590 = vpack.c.bf16 %v1477, %v1477
  %v1591 = vpack.c.bf16 %v1589, %v1589
  %1593 = vrot.lane.b32.xlu0 %v1591, 32
  %v1594 = vpop.permute.xlu0 %1593
  %v1596 = vsel %vm203, %v1594, 0
  %1598 = vmatprep.subr.bf16.mxu0 0
  %1599 = vmatpush1.bf16.msra.mxu0 %v353
  %1600 = vmatprep.subr.bf16.mxu0 0
  %1601 = vmatpush1.bf16.msra.mxu0 %v354
  %1602 = vmatprep.subr.bf16.mxu0 0
  %1603 = vmatpush1.bf16.msra.mxu0 0
  %1604 = vmatprep.subr.bf16.mxu0 0
  %1605 = vmatpush1.bf16.msra.mxu0 0
  %1606 = vmatprep.subr.bf16.mxu0 0
  %1607 = vmatpush1.bf16.msra.mxu0 0
  %1608 = vmatprep.subr.bf16.mxu0 0
  %1609 = vmatpush1.bf16.msra.mxu0 0
  %1610 = vmatprep.subr.bf16.mxu0 0
  %1611 = vmatpush1.bf16.msra.mxu0 0
  %1612 = vmatprep.subr.bf16.mxu0 0
  %1613 = vmatpush1.bf16.msra.mxu0 0
  %1614 = vmatprep.subr.bf16.mxu0 0
  %1615 = vmatpush1.bf16.msra.mxu0 0
  %1616 = vmatprep.subr.bf16.mxu0 0
  %1617 = vmatpush1.bf16.msra.mxu0 0
  %1618 = vmatprep.subr.bf16.mxu0 0
  %1619 = vmatpush1.bf16.msra.mxu0 0
  %1620 = vmatprep.subr.bf16.mxu0 0
  %1621 = vmatpush1.bf16.msra.mxu0 0
  %1622 = vmatprep.subr.bf16.mxu0 0
  %1623 = vmatpush1.bf16.msra.mxu0 0
  %1624 = vmatprep.subr.bf16.mxu0 0
  %1625 = vmatpush1.bf16.msra.mxu0 0
  %1626 = vmatprep.subr.bf16.mxu0 0
  %1627 = vmatpush1.bf16.msra.mxu0 0
  %1628 = vmatprep.subr.bf16.mxu0 0
  %1629 = vmatpush1.bf16.msra.mxu0 0
  %1630 = vmatprep.mubr.bf16.mxu0 0
  %1631 = vmatmul.mubr.bf16.gmra.mrb[0].mxu0 %v1596
  %v1632 = vpop.f32.mrb[0].mxu0
  %v1633 = vadd.f32 0.0, %v1632
  %v1634 = vpop.f32.mrb[0].mxu0
  %v1635 = vpop.f32.mrb[0].mxu0
  %v1636 = vpop.f32.mrb[0].mxu0
  %1637 = vdwg.mxu0
  %1639 = vrot.lane.b32.xlu0 %v1590, 32
  %v1640 = vpop.permute.xlu0 %1639
  %v1642 = vsel %vm203, %v1640, 0
  %1644 = vmatprep.subr.bf16.mxu0 0
  %1645 = vmatpush1.bf16.msra.mxu0 %v405
  %1646 = vmatprep.subr.bf16.mxu0 0
  %1647 = vmatpush1.bf16.msra.mxu0 %v406
  %1648 = vmatprep.subr.bf16.mxu0 0
  %1649 = vmatpush1.bf16.msra.mxu0 0
  %1650 = vmatprep.subr.bf16.mxu0 0
  %1651 = vmatpush1.bf16.msra.mxu0 0
  %1652 = vmatprep.subr.bf16.mxu0 0
  %1653 = vmatpush1.bf16.msra.mxu0 0
  %1654 = vmatprep.subr.bf16.mxu0 0
  %1655 = vmatpush1.bf16.msra.mxu0 0
  %1656 = vmatprep.subr.bf16.mxu0 0
  %1657 = vmatpush1.bf16.msra.mxu0 0
  %1658 = vmatprep.subr.bf16.mxu0 0
  %1659 = vmatpush1.bf16.msra.mxu0 0
  %1660 = vmatprep.subr.bf16.mxu0 0
  %1661 = vmatpush1.bf16.msra.mxu0 0
  %1662 = vmatprep.subr.bf16.mxu0 0
  %1663 = vmatpush1.bf16.msra.mxu0 0
  %1664 = vmatprep.subr.bf16.mxu0 0
  %1665 = vmatpush1.bf16.msra.mxu0 0
  %1666 = vmatprep.subr.bf16.mxu0 0
  %1667 = vmatpush1.bf16.msra.mxu0 0
  %1668 = vmatprep.subr.bf16.mxu0 0
  %1669 = vmatpush1.bf16.msra.mxu0 0
  %1670 = vmatprep.subr.bf16.mxu0 0
  %1671 = vmatpush1.bf16.msra.mxu0 0
  %1672 = vmatprep.subr.bf16.mxu0 0
  %1673 = vmatpush1.bf16.msra.mxu0 0
  %1674 = vmatprep.subr.bf16.mxu0 0
  %1675 = vmatpush1.bf16.msra.mxu0 0
  %1676 = vmatprep.mubr.bf16.mxu0 0
  %1677 = vmatmul.mubr.bf16.gmra.mrb[0].mxu0 %v1642
  %v1678 = vpop.f32.mrb[0].mxu0
  %v1679 = vadd.f32 %v1633, %v1678
  %v1680 = vpop.f32.mrb[0].mxu0
  %v1681 = vpop.f32.mrb[0].mxu0
  %v1682 = vpop.f32.mrb[0].mxu0
  %1683 = vdwg.mxu0
  %v1684 = vadd.f32 %v1679, %v453
  %v1685 = vxor.u32 %v1684, 2147483648
  %v1686 = vmul.f32 %v1685, 1.442695
  %v1687 = vpow.pop %v1686
  %v1688 = vadd.f32 %v1687, 1.0
  %v1689 = vrcp.pop %v1688
  %v1690 = vmul.f32 1.0, %v1689
  %v1691 = vtanh.pop %v1684
  %v1692 = vmul.f32 %v1690, %v1583
  %1694 = vrot.lane.b32.xlu0 %v1691, 64
  %v1695 = vpop.permute.xlu0 %1694
  %v1697 = vmul.f32 %v1690, %v1695
  %1699 = vrot.lane.b32.xlu0 %v1697, 32
  %v1700 = vpop.permute.xlu0 %1699
  %v1702 = vadd.f32 %v1692, %v1700
  %v1703 = vtanh.pop %v1702
  %1705 = vrot.lane.b32.xlu0 %v1703, 64
  %v1706 = vpop.permute.xlu0 %1705
  %v1708 = vmul.f32 %v1690, %v1706
  %vm1709 = vcmask 523264
  %1710 = vst.msk [vmem:[#allocation3] sm:$0xff] %vm1709, 0.0
  %1712 = vrot.lane.b32.xlu0 %v1477, 32
  %v1713 = vpop.permute.xlu0 %1712
  %vm1715 = vcmask 253952
  %1716 = vst.msk [vmem:[#allocation3] sm:$0x1] %vm1715, %v1713
  %1717 = vrot.lane.b32.xlu0 %v1477, 64
  %v1718 = vpop.permute.xlu0 %1717
  %vm1720 = vcmask 517377
  %1721 = vst.msk [vmem:[#allocation3 - $0x1] sm:$0x2] %vm1720, %v1718
  %1723 = vrot.lane.b32.xlu0 %v1708, 32
  %v1724 = vpop.permute.xlu0 %1723
  %1726 = vst.msk [vmem:[#allocation3 + $0x1] sm:$0x1] %vm1715, %v1724
  %1727 = vrot.lane.b32.xlu0 %v1708, 64
  %v1728 = vpop.permute.xlu0 %1727
  %1730 = vst.msk [vmem:[#allocation3] sm:$0x2] %vm1720, %v1728
  %v1731 = vld [vmem:[#allocation3] sm:$0xff]
  %v1732 = vmax.f32 %v1731, 0.0
  %v1733 = vpack.c.bf16 %v1732, %v1732
  %v1734 = vld [vmem:[%s7] sm:$0xff]
  %v1735 = vld [vmem:[%s7 + $0x8] sm:$0xff]
  %v1736 = vld [vmem:[%s7 + $0x10] sm:$0xff]
  %v1737 = vld [vmem:[%s7 + $0x18] sm:$0xff]
  %v1738 = vld [vmem:[%s7 + $0x20] sm:$0xff]
  %v1739 = vld [vmem:[%s7 + $0x28] sm:$0xff]
  %v1740 = vld [vmem:[%s7 + $0x30] sm:$0xff]
  %v1741 = vld [vmem:[%s7 + $0x38] sm:$0xff]
  %v1742 = vld [vmem:[%s7 + $0x40] sm:$0xff]
  %v1743 = vld [vmem:[%s7 + $0x48] sm:$0xff]
  %v1744 = vld [vmem:[%s7 + $0x50] sm:$0xff]
  %v1745 = vld [vmem:[%s7 + $0x58] sm:$0xff]
  %v1746 = vld [vmem:[%s7 + $0x60] sm:$0xff]
  %v1747 = vld [vmem:[%s7 + $0x68] sm:$0xff]
  %v1748 = vld [vmem:[%s7 + $0x70] sm:$0xff]
  %v1749 = vld [vmem:[%s7 + $0x78] sm:$0xff]
  %v1750 = vld [vmem:[%s8] sm:$0xf]
  %v1752 = vlaneseq
  %v1753 = vshrl.u32 %v1752, 7
  %v1754 = vsub.s32 0, %v1753
  %v1755 = vrot.slane %v1750, %v1754
  %v1756 = vlaneseq
  %v1757 = vshrl.u32 %v1756, 7
  %v1758 = vsub.s32 1, %v1757
  %v1759 = vrot.slane %v1750, %v1758
  %v1760 = vlaneseq
  %v1761 = vshrl.u32 %v1760, 7
  %v1762 = vsub.s32 2, %v1761
  %v1763 = vrot.slane %v1750, %v1762
  %v1764 = vlaneseq
  %v1765 = vshrl.u32 %v1764, 7
  %v1766 = vsub.s32 3, %v1765
  %v1767 = vrot.slane %v1750, %v1766
  %v1788 = vunpack.c.l.b16 %v1734
  %v1789 = vunpack.c.h.b16 %v1734
  %v1790 = vunpack.c.l.b16 %v1735
  %v1791 = vunpack.c.h.b16 %v1735
  %v1792 = vunpack.c.l.b16 %v1736
  %v1793 = vunpack.c.h.b16 %v1736
  %v1794 = vunpack.c.l.b16 %v1737
  %v1795 = vunpack.c.h.b16 %v1737
  %v1796 = vunpack.c.l.b16 %v1738
  %v1797 = vunpack.c.h.b16 %v1738
  %v1798 = vunpack.c.l.b16 %v1739
  %v1799 = vunpack.c.h.b16 %v1739
  %v1800 = vunpack.c.l.b16 %v1740
  %v1801 = vunpack.c.h.b16 %v1740
  %v1802 = vunpack.c.l.b16 %v1741
  %v1803 = vunpack.c.h.b16 %v1741
  %v1804 = vunpack.c.l.b16 %v1742
  %v1805 = vunpack.c.h.b16 %v1742
  %v1806 = vunpack.c.l.b16 %v1743
  %v1807 = vunpack.c.h.b16 %v1743
  %v1808 = vunpack.c.l.b16 %v1744
  %v1809 = vunpack.c.h.b16 %v1744
  %v1810 = vunpack.c.l.b16 %v1745
  %v1811 = vunpack.c.h.b16 %v1745
  %v1812 = vunpack.c.l.b16 %v1746
  %v1813 = vunpack.c.h.b16 %v1746
  %v1814 = vunpack.c.l.b16 %v1747
  %v1815 = vunpack.c.h.b16 %v1747
  %v1816 = vunpack.c.l.b16 %v1748
  %v1817 = vunpack.c.h.b16 %v1748
  %v1818 = vunpack.c.l.b16 %v1749
  %v1819 = vunpack.c.h.b16 %v1749
  %v1820 = vpack.c.b16 %v1792, %v1788
  %v1821 = vpack.c.b16 %v1793, %v1789
  %v1822 = vpack.c.b16 %v1794, %v1790
  %v1823 = vpack.c.b16 %v1795, %v1791
  %v1824 = vpack.c.b16 %v1800, %v1796
  %v1825 = vpack.c.b16 %v1801, %v1797
  %v1826 = vpack.c.b16 %v1802, %v1798
  %v1827 = vpack.c.b16 %v1803, %v1799
  %v1828 = vpack.c.b16 %v1808, %v1804
  %v1829 = vpack.c.b16 %v1809, %v1805
  %v1830 = vpack.c.b16 %v1810, %v1806
  %v1831 = vpack.c.b16 %v1811, %v1807
  %v1832 = vpack.c.b16 %v1816, %v1812
  %v1833 = vpack.c.b16 %v1817, %v1813
  %v1834 = vpack.c.b16 %v1818, %v1814
  %v1835 = vpack.c.b16 %v1819, %v1815
  %v1853 = vsel %vm1709, %v1733, 0
  %1855 = vmatprep.subr.bf16.mxu0 %v1821
  %1856 = vmatpush1.bf16.msra.mxu0 %v1820
  %1857 = vmatprep.subr.bf16.mxu0 %v1825
  %1858 = vmatpush1.bf16.msra.mxu0 %v1824
  %1859 = vmatprep.subr.bf16.mxu0 %v1829
  %1860 = vmatpush1.bf16.msra.mxu0 %v1828
  %1861 = vmatprep.subr.bf16.mxu0 %v1833
  %1862 = vmatpush1.bf16.msra.mxu0 %v1832
  %1863 = vmatprep.subr.bf16.mxu0 0
  %1864 = vmatpush1.bf16.msra.mxu0 0
  %1865 = vmatprep.subr.bf16.mxu0 0
  %1866 = vmatpush1.bf16.msra.mxu0 0
  %1867 = vmatprep.subr.bf16.mxu0 0
  %1868 = vmatpush1.bf16.msra.mxu0 0
  %1869 = vmatprep.subr.bf16.mxu0 0
  %1870 = vmatpush1.bf16.msra.mxu0 0
  %1871 = vmatprep.subr.bf16.mxu0 0
  %1872 = vmatpush1.bf16.msra.mxu0 0
  %1873 = vmatprep.subr.bf16.mxu0 0
  %1874 = vmatpush1.bf16.msra.mxu0 0
  %1875 = vmatprep.subr.bf16.mxu0 0
  %1876 = vmatpush1.bf16.msra.mxu0 0
  %1877 = vmatprep.subr.bf16.mxu0 0
  %1878 = vmatpush1.bf16.msra.mxu0 0
  %1879 = vmatprep.subr.bf16.mxu0 0
  %1880 = vmatpush1.bf16.msra.mxu0 0
  %1881 = vmatprep.subr.bf16.mxu0 0
  %1882 = vmatpush1.bf16.msra.mxu0 0
  %1883 = vmatprep.subr.bf16.mxu0 0
  %1884 = vmatpush1.bf16.msra.mxu0 0
  %1885 = vmatprep.subr.bf16.mxu0 0
  %1886 = vmatpush1.bf16.msra.mxu0 0
  %1887 = vmatprep.mubr.bf16.mxu0 0
  %1888 = vmatmul.mubr.bf16.gmra.mrb[0].mxu0 %v1853
  %v1889 = vpop.f32.mrb[0].mxu0
  %v1890 = vadd.f32 %v1755, %v1889
  %v1891 = vpop.f32.mrb[0].mxu0
  %v1892 = vadd.f32 %v1759, %v1891
  %v1893 = vpop.f32.mrb[0].mxu0
  %v1894 = vpop.f32.mrb[0].mxu0
  %1895 = vdwg.mxu0
  %1896 = vmatprep.subr.bf16.mxu0 %v1823
  %1897 = vmatpush1.bf16.msra.mxu0 %v1822
  %1898 = vmatprep.subr.bf16.mxu0 %v1827
  %1899 = vmatpush1.bf16.msra.mxu0 %v1826
  %1900 = vmatprep.subr.bf16.mxu0 %v1831
  %1901 = vmatpush1.bf16.msra.mxu0 %v1830
  %1902 = vmatprep.subr.bf16.mxu0 %v1835
  %1903 = vmatpush1.bf16.msra.mxu0 %v1834
  %1904 = vmatprep.subr.bf16.mxu0 0
  %1905 = vmatpush1.bf16.msra.mxu0 0
  %1906 = vmatprep.subr.bf16.mxu0 0
  %1907 = vmatpush1.bf16.msra.mxu0 0
  %1908 = vmatprep.subr.bf16.mxu0 0
  %1909 = vmatpush1.bf16.msra.mxu0 0
  %1910 = vmatprep.subr.bf16.mxu0 0
  %1911 = vmatpush1.bf16.msra.mxu0 0
  %1912 = vmatprep.subr.bf16.mxu0 0
  %1913 = vmatpush1.bf16.msra.mxu0 0
  %1914 = vmatprep.subr.bf16.mxu0 0
  %1915 = vmatpush1.bf16.msra.mxu0 0
  %1916 = vmatprep.subr.bf16.mxu0 0
  %1917 = vmatpush1.bf16.msra.mxu0 0
  %1918 = vmatprep.subr.bf16.mxu0 0
  %1919 = vmatpush1.bf16.msra.mxu0 0
  %1920 = vmatprep.subr.bf16.mxu0 0
  %1921 = vmatpush1.bf16.msra.mxu0 0
  %1922 = vmatprep.subr.bf16.mxu0 0
  %1923 = vmatpush1.bf16.msra.mxu0 0
  %1924 = vmatprep.subr.bf16.mxu0 0
  %1925 = vmatpush1.bf16.msra.mxu0 0
  %1926 = vmatprep.subr.bf16.mxu0 0
  %1927 = vmatpush1.bf16.msra.mxu0 0
  %1928 = vmatprep.mubr.bf16.mxu0 0
  %1929 = vmatmul.mubr.bf16.gmra.mrb[0].mxu0 %v1853
  %v1930 = vpop.f32.mrb[0].mxu0
  %v1931 = vadd.f32 %v1763, %v1930
  %v1932 = vpop.f32.mrb[0].mxu0
  %v1933 = vadd.f32 %v1767, %v1932
  %v1934 = vpop.f32.mrb[0].mxu0
  %v1935 = vpop.f32.mrb[0].mxu0
  %1936 = vdwg.mxu0
  %v1937 = vmax.f32 %v1890, 0.0
  %v1938 = vmax.f32 %v1892, 0.0
  %v1939 = vmax.f32 %v1931, 0.0
  %v1940 = vmax.f32 %v1933, 0.0
  %v1941 = vpack.c.bf16 %v1937, %v1937
  %v1942 = vpack.c.bf16 %v1938, %v1938
  %v1943 = vpack.c.bf16 %v1939, %v1939
  %v1944 = vpack.c.bf16 %v1940, %v1940
  %v1945 = vld [vmem:[%s9] sm:$0xf]
  %v1946 = vld [vmem:[%s9 + $0x4] sm:$0xf]
  %v1947 = vld [vmem:[%s9 + $0x8] sm:$0xf]
  %v1948 = vld [vmem:[%s9 + $0xc] sm:$0xf]
  %v1949 = vld [vmem:[%s9 + $0x10] sm:$0xf]
  %v1950 = vld [vmem:[%s9 + $0x14] sm:$0xf]
  %v1951 = vld [vmem:[%s9 + $0x18] sm:$0xf]
  %v1952 = vld [vmem:[%s9 + $0x1c] sm:$0xf]
  %v1953 = vld [vmem:[%s9 + $0x20] sm:$0xf]
  %v1954 = vld [vmem:[%s9 + $0x24] sm:$0xf]
  %v1955 = vld [vmem:[%s9 + $0x28] sm:$0xf]
  %v1956 = vld [vmem:[%s9 + $0x2c] sm:$0xf]
  %v1957 = vld [vmem:[%s9 + $0x30] sm:$0xf]
  %v1958 = vld [vmem:[%s9 + $0x34] sm:$0xf]
  %v1959 = vld [vmem:[%s9 + $0x38] sm:$0xf]
  %v1960 = vld [vmem:[%s9 + $0x3c] sm:$0xf]
  %v1961 = vld [vmem:[%s9 + $0x40] sm:$0xf]
  %v1962 = vld [vmem:[%s9 + $0x44] sm:$0xf]
  %v1963 = vld [vmem:[%s9 + $0x48] sm:$0xf]
  %v1964 = vld [vmem:[%s9 + $0x4c] sm:$0xf]
  %v1965 = vld [vmem:[%s9 + $0x50] sm:$0xf]
  %v1966 = vld [vmem:[%s9 + $0x54] sm:$0xf]
  %v1967 = vld [vmem:[%s9 + $0x58] sm:$0xf]
  %v1968 = vld [vmem:[%s9 + $0x5c] sm:$0xf]
  %v1969 = vld [vmem:[%s9 + $0x60] sm:$0xf]
  %v1970 = vld [vmem:[%s9 + $0x64] sm:$0xf]
  %v1971 = vld [vmem:[%s9 + $0x68] sm:$0xf]
  %v1972 = vld [vmem:[%s9 + $0x6c] sm:$0xf]
  %v1973 = vld [vmem:[%s9 + $0x70] sm:$0xf]
  %v1974 = vld [vmem:[%s9 + $0x74] sm:$0xf]
  %v1975 = vld [vmem:[%s9 + $0x78] sm:$0xf]
  %v1976 = vld [vmem:[%s9 + $0x7c] sm:$0xf]
  %v1977 = vld [vmem:[%s9 + $0x80] sm:$0xf]
  %v1978 = vld [vmem:[%s9 + $0x84] sm:$0xf]
  %v1979 = vld [vmem:[%s9 + $0x88] sm:$0xf]
  %v1980 = vld [vmem:[%s9 + $0x8c] sm:$0xf]
  %v1981 = vld [vmem:[%s9 + $0x90] sm:$0xf]
  %v1982 = vld [vmem:[%s9 + $0x94] sm:$0xf]
  %v1983 = vld [vmem:[%s9 + $0x98] sm:$0xf]
  %v1984 = vld [vmem:[%s9 + $0x9c] sm:$0xf]
  %v1985 = vld [vmem:[%s9 + $0xa0] sm:$0xf]
  %v1986 = vld [vmem:[%s9 + $0xa4] sm:$0xf]
  %v1987 = vld [vmem:[%s9 + $0xa8] sm:$0xf]
  %v1988 = vld [vmem:[%s9 + $0xac] sm:$0xf]
  %v1989 = vld [vmem:[%s9 + $0xb0] sm:$0xf]
  %v1990 = vld [vmem:[%s9 + $0xb4] sm:$0xf]
  %v1991 = vld [vmem:[%s9 + $0xb8] sm:$0xf]
  %v1992 = vld [vmem:[%s9 + $0xbc] sm:$0xf]
  %v1993 = vld [vmem:[%s9 + $0xc0] sm:$0xf]
  %v1994 = vld [vmem:[%s9 + $0xc4] sm:$0xf]
  %v1995 = vld [vmem:[%s9 + $0xc8] sm:$0xf]
  %v1996 = vld [vmem:[%s9 + $0xcc] sm:$0xf]
  %v1997 = vld [vmem:[%s9 + $0xd0] sm:$0xf]
  %v1998 = vld [vmem:[%s9 + $0xd4] sm:$0xf]
  %v1999 = vld [vmem:[%s9 + $0xd8] sm:$0xf]
  %v2000 = vld [vmem:[%s9 + $0xdc] sm:$0xf]
  %v2001 = vld [vmem:[%s9 + $0xe0] sm:$0xf]
  %v2002 = vld [vmem:[%s9 + $0xe4] sm:$0xf]
  %v2003 = vld [vmem:[%s9 + $0xe8] sm:$0xf]
  %v2004 = vld [vmem:[%s9 + $0xec] sm:$0xf]
  %v2005 = vld [vmem:[%s9 + $0xf0] sm:$0xf]
  %v2006 = vld [vmem:[%s9 + $0xf4] sm:$0xf]
  %v2007 = vld [vmem:[%s9 + $0xf8] sm:$0xf]
  %v2008 = vld [vmem:[%s9 + $0xfc] sm:$0xf]
  %v2009 = vld [vmem:[%s10] sm:$0x1]
  %v2011 = vlaneseq
  %v2012 = vshrl.u32 %v2011, 7
  %v2013 = vsub.s32 0, %v2012
  %v2014 = vrot.slane %v2009, %v2013
  %v2080 = vunpack.c.l.b16 %v1945
  %v2081 = vunpack.c.l.b16 %v1946
  %v2082 = vunpack.c.l.b16 %v1947
  %v2083 = vunpack.c.l.b16 %v1948
  %v2084 = vunpack.c.l.b16 %v1949
  %v2085 = vunpack.c.l.b16 %v1950
  %v2086 = vunpack.c.l.b16 %v1951
  %v2087 = vunpack.c.l.b16 %v1952
  %v2088 = vunpack.c.l.b16 %v1953
  %v2089 = vunpack.c.l.b16 %v1954
  %v2090 = vunpack.c.l.b16 %v1955
  %v2091 = vunpack.c.l.b16 %v1956
  %v2092 = vunpack.c.l.b16 %v1957
  %v2093 = vunpack.c.l.b16 %v1958
  %v2094 = vunpack.c.l.b16 %v1959
  %v2095 = vunpack.c.l.b16 %v1960
  %v2096 = vunpack.c.l.b16 %v1961
  %v2097 = vunpack.c.l.b16 %v1962
  %v2098 = vunpack.c.l.b16 %v1963
  %v2099 = vunpack.c.l.b16 %v1964
  %v2100 = vunpack.c.l.b16 %v1965
  %v2101 = vunpack.c.l.b16 %v1966
  %v2102 = vunpack.c.l.b16 %v1967
  %v2103 = vunpack.c.l.b16 %v1968
  %v2104 = vunpack.c.l.b16 %v1969
  %v2105 = vunpack.c.l.b16 %v1970
  %v2106 = vunpack.c.l.b16 %v1971
  %v2107 = vunpack.c.l.b16 %v1972
  %v2108 = vunpack.c.l.b16 %v1973
  %v2109 = vunpack.c.l.b16 %v1974
  %v2110 = vunpack.c.l.b16 %v1975
  %v2111 = vunpack.c.l.b16 %v1976
  %v2112 = vunpack.c.l.b16 %v1977
  %v2113 = vunpack.c.l.b16 %v1978
  %v2114 = vunpack.c.l.b16 %v1979
  %v2115 = vunpack.c.l.b16 %v1980
  %v2116 = vunpack.c.l.b16 %v1981
  %v2117 = vunpack.c.l.b16 %v1982
  %v2118 = vunpack.c.l.b16 %v1983
  %v2119 = vunpack.c.l.b16 %v1984
  %v2120 = vunpack.c.l.b16 %v1985
  %v2121 = vunpack.c.l.b16 %v1986
  %v2122 = vunpack.c.l.b16 %v1987
  %v2123 = vunpack.c.l.b16 %v1988
  %v2124 = vunpack.c.l.b16 %v1989
  %v2125 = vunpack.c.l.b16 %v1990
  %v2126 = vunpack.c.l.b16 %v1991
  %v2127 = vunpack.c.l.b16 %v1992
  %v2128 = vunpack.c.l.b16 %v1993
  %v2129 = vunpack.c.l.b16 %v1994
  %v2130 = vunpack.c.l.b16 %v1995
  %v2131 = vunpack.c.l.b16 %v1996
  %v2132 = vunpack.c.l.b16 %v1997
  %v2133 = vunpack.c.l.b16 %v1998
  %v2134 = vunpack.c.l.b16 %v1999
  %v2135 = vunpack.c.l.b16 %v2000
  %v2136 = vunpack.c.l.b16 %v2001
  %v2137 = vunpack.c.l.b16 %v2002
  %v2138 = vunpack.c.l.b16 %v2003
  %v2139 = vunpack.c.l.b16 %v2004
  %v2140 = vunpack.c.l.b16 %v2005
  %v2141 = vunpack.c.l.b16 %v2006
  %v2142 = vunpack.c.l.b16 %v2007
  %v2143 = vunpack.c.l.b16 %v2008
  %v2144 = vpack.c.b16 %v2081, %v2080
  %v2145 = vpack.c.b16 %v2083, %v2082
  %v2146 = vpack.c.b16 %v2085, %v2084
  %v2147 = vpack.c.b16 %v2087, %v2086
  %v2148 = vpack.c.b16 %v2089, %v2088
  %v2149 = vpack.c.b16 %v2091, %v2090
  %v2150 = vpack.c.b16 %v2093, %v2092
  %v2151 = vpack.c.b16 %v2095, %v2094
  %v2152 = vpack.c.b16 %v2097, %v2096
  %v2153 = vpack.c.b16 %v2099, %v2098
  %v2154 = vpack.c.b16 %v2101, %v2100
  %v2155 = vpack.c.b16 %v2103, %v2102
  %v2156 = vpack.c.b16 %v2105, %v2104
  %v2157 = vpack.c.b16 %v2107, %v2106
  %v2158 = vpack.c.b16 %v2109, %v2108
  %v2159 = vpack.c.b16 %v2111, %v2110
  %v2160 = vpack.c.b16 %v2113, %v2112
  %v2161 = vpack.c.b16 %v2115, %v2114
  %v2162 = vpack.c.b16 %v2117, %v2116
  %v2163 = vpack.c.b16 %v2119, %v2118
  %v2164 = vpack.c.b16 %v2121, %v2120
  %v2165 = vpack.c.b16 %v2123, %v2122
  %v2166 = vpack.c.b16 %v2125, %v2124
  %v2167 = vpack.c.b16 %v2127, %v2126
  %v2168 = vpack.c.b16 %v2129, %v2128
  %v2169 = vpack.c.b16 %v2131, %v2130
  %v2170 = vpack.c.b16 %v2133, %v2132
  %v2171 = vpack.c.b16 %v2135, %v2134
  %v2172 = vpack.c.b16 %v2137, %v2136
  %v2173 = vpack.c.b16 %v2139, %v2138
  %v2174 = vpack.c.b16 %v2141, %v2140
  %v2175 = vpack.c.b16 %v2143, %v2142
  %2208 = vmatprep.subr.bf16.mxu0 0
  %2209 = vmatpush1.bf16.msra.mxu0 %v2144
  %2210 = vmatprep.subr.bf16.mxu0 0
  %2211 = vmatpush1.bf16.msra.mxu0 %v2145
  %2212 = vmatprep.subr.bf16.mxu0 0
  %2213 = vmatpush1.bf16.msra.mxu0 %v2146
  %2214 = vmatprep.subr.bf16.mxu0 0
  %2215 = vmatpush1.bf16.msra.mxu0 %v2147
  %2216 = vmatprep.subr.bf16.mxu0 0
  %2217 = vmatpush1.bf16.msra.mxu0 %v2148
  %2218 = vmatprep.subr.bf16.mxu0 0
  %2219 = vmatpush1.bf16.msra.mxu0 %v2149
  %2220 = vmatprep.subr.bf16.mxu0 0
  %2221 = vmatpush1.bf16.msra.mxu0 %v2150
  %2222 = vmatprep.subr.bf16.mxu0 0
  %2223 = vmatpush1.bf16.msra.mxu0 %v2151
  %2224 = vmatprep.subr.bf16.mxu0 0
  %2225 = vmatpush1.bf16.msra.mxu0 %v2152
  %2226 = vmatprep.subr.bf16.mxu0 0
  %2227 = vmatpush1.bf16.msra.mxu0 %v2153
  %2228 = vmatprep.subr.bf16.mxu0 0
  %2229 = vmatpush1.bf16.msra.mxu0 %v2154
  %2230 = vmatprep.subr.bf16.mxu0 0
  %2231 = vmatpush1.bf16.msra.mxu0 %v2155
  %2232 = vmatprep.subr.bf16.mxu0 0
  %2233 = vmatpush1.bf16.msra.mxu0 %v2156
  %2234 = vmatprep.subr.bf16.mxu0 0
  %2235 = vmatpush1.bf16.msra.mxu0 %v2157
  %2236 = vmatprep.subr.bf16.mxu0 0
  %2237 = vmatpush1.bf16.msra.mxu0 %v2158
  %2238 = vmatprep.subr.bf16.mxu0 0
  %2239 = vmatpush1.bf16.msra.mxu0 %v2159
  %2240 = vmatprep.mubr.bf16.mxu0 %v1942
  %2241 = vmatmul.mubr.bf16.gmra.mrb[0].mxu0 %v1941
  %v2242 = vpop.f32.mrb[0].mxu0
  %v2243 = vadd.f32 %v2014, %v2242
  %v2244 = vpop.f32.mrb[0].mxu0
  %v2245 = vpop.f32.mrb[0].mxu0
  %v2246 = vpop.f32.mrb[0].mxu0
  %2247 = vdwg.mxu0
  %2248 = vmatprep.subr.bf16.mxu0 0
  %2249 = vmatpush1.bf16.msra.mxu0 %v2160
  %2250 = vmatprep.subr.bf16.mxu0 0
  %2251 = vmatpush1.bf16.msra.mxu0 %v2161
  %2252 = vmatprep.subr.bf16.mxu0 0
  %2253 = vmatpush1.bf16.msra.mxu0 %v2162
  %2254 = vmatprep.subr.bf16.mxu0 0
  %2255 = vmatpush1.bf16.msra.mxu0 %v2163
  %2256 = vmatprep.subr.bf16.mxu0 0
  %2257 = vmatpush1.bf16.msra.mxu0 %v2164
  %2258 = vmatprep.subr.bf16.mxu0 0
  %2259 = vmatpush1.bf16.msra.mxu0 %v2165
  %2260 = vmatprep.subr.bf16.mxu0 0
  %2261 = vmatpush1.bf16.msra.mxu0 %v2166
  %2262 = vmatprep.subr.bf16.mxu0 0
  %2263 = vmatpush1.bf16.msra.mxu0 %v2167
  %2264 = vmatprep.subr.bf16.mxu0 0
  %2265 = vmatpush1.bf16.msra.mxu0 %v2168
  %2266 = vmatprep.subr.bf16.mxu0 0
  %2267 = vmatpush1.bf16.msra.mxu0 %v2169
  %2268 = vmatprep.subr.bf16.mxu0 0
  %2269 = vmatpush1.bf16.msra.mxu0 %v2170
  %2270 = vmatprep.subr.bf16.mxu0 0
  %2271 = vmatpush1.bf16.msra.mxu0 %v2171
  %2272 = vmatprep.subr.bf16.mxu0 0
  %2273 = vmatpush1.bf16.msra.mxu0 %v2172
  %2274 = vmatprep.subr.bf16.mxu0 0
  %2275 = vmatpush1.bf16.msra.mxu0 %v2173
  %2276 = vmatprep.subr.bf16.mxu0 0
  %2277 = vmatpush1.bf16.msra.mxu0 %v2174
  %2278 = vmatprep.subr.bf16.mxu0 0
  %2279 = vmatpush1.bf16.msra.mxu0 %v2175
  %2280 = vmatprep.mubr.bf16.mxu0 %v1944
  %2281 = vmatmul.mubr.bf16.gmra.mrb[0].mxu0 %v1943
  %v2282 = vpop.f32.mrb[0].mxu0
  %v2283 = vadd.f32 %v2243, %v2282
  %v2284 = vpop.f32.mrb[0].mxu0
  %v2285 = vpop.f32.mrb[0].mxu0
  %v2286 = vpop.f32.mrb[0].mxu0
  %2287 = vdwg.mxu0
  %v2288 = vmax.f32 %v2283, 0.0
  %v2289 = vpack.c.bf16 %v2288, %v2288
  %v2290 = vld [vmem:[%s11] sm:$0xff]
  %v2291 = vld [vmem:[%s11 + $0x8] sm:$0xff]
  %v2292 = vld [vmem:[%s11 + $0x10] sm:$0xff]
  %v2293 = vld [vmem:[%s11 + $0x18] sm:$0xff]
  %v2294 = vld [vmem:[%s11 + $0x20] sm:$0xff]
  %v2295 = vld [vmem:[%s11 + $0x28] sm:$0xff]
  %v2296 = vld [vmem:[%s11 + $0x30] sm:$0xff]
  %v2297 = vld [vmem:[%s11 + $0x38] sm:$0xff]
  %v2298 = vld [vmem:[%s12] sm:$0x3]
  %v2300 = vlaneseq
  %v2301 = vshrl.u32 %v2300, 7
  %v2302 = vsub.s32 0, %v2301
  %v2303 = vrot.slane %v2298, %v2302
  %v2304 = vlaneseq
  %v2305 = vshrl.u32 %v2304, 7
  %v2306 = vsub.s32 1, %v2305
  %v2307 = vrot.slane %v2298, %v2306
  %v2318 = vunpack.c.l.b16 %v2290
  %v2319 = vunpack.c.h.b16 %v2290
  %v2320 = vunpack.c.l.b16 %v2291
  %v2321 = vunpack.c.h.b16 %v2291
  %v2322 = vunpack.c.l.b16 %v2292
  %v2323 = vunpack.c.h.b16 %v2292
  %v2324 = vunpack.c.l.b16 %v2293
  %v2325 = vunpack.c.h.b16 %v2293
  %v2326 = vunpack.c.l.b16 %v2294
  %v2327 = vunpack.c.h.b16 %v2294
  %v2328 = vunpack.c.l.b16 %v2295
  %v2329 = vunpack.c.h.b16 %v2295
  %v2330 = vunpack.c.l.b16 %v2296
  %v2331 = vunpack.c.h.b16 %v2296
  %v2332 = vunpack.c.l.b16 %v2297
  %v2333 = vunpack.c.h.b16 %v2297
  %v2334 = vpack.c.b16 %v2320, %v2318
  %v2335 = vpack.c.b16 %v2321, %v2319
  %v2336 = vpack.c.b16 %v2324, %v2322
  %v2337 = vpack.c.b16 %v2325, %v2323
  %v2338 = vpack.c.b16 %v2328, %v2326
  %v2339 = vpack.c.b16 %v2329, %v2327
  %v2340 = vpack.c.b16 %v2332, %v2330
  %v2341 = vpack.c.b16 %v2333, %v2331
  %v2351 = vsel %vm1709, %v2289, 0
  %2353 = vmatprep.subr.bf16.mxu0 %v2335
  %2354 = vmatpush1.bf16.msra.mxu0 %v2334
  %2355 = vmatprep.subr.bf16.mxu0 %v2337
  %2356 = vmatpush1.bf16.msra.mxu0 %v2336
  %2357 = vmatprep.subr.bf16.mxu0 %v2339
  %2358 = vmatpush1.bf16.msra.mxu0 %v2338
  %2359 = vmatprep.subr.bf16.mxu0 %v2341
  %2360 = vmatpush1.bf16.msra.mxu0 %v2340
  %2361 = vmatprep.subr.bf16.mxu0 0
  %2362 = vmatpush1.bf16.msra.mxu0 0
  %2363 = vmatprep.subr.bf16.mxu0 0
  %2364 = vmatpush1.bf16.msra.mxu0 0
  %2365 = vmatprep.subr.bf16.mxu0 0
  %2366 = vmatpush1.bf16.msra.mxu0 0
  %2367 = vmatprep.subr.bf16.mxu0 0
  %2368 = vmatpush1.bf16.msra.mxu0 0
  %2369 = vmatprep.subr.bf16.mxu0 0
  %2370 = vmatpush1.bf16.msra.mxu0 0
  %2371 = vmatprep.subr.bf16.mxu0 0
  %2372 = vmatpush1.bf16.msra.mxu0 0
  %2373 = vmatprep.subr.bf16.mxu0 0
  %2374 = vmatpush1.bf16.msra.mxu0 0
  %2375 = vmatprep.subr.bf16.mxu0 0
  %2376 = vmatpush1.bf16.msra.mxu0 0
  %2377 = vmatprep.subr.bf16.mxu0 0
  %2378 = vmatpush1.bf16.msra.mxu0 0
  %2379 = vmatprep.subr.bf16.mxu0 0
  %2380 = vmatpush1.bf16.msra.mxu0 0
  %2381 = vmatprep.subr.bf16.mxu0 0
  %2382 = vmatpush1.bf16.msra.mxu0 0
  %2383 = vmatprep.subr.bf16.mxu0 0
  %2384 = vmatpush1.bf16.msra.mxu0 0
  %2385 = vmatprep.mubr.bf16.mxu0 0
  %2386 = vmatmul.mubr.bf16.gmra.mrb[0].mxu0 %v2351
  %v2387 = vpop.f32.mrb[0].mxu0
  %v2388 = vadd.f32 %v2303, %v2387
  %v2389 = vpop.f32.mrb[0].mxu0
  %v2390 = vadd.f32 %v2307, %v2389
  %v2391 = vpop.f32.mrb[0].mxu0
  %v2392 = vpop.f32.mrb[0].mxu0
  %2393 = vdwg.mxu0
  %v2394 = vmax.f32 %v2388, 0.0
  %v2395 = vmax.f32 %v2390, 0.0
  %v2396 = vpack.c.bf16 %v2394, %v2394
  %v2397 = vpack.c.bf16 %v2395, %v2395
  %v2398 = vld [vmem:[%s13] sm:$0xf]
  %v2399 = vld [vmem:[%s13 + $0x4] sm:$0xf]
  %v2400 = vld [vmem:[%s13 + $0x8] sm:$0xf]
  %v2401 = vld [vmem:[%s13 + $0xc] sm:$0xf]
  %v2402 = vld [vmem:[%s13 + $0x10] sm:$0xf]
  %v2403 = vld [vmem:[%s13 + $0x14] sm:$0xf]
  %v2404 = vld [vmem:[%s13 + $0x18] sm:$0xf]
  %v2405 = vld [vmem:[%s13 + $0x1c] sm:$0xf]
  %v2406 = vld [vmem:[%s13 + $0x20] sm:$0xf]
  %v2407 = vld [vmem:[%s13 + $0x24] sm:$0xf]
  %v2408 = vld [vmem:[%s13 + $0x28] sm:$0xf]
  %v2409 = vld [vmem:[%s13 + $0x2c] sm:$0xf]
  %v2410 = vld [vmem:[%s13 + $0x30] sm:$0xf]
  %v2411 = vld [vmem:[%s13 + $0x34] sm:$0xf]
  %v2412 = vld [vmem:[%s13 + $0x38] sm:$0xf]
  %v2413 = vld [vmem:[%s13 + $0x3c] sm:$0xf]
  %v2414 = vld [vmem:[%s13 + $0x40] sm:$0xf]
  %v2415 = vld [vmem:[%s13 + $0x44] sm:$0xf]
  %v2416 = vld [vmem:[%s13 + $0x48] sm:$0xf]
  %v2417 = vld [vmem:[%s13 + $0x4c] sm:$0xf]
  %v2418 = vld [vmem:[%s13 + $0x50] sm:$0xf]
  %v2419 = vld [vmem:[%s13 + $0x54] sm:$0xf]
  %v2420 = vld [vmem:[%s13 + $0x58] sm:$0xf]
  %v2421 = vld [vmem:[%s13 + $0x5c] sm:$0xf]
  %v2422 = vld [vmem:[%s13 + $0x60] sm:$0xf]
  %v2423 = vld [vmem:[%s13 + $0x64] sm:$0xf]
  %v2424 = vld [vmem:[%s13 + $0x68] sm:$0xf]
  %v2425 = vld [vmem:[%s13 + $0x6c] sm:$0xf]
  %v2426 = vld [vmem:[%s13 + $0x70] sm:$0xf]
  %v2427 = vld [vmem:[%s13 + $0x74] sm:$0xf]
  %v2428 = vld [vmem:[%s13 + $0x78] sm:$0xf]
  %v2429 = vld [vmem:[%s13 + $0x7c] sm:$0xf]
  %v2430 = vld [vmem:[%s14] sm:$0x1]
  %v2432 = vlaneseq
  %v2433 = vshrl.u32 %v2432, 7
  %v2434 = vsub.s32 0, %v2433
  %v2435 = vrot.slane %v2430, %v2434
  %v2469 = vunpack.c.l.b16 %v2398
  %v2470 = vunpack.c.l.b16 %v2399
  %v2471 = vunpack.c.l.b16 %v2400
  %v2472 = vunpack.c.l.b16 %v2401
  %v2473 = vunpack.c.l.b16 %v2402
  %v2474 = vunpack.c.l.b16 %v2403
  %v2475 = vunpack.c.l.b16 %v2404
  %v2476 = vunpack.c.l.b16 %v2405
  %v2477 = vunpack.c.l.b16 %v2406
  %v2478 = vunpack.c.l.b16 %v2407
  %v2479 = vunpack.c.l.b16 %v2408
  %v2480 = vunpack.c.l.b16 %v2409
  %v2481 = vunpack.c.l.b16 %v2410
  %v2482 = vunpack.c.l.b16 %v2411
  %v2483 = vunpack.c.l.b16 %v2412
  %v2484 = vunpack.c.l.b16 %v2413
  %v2485 = vunpack.c.l.b16 %v2414
  %v2486 = vunpack.c.l.b16 %v2415
  %v2487 = vunpack.c.l.b16 %v2416
  %v2488 = vunpack.c.l.b16 %v2417
  %v2489 = vunpack.c.l.b16 %v2418
  %v2490 = vunpack.c.l.b16 %v2419
  %v2491 = vunpack.c.l.b16 %v2420
  %v2492 = vunpack.c.l.b16 %v2421
  %v2493 = vunpack.c.l.b16 %v2422
  %v2494 = vunpack.c.l.b16 %v2423
  %v2495 = vunpack.c.l.b16 %v2424
  %v2496 = vunpack.c.l.b16 %v2425
  %v2497 = vunpack.c.l.b16 %v2426
  %v2498 = vunpack.c.l.b16 %v2427
  %v2499 = vunpack.c.l.b16 %v2428
  %v2500 = vunpack.c.l.b16 %v2429
  %v2501 = vpack.c.b16 %v2470, %v2469
  %v2502 = vpack.c.b16 %v2472, %v2471
  %v2503 = vpack.c.b16 %v2474, %v2473
  %v2504 = vpack.c.b16 %v2476, %v2475
  %v2505 = vpack.c.b16 %v2478, %v2477
  %v2506 = vpack.c.b16 %v2480, %v2479
  %v2507 = vpack.c.b16 %v2482, %v2481
  %v2508 = vpack.c.b16 %v2484, %v2483
  %v2509 = vpack.c.b16 %v2486, %v2485
  %v2510 = vpack.c.b16 %v2488, %v2487
  %v2511 = vpack.c.b16 %v2490, %v2489
  %v2512 = vpack.c.b16 %v2492, %v2491
  %v2513 = vpack.c.b16 %v2494, %v2493
  %v2514 = vpack.c.b16 %v2496, %v2495
  %v2515 = vpack.c.b16 %v2498, %v2497
  %v2516 = vpack.c.b16 %v2500, %v2499
  %2533 = vmatprep.subr.bf16.mxu0 0
  %2534 = vmatpush1.bf16.msra.mxu0 %v2501
  %2535 = vmatprep.subr.bf16.mxu0 0
  %2536 = vmatpush1.bf16.msra.mxu0 %v2502
  %2537 = vmatprep.subr.bf16.mxu0 0
  %2538 = vmatpush1.bf16.msra.mxu0 %v2503
  %2539 = vmatprep.subr.bf16.mxu0 0
  %2540 = vmatpush1.bf16.msra.mxu0 %v2504
  %2541 = vmatprep.subr.bf16.mxu0 0
  %2542 = vmatpush1.bf16.msra.mxu0 %v2505
  %2543 = vmatprep.subr.bf16.mxu0 0
  %2544 = vmatpush1.bf16.msra.mxu0 %v2506
  %2545 = vmatprep.subr.bf16.mxu0 0
  %2546 = vmatpush1.bf16.msra.mxu0 %v2507
  %2547 = vmatprep.subr.bf16.mxu0 0
  %2548 = vmatpush1.bf16.msra.mxu0 %v2508
  %2549 = vmatprep.subr.bf16.mxu0 0
  %2550 = vmatpush1.bf16.msra.mxu0 %v2509
  %2551 = vmatprep.subr.bf16.mxu0 0
  %2552 = vmatpush1.bf16.msra.mxu0 %v2510
  %2553 = vmatprep.subr.bf16.mxu0 0
  %2554 = vmatpush1.bf16.msra.mxu0 %v2511
  %2555 = vmatprep.subr.bf16.mxu0 0
  %2556 = vmatpush1.bf16.msra.mxu0 %v2512
  %2557 = vmatprep.subr.bf16.mxu0 0
  %2558 = vmatpush1.bf16.msra.mxu0 %v2513
  %2559 = vmatprep.subr.bf16.mxu0 0
  %2560 = vmatpush1.bf16.msra.mxu0 %v2514
  %2561 = vmatprep.subr.bf16.mxu0 0
  %2562 = vmatpush1.bf16.msra.mxu0 %v2515
  %2563 = vmatprep.subr.bf16.mxu0 0
  %2564 = vmatpush1.bf16.msra.mxu0 %v2516
  %2565 = vmatprep.mubr.bf16.mxu0 %v2397
  %2566 = vmatmul.mubr.bf16.gmra.mrb[0].mxu0 %v2396
  %v2567 = vpop.f32.mrb[0].mxu0
  %v2568 = vadd.f32 %v2435, %v2567
  %v2569 = vpop.f32.mrb[0].mxu0
  %v2570 = vpop.f32.mrb[0].mxu0
  %v2571 = vpop.f32.mrb[0].mxu0
  %2572 = vdwg.mxu0
  %2573 = vst [vmem:[%s15] sm:$0xff] %v2568
  // Predicated region
  $region62: #{model_forward.1} parent=0 // pred_check
    _
  $region63: #{model_forward.1} parent=0 // pred_check_branch
    %2575 = sbr.rel (0) target = $region65
  $region64: #{model_forward.1} parent=0 // pred_region
    _
  $region65: #{model_forward.1} parent=0 // pred_fallthru
    _
  // Predicated region
  $region66: #{model_forward.1} parent=0 // pred_check
    _
  $region67: #{model_forward.1} parent=0 // pred_check_branch
    %2577 = sbr.rel (0) target = $region69
  $region68: #{model_forward.1} parent=0 // pred_region
    _
  $region69: #{model_forward.1} parent=0 // pred_fallthru
    _

</llo_original>
